<compile_context>
chip_gen: v5e
topology: v5e:2x2
jax: 0.10.0
libtpu: 0.0.40
codegen_flags: <defaults>
</compile_context>

<pallas_src>
import math
from functools import partial

import jax
import jax.numpy as jnp
from jax.experimental import pallas as pl
from jax.experimental.pallas import tpu as pltpu


def _round_up(x, m):
    return (x + m - 1) // m * m


def _pick_tm(l_out, cout, n_batch):
    # f32 result tile <= ~128 KiB (tm <= 256 @ Cout=128): vreg/MRB friendly.
    cap = max(8, min(256, ((128 << 10) // (4 * max(cout, 1))) // 8 * 8))
    tm = min(cap, _round_up(l_out, 8))
    if n_batch == 1 and l_out > 16:
        # N == 1: split M so both v7x TensorCores get at least one block.
        tm = min(tm, max(8, _round_up((l_out + 1) // 2, 8)))
    return tm


# ------------------------------ Pallas kernel -------------------------------

def _tap_conv_kernel(*refs, taps, num_m, cin, act, negslope, has_residual):
    """Fused direct conv: in-VMEM im2col of the k*k taps + ONE MXU matmul,
    then + BN bias (+ residual) + activation.

      x_ref : (P, 1, L_in, Cin) f32   phase-stacked flat padded input (resident)
      w_ref : (T*Cin, Cout)     bf16  tap-concatenated weights, BN scale folded
      b_ref : (1, Cout)         f32   BN bias
      r_ref : (1, TM, Cout)     f32   optional fused residual (skip path)
      o_ref : (1, TM, Cout)
      im_ref: (TM, T*Cin)       bf16  im2col scratch (only when T > 1)
    """
    if has_residual:
        x_ref, w_ref, b_ref, r_ref, o_ref, *rest = refs
    else:
        x_ref, w_ref, b_ref, o_ref, *rest = refs
        r_ref = None
    im_ref = rest[0] if rest else None
    tm, cout = o_ref.shape[1], o_ref.shape[2]
    row0 = 0 if num_m == 1 else pl.multiple_of(pl.program_id(1) * tm, 8)

    if im_ref is None:                      # 1x1 conv: single tap, direct dot
        phase, off = taps[0]
        xs = x_ref[phase, 0, pl.ds(row0 + off, tm), :].astype(jnp.bfloat16)
        y = jnp.dot(xs, w_ref[...], preferred_element_type=jnp.float32)
    else:
        # Copy the T shifted slabs into one (tm, T*Cin) bf16 scratch, then one
        # big matmul (K = T*Cin) instead of T starved K=Cin dots.
        for t, (phase, off) in enumerate(taps):
            im_ref[:, t * cin:(t + 1) * cin] = (
                x_ref[phase, 0, pl.ds(row0 + off, tm), :].astype(jnp.bfloat16))
        y = jnp.dot(im_ref[...], w_ref[...], preferred_element_type=jnp.float32)

    y = y + b_ref[...]
    if has_residual:
        y = y + r_ref[0]
    if act == "relu":
        y = jnp.maximum(y, 0.0)
    elif act == "leaky":
        y = jnp.where(y > 0, y, negslope * y)
    o_ref[0] = y.astype(o_ref.dtype)


# ------------------------------ kernel runner --------------------------------

def _run_tap_conv(x_stack, w_taps, bias, taps, *, L_out_pad, tm, residual=None,
                  act="none", negslope=0.2, out_dtype=jnp.float32):
    """x_stack: (P, N, L_in, Cin) f32; w_taps: (T, Cin, Cout) bf16 (BN folded);
    taps: ((phase, flat_offset), ...).  Returns (N, L_out_pad, Cout)."""
    P, N, L_in, Cin = x_stack.shape
    T = len(taps)
    Cout = w_taps.shape[-1]
    num_m = L_out_pad // tm
    max_off = max(off for _, off in taps)
    assert L_in >= L_out_pad + max_off, (L_in, L_out_pad, max_off)

    x_stack = x_stack.astype(jnp.float32)   # 32-bit path for unaligned slices
    w_flat = w_taps.reshape(T * Cin, Cout).astype(jnp.bfloat16)
    b2 = bias.reshape(1, Cout).astype(jnp.float32)

    in_specs = [
        pl.BlockSpec((P, 1, L_in, Cin), lambda n, i: (0, n, 0, 0)),  # resident
        pl.BlockSpec((T * Cin, Cout), lambda n, i: (0, 0)),
        pl.BlockSpec((1, Cout), lambda n, i: (0, 0)),
    ]
    args = [x_stack, w_flat, b2]
    if residual is not None:
        in_specs.append(pl.BlockSpec((1, tm, Cout), lambda n, i: (n, i, 0)))
        args.append(residual.astype(jnp.float32))   # keep skip path in f32

    scratch_shapes = [pltpu.VMEM((tm, T * Cin), jnp.bfloat16)] if T > 1 else []

    # Rough VMEM budget: 2x slab + 2x weights + in/out tiles + scratch.
    vmem_est = (2 * P * L_in * Cin * 4 + 2 * T * Cin * Cout * 2
                + 4 * tm * Cout * 4 + tm * T * Cin * 2 + (1 << 20))
    cp_kwargs = dict(dimension_semantics=("parallel", "parallel"))
    if vmem_est > 28 * (1 << 20):
        # TODO(synk): halo-tile the flat L axis (overlapping input windows) so
        # very large feature maps fit v7x's 64 MiB VMEM instead of raising this.
        cp_kwargs["vmem_limit_bytes"] = int(min(vmem_est, 64 * (1 << 20)))

    kernel = partial(_tap_conv_kernel, taps=tuple(taps), num_m=num_m, cin=Cin,
                     act=act, negslope=negslope,
                     has_residual=residual is not None)
    return pl.pallas_call(
        kernel,
        out_shape=jax.ShapeDtypeStruct((N, L_out_pad, Cout), out_dtype),
        grid=(N, num_m),
        in_specs=in_specs,
        out_specs=pl.BlockSpec((1, tm, Cout), lambda n, i: (n, i, 0)),
        scratch_shapes=scratch_shapes,
        compiler_params=pltpu.CompilerParams(**cp_kwargs),
    )(*args)


# ------------------------------ conv wrappers --------------------------------

def conv3x3_bn_act(x, p, *, stride, act, negslope=0.2, residual=None,
                   out_dtype=jnp.float32):
    """Conv2d(3x3, pad=1, bias=False) + folded-BN + activation (+ residual),
    NHWC.  One jnp.pad carries conv pad + parity pad + tap-overrun tail; the 9
    taps are gathered in-kernel from the flat padded slab (4-phase
    decomposition for stride 2) -- no im2col in HBM."""
    N, H, W, Cin = x.shape
    Cout = p["w"].shape[-1]
    Ho = (H - 1) // stride + 1
    Wo = (W - 1) // stride + 1

    if stride == 1:
        wrow = W + 2                             # flat row stride (padded width)
        L_out = Ho * wrow
        max_off = 2 * wrow + 2
        tm = _pick_tm(L_out, Cout, N)
        L_out_pad = _round_up(L_out, tm)
        L_need = L_out_pad + max_off
        rows = H + 2
        deficit = L_need - rows * wrow
        extra = -(-deficit // wrow) if deficit > 0 else 0
        xp = jnp.pad(x, ((0, 0), (1, 1 + extra), (1, 1), (0, 0)))    # single pad
        x_stack = xp.reshape(N, (rows + extra) * wrow, Cin)[None]    # (1,N,L,Cin)
        taps = tuple((0, di * wrow + dj) for di in range(3) for dj in range(3))
    else:   # stride 2: 4-phase decomposition keeps per-tap flat shifts uniform
        Hp, Wp = H + 2, W + 2
        hp2, wp2 = -(-Hp // 2), -(-Wp // 2)
        wrow = wp2
        L_out = Ho * wrow
        max_off = wrow + 1
        tm = _pick_tm(L_out, Cout, N)
        L_out_pad = _round_up(L_out, tm)
        L_need = L_out_pad + max_off
        deficit = L_need - hp2 * wrow
        hp2 += (-(-deficit // wrow) if deficit > 0 else 0)
        xp = jnp.pad(x, ((0, 0), (1, 2 * hp2 - H - 1),
                         (1, 2 * wp2 - W - 1), (0, 0)))              # single pad
        x_stack = jnp.stack(
            [xp[:, a::2, b::2, :].reshape(N, hp2 * wp2, Cin)
             for a in range(2) for b in range(2)], axis=0)           # (4,N,L,Cin)
        taps = tuple(((di % 2) * 2 + (dj % 2), (di // 2) * wp2 + dj // 2)
                     for di in range(3) for dj in range(3))

    r_flat = None
    if residual is not None:
        rows_extra = (-(-(L_out_pad - Ho * wrow) // wrow)
                      if L_out_pad > Ho * wrow else 0)
        rr = jnp.pad(residual, ((0, 0), (0, rows_extra), (0, wrow - Wo), (0, 0)))
        r_flat = rr.reshape(N, (Ho + rows_extra) * wrow, Cout)

    y = _run_tap_conv(x_stack, p["w"], p["bias"], taps, L_out_pad=L_out_pad,
                      tm=tm, residual=r_flat, act=act, negslope=negslope,
                      out_dtype=out_dtype)
    return y[:, :L_out].reshape(N, Ho, wrow, Cout)[:, :, :Wo, :]


def conv1x1_bn(x, p, *, stride, act="none", negslope=0.2, out_dtype=jnp.float32):
    """Conv2d(1x1, bias=False) + folded-BN (shortcut branch), NHWC."""
    N, H, W, Cin = x.shape
    Cout = p["w"].shape[-1]
    if stride > 1:
        x = x[:, ::stride, ::stride, :]
    Ho, Wo = x.shape[1], x.shape[2]
    L_out = Ho * Wo
    tm = _pick_tm(L_out, Cout, N)
    L_out_pad = _round_up(L_out, tm)
    x_flat = x.reshape(N, L_out, Cin)
    if L_out_pad > L_out:
        x_flat = jnp.pad(x_flat, ((0, 0), (0, L_out_pad - L_out), (0, 0)))
    y = _run_tap_conv(x_flat[None], p["w"], p["bias"], ((0, 0),),
                      L_out_pad=L_out_pad, tm=tm, act=act, negslope=negslope,
                      out_dtype=out_dtype)
    return y[:, :L_out].reshape(N, Ho, Wo, Cout)


# -------------------------------- parameters ---------------------------------

def make_conv_bn(key, k, cin, cout, eps=1e-5):
    # init_layer: conv weight ~ N(0, sqrt(2/(k*k*cout))); BN gamma=1, beta=0.
    std = math.sqrt(2.0 / float(k * k * cout))
    w = std * jax.random.normal(key, (k, k, cin, cout), dtype=jnp.float32)
    scale = 1.0 / jnp.sqrt(jnp.ones((cout,), jnp.float32) + eps)   # fresh BN stats
    bias = jnp.zeros((cout,), jnp.float32)
    return {
        "w": (w * scale).reshape(k * k, cin, cout).astype(jnp.bfloat16),  # folded
        "w_raw": w,                                                        # reference
        "bias": bias,
    }


def init_simple_block_params(key, indim, outdim, half_res):
    k1, k2, k3 = jax.random.split(key, 3)
    return {
        "half_res": half_res,
        "c1": make_conv_bn(k1, 3, indim, outdim),
        "c2": make_conv_bn(k2, 3, outdim, outdim),
        "shortcut": make_conv_bn(k3, 1, indim, outdim) if indim != outdim else None,
    }


# ------------------------------- forward pass --------------------------------

def simple_block_forward(x_nchw, params, leaky=False):
    act = "leaky" if leaky else "relu"
    x = jnp.transpose(x_nchw, (0, 2, 3, 1)).astype(jnp.float32)     # NCHW -> NHWC
    s1 = 2 if params["half_res"] else 1
    h = conv3x3_bn_act(x, params["c1"], stride=s1, act=act, negslope=0.2)
    if params["shortcut"] is None:
        short = x
    else:
        short = conv1x1_bn(x, params["shortcut"], stride=s1, act="none")
    out = conv3x3_bn_act(h, params["c2"], stride=1, act=act, negslope=0.2,
                         residual=short, out_dtype=jnp.float32)
    return jnp.transpose(out, (0, 3, 1, 2))                         # back to NCHW


# --------------------------- pure-JAX reference -------------------------------

def _conv_ref(x, w, stride, padding):
    return jax.lax.conv_general_dilated(
        x, w, window_strides=(stride, stride), padding=padding,
        dimension_numbers=("NHWC", "HWIO", "NHWC"))


def simple_block_reference(x_nchw, params, leaky=False, eps=1e-5):
    x = jnp.transpose(x_nchw, (0, 2, 3, 1)).astype(jnp.float32)
    s1 = 2 if params["half_res"] else 1
    bn = lambda y: y / jnp.sqrt(1.0 + eps)                 # fresh-stats inference BN
    actf = (lambda y: jnp.where(y > 0, y, 0.2 * y)) if leaky else \
           (lambda y: jnp.maximum(y, 0.0))
    h = actf(bn(_conv_ref(x, params["c1"]["w_raw"], s1, [(1, 1), (1, 1)])))
    y = bn(_conv_ref(h, params["c2"]["w_raw"], 1, [(1, 1), (1, 1)]))
    if params["shortcut"] is None:
        short = x
    else:
        short = bn(_conv_ref(x, params["shortcut"]["w_raw"], s1, [(0, 0), (0, 0)]))
    return jnp.transpose(actf(y + short), (0, 3, 1, 2))


# ------------------------------------ main ------------------------------------

if __name__ == "__main__":
    key = jax.random.PRNGKey(0)
    pkey, xkey = jax.random.split(key)
    # SimpleBlock(indim=64, outdim=128, half_res=True): exercises the stride-2
    # 3x3 conv, the 1x1 stride-2 shortcut, and the fused residual + ReLU.
    indim, outdim, half_res, leaky = 64, 128, True, False
    params = init_simple_block_params(pkey, indim, outdim, half_res)
    x = jax.random.normal(xkey, (2, indim, 16, 16), dtype=jnp.float32)

    out = jax.jit(lambda xx: simple_block_forward(xx, params, leaky=leaky))(x)
    out = jax.block_until_ready(out)

    ref = simple_block_reference(x, params, leaky=leaky)
    assert out.shape == (2, outdim, 8, 8), out.shape
    assert bool(jnp.all(jnp.isfinite(out)))
    err = float(jnp.max(jnp.abs(out.astype(jnp.float32) - ref)))
    assert err < 0.3, f"max abs err vs reference: {err}"
    print("KERNEL_OK")
</pallas_src>

<mosaic_0001>
module attributes {stable_mosaic.version = 11 : i64} {
  func.func @_tap_conv_kernel(%arg0: i32, %arg1: i32, %arg2: memref<4x1x90x64xf32, #tpu.memory_space<vmem>>, %arg3: memref<576x128xbf16, #tpu.memory_space<vmem>>, %arg4: memref<1x128xf32, #tpu.memory_space<vmem>>, %arg5: memref<1x72x128xf32, #tpu.memory_space<vmem>>, %arg6: memref<72x576xbf16, #tpu.memory_space<vmem>>) attributes {dimension_semantics = [#tpu.dimension_semantics<parallel>, #tpu.dimension_semantics<parallel>], iteration_bounds = array<i64: 2, 1>, scalar_prefetch = 0 : i64, scratch_operands = 1 : i64, tpu.core_type = #tpu.core_type<tc>, window_params = [{transform_indices = @transform_0, window_bounds = array<i64: 4, 1, 90, 64>}, {pipeline_mode = #tpu.pipeline_mode<synchronous>, transform_indices = @transform_1, window_bounds = array<i64: 576, 128>}, {pipeline_mode = #tpu.pipeline_mode<synchronous>, transform_indices = @transform_2, window_bounds = array<i64: 1, 128>}, {transform_indices = @transform_3, window_bounds = array<i64: 1, 72, 128>}]} {
    %c0 = arith.constant 0 : index
    %c0_0 = arith.constant 0 : index
    %c0_1 = arith.constant 0 : index
    %c0_2 = arith.constant 0 : index
    %0 = vector.load %arg2[%c0, %c0_0, %c0_1, %c0_2] : memref<4x1x90x64xf32, #tpu.memory_space<vmem>>, vector<1x1x72x64xf32>
    %1 = vector.shape_cast %0 : vector<1x1x72x64xf32> to vector<72x64xf32>
    %2 = arith.truncf %1 : vector<72x64xf32> to vector<72x64xbf16>
    %c0_3 = arith.constant 0 : index
    %c0_4 = arith.constant 0 : index
    %3 = vector.load %arg6[%c0_3, %c0_4] : memref<72x576xbf16, #tpu.memory_space<vmem>>, vector<72x64xbf16>
    tpu.vector_store %arg6[%c0_3, %c0_4], %2 {strides = array<i32>} : memref<72x576xbf16, #tpu.memory_space<vmem>>, vector<72x64xbf16>,
    %c1 = arith.constant 1 : index
    %c0_5 = arith.constant 0 : index
    %c0_6 = arith.constant 0 : index
    %c0_7 = arith.constant 0 : index
    %4 = vector.load %arg2[%c1, %c0_5, %c0_6, %c0_7] : memref<4x1x90x64xf32, #tpu.memory_space<vmem>>, vector<1x1x72x64xf32>
    %5 = vector.shape_cast %4 : vector<1x1x72x64xf32> to vector<72x64xf32>
    %6 = arith.truncf %5 : vector<72x64xf32> to vector<72x64xbf16>
    %c0_8 = arith.constant 0 : index
    %c64 = arith.constant 64 : index
    %7 = vector.load %arg6[%c0_8, %c64] : memref<72x576xbf16, #tpu.memory_space<vmem>>, vector<72x64xbf16>
    tpu.vector_store %arg6[%c0_8, %c64], %6 {strides = array<i32>} : memref<72x576xbf16, #tpu.memory_space<vmem>>, vector<72x64xbf16>,
    %c0_9 = arith.constant 0 : index
    %c0_10 = arith.constant 0 : index
    %c1_11 = arith.constant 1 : index
    %c0_12 = arith.constant 0 : index
    %8 = vector.load %arg2[%c0_9, %c0_10, %c1_11, %c0_12] : memref<4x1x90x64xf32, #tpu.memory_space<vmem>>, vector<1x1x72x64xf32>
    %9 = vector.shape_cast %8 : vector<1x1x72x64xf32> to vector<72x64xf32>
    %10 = arith.truncf %9 : vector<72x64xf32> to vector<72x64xbf16>
    %c0_13 = arith.constant 0 : index
    %c128 = arith.constant 128 : index
    %11 = vector.load %arg6[%c0_13, %c128] : memref<72x576xbf16, #tpu.memory_space<vmem>>, vector<72x64xbf16>
    tpu.vector_store %arg6[%c0_13, %c128], %10 {strides = array<i32>} : memref<72x576xbf16, #tpu.memory_space<vmem>>, vector<72x64xbf16>,
    %c2 = arith.constant 2 : index
    %c0_14 = arith.constant 0 : index
    %c0_15 = arith.constant 0 : index
    %c0_16 = arith.constant 0 : index
    %12 = vector.load %arg2[%c2, %c0_14, %c0_15, %c0_16] : memref<4x1x90x64xf32, #tpu.memory_space<vmem>>, vector<1x1x72x64xf32>
    %13 = vector.shape_cast %12 : vector<1x1x72x64xf32> to vector<72x64xf32>
    %14 = arith.truncf %13 : vector<72x64xf32> to vector<72x64xbf16>
    %c0_17 = arith.constant 0 : index
    %c192 = arith.constant 192 : index
    %15 = vector.load %arg6[%c0_17, %c192] : memref<72x576xbf16, #tpu.memory_space<vmem>>, vector<72x64xbf16>
    tpu.vector_store %arg6[%c0_17, %c192], %14 {strides = array<i32>} : memref<72x576xbf16, #tpu.memory_space<vmem>>, vector<72x64xbf16>,
    %c3 = arith.constant 3 : index
    %c0_18 = arith.constant 0 : index
    %c0_19 = arith.constant 0 : index
    %c0_20 = arith.constant 0 : index
    %16 = vector.load %arg2[%c3, %c0_18, %c0_19, %c0_20] : memref<4x1x90x64xf32, #tpu.memory_space<vmem>>, vector<1x1x72x64xf32>
    %17 = vector.shape_cast %16 : vector<1x1x72x64xf32> to vector<72x64xf32>
    %18 = arith.truncf %17 : vector<72x64xf32> to vector<72x64xbf16>
    %c0_21 = arith.constant 0 : index
    %c256 = arith.constant 256 : index
    %19 = vector.load %arg6[%c0_21, %c256] : memref<72x576xbf16, #tpu.memory_space<vmem>>, vector<72x64xbf16>
    tpu.vector_store %arg6[%c0_21, %c256], %18 {strides = array<i32>} : memref<72x576xbf16, #tpu.memory_space<vmem>>, vector<72x64xbf16>,
    %c2_22 = arith.constant 2 : index
    %c0_23 = arith.constant 0 : index
    %c1_24 = arith.constant 1 : index
    %c0_25 = arith.constant 0 : index
    %20 = vector.load %arg2[%c2_22, %c0_23, %c1_24, %c0_25] : memref<4x1x90x64xf32, #tpu.memory_space<vmem>>, vector<1x1x72x64xf32>
    %21 = vector.shape_cast %20 : vector<1x1x72x64xf32> to vector<72x64xf32>
    %22 = arith.truncf %21 : vector<72x64xf32> to vector<72x64xbf16>
    %c0_26 = arith.constant 0 : index
    %c320 = arith.constant 320 : index
    %23 = vector.load %arg6[%c0_26, %c320] : memref<72x576xbf16, #tpu.memory_space<vmem>>, vector<72x64xbf16>
    tpu.vector_store %arg6[%c0_26, %c320], %22 {strides = array<i32>} : memref<72x576xbf16, #tpu.memory_space<vmem>>, vector<72x64xbf16>,
    %c0_27 = arith.constant 0 : index
    %c0_28 = arith.constant 0 : index
    %c9 = arith.constant 9 : index
    %c0_29 = arith.constant 0 : index
    %24 = vector.load %arg2[%c0_27, %c0_28, %c9, %c0_29] : memref<4x1x90x64xf32, #tpu.memory_space<vmem>>, vector<1x1x72x64xf32>
    %25 = vector.shape_cast %24 : vector<1x1x72x64xf32> to vector<72x64xf32>
    %26 = arith.truncf %25 : vector<72x64xf32> to vector<72x64xbf16>
    %c0_30 = arith.constant 0 : index
    %c384 = arith.constant 384 : index
    %27 = vector.load %arg6[%c0_30, %c384] : memref<72x576xbf16, #tpu.memory_space<vmem>>, vector<72x64xbf16>
    tpu.vector_store %arg6[%c0_30, %c384], %26 {strides = array<i32>} : memref<72x576xbf16, #tpu.memory_space<vmem>>, vector<72x64xbf16>,
    %c1_31 = arith.constant 1 : index
    %c0_32 = arith.constant 0 : index
    %c9_33 = arith.constant 9 : index
    %c0_34 = arith.constant 0 : index
    %28 = vector.load %arg2[%c1_31, %c0_32, %c9_33, %c0_34] : memref<4x1x90x64xf32, #tpu.memory_space<vmem>>, vector<1x1x72x64xf32>
    %29 = vector.shape_cast %28 : vector<1x1x72x64xf32> to vector<72x64xf32>
    %30 = arith.truncf %29 : vector<72x64xf32> to vector<72x64xbf16>
    %c0_35 = arith.constant 0 : index
    %c448 = arith.constant 448 : index
    %31 = vector.load %arg6[%c0_35, %c448] : memref<72x576xbf16, #tpu.memory_space<vmem>>, vector<72x64xbf16>
    tpu.vector_store %arg6[%c0_35, %c448], %30 {strides = array<i32>} : memref<72x576xbf16, #tpu.memory_space<vmem>>, vector<72x64xbf16>,
    %c0_36 = arith.constant 0 : index
    %c0_37 = arith.constant 0 : index
    %c10 = arith.constant 10 : index
    %c0_38 = arith.constant 0 : index
    %32 = vector.load %arg2[%c0_36, %c0_37, %c10, %c0_38] : memref<4x1x90x64xf32, #tpu.memory_space<vmem>>, vector<1x1x72x64xf32>
    %33 = vector.shape_cast %32 : vector<1x1x72x64xf32> to vector<72x64xf32>
    %34 = arith.truncf %33 : vector<72x64xf32> to vector<72x64xbf16>
    %c0_39 = arith.constant 0 : index
    %c512 = arith.constant 512 : index
    %35 = vector.load %arg6[%c0_39, %c512] : memref<72x576xbf16, #tpu.memory_space<vmem>>, vector<72x64xbf16>
    tpu.vector_store %arg6[%c0_39, %c512], %34 {strides = array<i32>} : memref<72x576xbf16, #tpu.memory_space<vmem>>, vector<72x64xbf16>,
    %c0_40 = arith.constant 0 : index
    %c0_41 = arith.constant 0 : index
    %36 = vector.load %arg6[%c0_40, %c0_41] : memref<72x576xbf16, #tpu.memory_space<vmem>>, vector<72x576xbf16>
    %c0_42 = arith.constant 0 : index
    %c0_43 = arith.constant 0 : index
    %37 = vector.load %arg3[%c0_42, %c0_43] : memref<576x128xbf16, #tpu.memory_space<vmem>>, vector<576x128xbf16>
    %cst = arith.constant dense<0.000000e+00> : vector<72x128xf32>
    %38 = tpu.matmul %36, %37, %cst {dimension_numbers = #tpu.dot_dimension_numbers<[1], [0], [0], [1], [0, 0, 1, 1], [], []>} : vector<72x576xbf16>, vector<576x128xbf16>, vector<72x128xf32> -> vector<72x128xf32>
    %c0_44 = arith.constant 0 : index
    %c0_45 = arith.constant 0 : index
    %39 = vector.load %arg4[%c0_44, %c0_45] : memref<1x128xf32, #tpu.memory_space<vmem>>, vector<1x128xf32>
    %40 = vector.broadcast %39 : vector<1x128xf32> to vector<72x128xf32>
    %41 = arith.addf %38, %40 : vector<72x128xf32>
    %cst_46 = arith.constant 0.000000e+00 : f32
    %42 = vector.broadcast %cst_46 : f32 to vector<72x128xf32>
    %43 = arith.maximumf %41, %42 : vector<72x128xf32>
    %c0_47 = arith.constant 0 : index
    %c0_48 = arith.constant 0 : index
    %c0_49 = arith.constant 0 : index
    %44 = vector.load %arg5[%c0_47, %c0_48, %c0_49] : memref<1x72x128xf32, #tpu.memory_space<vmem>>, vector<1x72x128xf32>
    %45 = vector.shape_cast %44 : vector<1x72x128xf32> to vector<72x128xf32>
    %46 = vector.shape_cast %43 : vector<72x128xf32> to vector<1x72x128xf32>
    tpu.vector_store %arg5[%c0_47, %c0_48, %c0_49], %46 {strides = array<i32>} : memref<1x72x128xf32, #tpu.memory_space<vmem>>, vector<1x72x128xf32>,
    return
  }
  func.func @transform_0(%arg0: i32, %arg1: i32) -> (i32, i32, i32, i32) {
    %c0_i32 = arith.constant 0 : i32
    %c0_i32_0 = arith.constant 0 : i32
    %c0_i32_1 = arith.constant 0 : i32
    %c0_i32_2 = arith.constant 0 : i32
    return %c0_i32, %arg0, %c0_i32_0, %c0_i32_1 : i32, i32, i32, i32
  }
  func.func @transform_1(%arg0: i32, %arg1: i32) -> (i32, i32) {
    %c0_i32 = arith.constant 0 : i32
    %c0_i32_0 = arith.constant 0 : i32
    %c0_i32_1 = arith.constant 0 : i32
    return %c0_i32, %c0_i32_0 : i32, i32
  }
  func.func @transform_2(%arg0: i32, %arg1: i32) -> (i32, i32) {
    %c0_i32 = arith.constant 0 : i32
    %c0_i32_0 = arith.constant 0 : i32
    %c0_i32_1 = arith.constant 0 : i32
    return %c0_i32, %c0_i32_0 : i32, i32
  }
  func.func @transform_3(%arg0: i32, %arg1: i32) -> (i32, i32, i32) {
    %c0_i32 = arith.constant 0 : i32
    %c0_i32_0 = arith.constant 0 : i32
    return %arg0, %arg1, %c0_i32 : i32, i32, i32
  }
}

module attributes {stable_mosaic.version = 11 : i64} {
  func.func @_tap_conv_kernel(%arg0: i32, %arg1: i32, %arg2: memref<1x1x64x64xf32, #tpu.memory_space<vmem>>, %arg3: memref<64x128xbf16, #tpu.memory_space<vmem>>, %arg4: memref<1x128xf32, #tpu.memory_space<vmem>>, %arg5: memref<1x64x128xf32, #tpu.memory_space<vmem>>) attributes {dimension_semantics = [#tpu.dimension_semantics<parallel>, #tpu.dimension_semantics<parallel>], iteration_bounds = array<i64: 2, 1>, scalar_prefetch = 0 : i64, scratch_operands = 0 : i64, tpu.core_type = #tpu.core_type<tc>, window_params = [{transform_indices = @transform_0, window_bounds = array<i64: 1, 1, 64, 64>}, {pipeline_mode = #tpu.pipeline_mode<synchronous>, transform_indices = @transform_1, window_bounds = array<i64: 64, 128>}, {pipeline_mode = #tpu.pipeline_mode<synchronous>, transform_indices = @transform_2, window_bounds = array<i64: 1, 128>}, {transform_indices = @transform_3, window_bounds = array<i64: 1, 64, 128>}]} {
    %c0 = arith.constant 0 : index
    %c0_0 = arith.constant 0 : index
    %c0_1 = arith.constant 0 : index
    %c0_2 = arith.constant 0 : index
    %0 = vector.load %arg2[%c0, %c0_0, %c0_1, %c0_2] : memref<1x1x64x64xf32, #tpu.memory_space<vmem>>, vector<1x1x64x64xf32>
    %1 = vector.shape_cast %0 : vector<1x1x64x64xf32> to vector<64x64xf32>
    %2 = arith.truncf %1 : vector<64x64xf32> to vector<64x64xbf16>
    %c0_3 = arith.constant 0 : index
    %c0_4 = arith.constant 0 : index
    %3 = vector.load %arg3[%c0_3, %c0_4] : memref<64x128xbf16, #tpu.memory_space<vmem>>, vector<64x128xbf16>
    %cst = arith.constant dense<0.000000e+00> : vector<64x128xf32>
    %4 = tpu.matmul %2, %3, %cst {dimension_numbers = #tpu.dot_dimension_numbers<[1], [0], [0], [1], [0, 0, 1, 1], [], []>} : vector<64x64xbf16>, vector<64x128xbf16>, vector<64x128xf32> -> vector<64x128xf32>
    %c0_5 = arith.constant 0 : index
    %c0_6 = arith.constant 0 : index
    %5 = vector.load %arg4[%c0_5, %c0_6] : memref<1x128xf32, #tpu.memory_space<vmem>>, vector<1x128xf32>
    %6 = vector.broadcast %5 : vector<1x128xf32> to vector<64x128xf32>
    %7 = arith.addf %4, %6 : vector<64x128xf32>
    %c0_7 = arith.constant 0 : index
    %c0_8 = arith.constant 0 : index
    %c0_9 = arith.constant 0 : index
    %8 = vector.load %arg5[%c0_7, %c0_8, %c0_9] : memref<1x64x128xf32, #tpu.memory_space<vmem>>, vector<1x64x128xf32>
    %9 = vector.shape_cast %8 : vector<1x64x128xf32> to vector<64x128xf32>
    %10 = vector.shape_cast %7 : vector<64x128xf32> to vector<1x64x128xf32>
    tpu.vector_store %arg5[%c0_7, %c0_8, %c0_9], %10 {strides = array<i32>} : memref<1x64x128xf32, #tpu.memory_space<vmem>>, vector<1x64x128xf32>,
    return
  }
  func.func @transform_0(%arg0: i32, %arg1: i32) -> (i32, i32, i32, i32) {
    %c0_i32 = arith.constant 0 : i32
    %c0_i32_0 = arith.constant 0 : i32
    %c0_i32_1 = arith.constant 0 : i32
    %c0_i32_2 = arith.constant 0 : i32
    return %c0_i32, %arg0, %c0_i32_0, %c0_i32_1 : i32, i32, i32, i32
  }
  func.func @transform_1(%arg0: i32, %arg1: i32) -> (i32, i32) {
    %c0_i32 = arith.constant 0 : i32
    %c0_i32_0 = arith.constant 0 : i32
    %c0_i32_1 = arith.constant 0 : i32
    return %c0_i32, %c0_i32_0 : i32, i32
  }
  func.func @transform_2(%arg0: i32, %arg1: i32) -> (i32, i32) {
    %c0_i32 = arith.constant 0 : i32
    %c0_i32_0 = arith.constant 0 : i32
    %c0_i32_1 = arith.constant 0 : i32
    return %c0_i32, %c0_i32_0 : i32, i32
  }
  func.func @transform_3(%arg0: i32, %arg1: i32) -> (i32, i32, i32) {
    %c0_i32 = arith.constant 0 : i32
    %c0_i32_0 = arith.constant 0 : i32
    return %arg0, %arg1, %c0_i32 : i32, i32, i32
  }
}

module attributes {stable_mosaic.version = 11 : i64} {
  func.func @_tap_conv_kernel(%arg0: i32, %arg1: i32, %arg2: memref<1x1x110x128xf32, #tpu.memory_space<vmem>>, %arg3: memref<1152x128xbf16, #tpu.memory_space<vmem>>, %arg4: memref<1x128xf32, #tpu.memory_space<vmem>>, %arg5: memref<1x80x128xf32, #tpu.memory_space<vmem>>, %arg6: memref<1x80x128xf32, #tpu.memory_space<vmem>>, %arg7: memref<80x1152xbf16, #tpu.memory_space<vmem>>) attributes {dimension_semantics = [#tpu.dimension_semantics<parallel>, #tpu.dimension_semantics<parallel>], iteration_bounds = array<i64: 2, 1>, scalar_prefetch = 0 : i64, scratch_operands = 1 : i64, tpu.core_type = #tpu.core_type<tc>, window_params = [{transform_indices = @transform_0, window_bounds = array<i64: 1, 1, 110, 128>}, {pipeline_mode = #tpu.pipeline_mode<synchronous>, transform_indices = @transform_1, window_bounds = array<i64: 1152, 128>}, {pipeline_mode = #tpu.pipeline_mode<synchronous>, transform_indices = @transform_2, window_bounds = array<i64: 1, 128>}, {transform_indices = @transform_3, window_bounds = array<i64: 1, 80, 128>}, {transform_indices = @transform_4, window_bounds = array<i64: 1, 80, 128>}]} {
    %c0 = arith.constant 0 : index
    %c0_0 = arith.constant 0 : index
    %c0_1 = arith.constant 0 : index
    %c0_2 = arith.constant 0 : index
    %0 = vector.load %arg2[%c0, %c0_0, %c0_1, %c0_2] : memref<1x1x110x128xf32, #tpu.memory_space<vmem>>, vector<1x1x80x128xf32>
    %1 = vector.shape_cast %0 : vector<1x1x80x128xf32> to vector<80x128xf32>
    %2 = arith.truncf %1 : vector<80x128xf32> to vector<80x128xbf16>
    %c0_3 = arith.constant 0 : index
    %c0_4 = arith.constant 0 : index
    %3 = vector.load %arg7[%c0_3, %c0_4] : memref<80x1152xbf16, #tpu.memory_space<vmem>>, vector<80x128xbf16>
    tpu.vector_store %arg7[%c0_3, %c0_4], %2 {strides = array<i32>} : memref<80x1152xbf16, #tpu.memory_space<vmem>>, vector<80x128xbf16>,
    %c0_5 = arith.constant 0 : index
    %c0_6 = arith.constant 0 : index
    %c1 = arith.constant 1 : index
    %c0_7 = arith.constant 0 : index
    %4 = vector.load %arg2[%c0_5, %c0_6, %c1, %c0_7] : memref<1x1x110x128xf32, #tpu.memory_space<vmem>>, vector<1x1x80x128xf32>
    %5 = vector.shape_cast %4 : vector<1x1x80x128xf32> to vector<80x128xf32>
    %6 = arith.truncf %5 : vector<80x128xf32> to vector<80x128xbf16>
    %c0_8 = arith.constant 0 : index
    %c128 = arith.constant 128 : index
    %7 = vector.load %arg7[%c0_8, %c128] : memref<80x1152xbf16, #tpu.memory_space<vmem>>, vector<80x128xbf16>
    tpu.vector_store %arg7[%c0_8, %c128], %6 {strides = array<i32>} : memref<80x1152xbf16, #tpu.memory_space<vmem>>, vector<80x128xbf16>,
    %c0_9 = arith.constant 0 : index
    %c0_10 = arith.constant 0 : index
    %c2 = arith.constant 2 : index
    %c0_11 = arith.constant 0 : index
    %8 = vector.load %arg2[%c0_9, %c0_10, %c2, %c0_11] : memref<1x1x110x128xf32, #tpu.memory_space<vmem>>, vector<1x1x80x128xf32>
    %9 = vector.shape_cast %8 : vector<1x1x80x128xf32> to vector<80x128xf32>
    %10 = arith.truncf %9 : vector<80x128xf32> to vector<80x128xbf16>
    %c0_12 = arith.constant 0 : index
    %c256 = arith.constant 256 : index
    %11 = vector.load %arg7[%c0_12, %c256] : memref<80x1152xbf16, #tpu.memory_space<vmem>>, vector<80x128xbf16>
    tpu.vector_store %arg7[%c0_12, %c256], %10 {strides = array<i32>} : memref<80x1152xbf16, #tpu.memory_space<vmem>>, vector<80x128xbf16>,
    %c0_13 = arith.constant 0 : index
    %c0_14 = arith.constant 0 : index
    %c10 = arith.constant 10 : index
    %c0_15 = arith.constant 0 : index
    %12 = vector.load %arg2[%c0_13, %c0_14, %c10, %c0_15] : memref<1x1x110x128xf32, #tpu.memory_space<vmem>>, vector<1x1x80x128xf32>
    %13 = vector.shape_cast %12 : vector<1x1x80x128xf32> to vector<80x128xf32>
    %14 = arith.truncf %13 : vector<80x128xf32> to vector<80x128xbf16>
    %c0_16 = arith.constant 0 : index
    %c384 = arith.constant 384 : index
    %15 = vector.load %arg7[%c0_16, %c384] : memref<80x1152xbf16, #tpu.memory_space<vmem>>, vector<80x128xbf16>
    tpu.vector_store %arg7[%c0_16, %c384], %14 {strides = array<i32>} : memref<80x1152xbf16, #tpu.memory_space<vmem>>, vector<80x128xbf16>,
    %c0_17 = arith.constant 0 : index
    %c0_18 = arith.constant 0 : index
    %c11 = arith.constant 11 : index
    %c0_19 = arith.constant 0 : index
    %16 = vector.load %arg2[%c0_17, %c0_18, %c11, %c0_19] : memref<1x1x110x128xf32, #tpu.memory_space<vmem>>, vector<1x1x80x128xf32>
    %17 = vector.shape_cast %16 : vector<1x1x80x128xf32> to vector<80x128xf32>
    %18 = arith.truncf %17 : vector<80x128xf32> to vector<80x128xbf16>
    %c0_20 = arith.constant 0 : index
    %c512 = arith.constant 512 : index
    %19 = vector.load %arg7[%c0_20, %c512] : memref<80x1152xbf16, #tpu.memory_space<vmem>>, vector<80x128xbf16>
    tpu.vector_store %arg7[%c0_20, %c512], %18 {strides = array<i32>} : memref<80x1152xbf16, #tpu.memory_space<vmem>>, vector<80x128xbf16>,
    %c0_21 = arith.constant 0 : index
    %c0_22 = arith.constant 0 : index
    %c12 = arith.constant 12 : index
    %c0_23 = arith.constant 0 : index
    %20 = vector.load %arg2[%c0_21, %c0_22, %c12, %c0_23] : memref<1x1x110x128xf32, #tpu.memory_space<vmem>>, vector<1x1x80x128xf32>
    %21 = vector.shape_cast %20 : vector<1x1x80x128xf32> to vector<80x128xf32>
    %22 = arith.truncf %21 : vector<80x128xf32> to vector<80x128xbf16>
    %c0_24 = arith.constant 0 : index
    %c640 = arith.constant 640 : index
    %23 = vector.load %arg7[%c0_24, %c640] : memref<80x1152xbf16, #tpu.memory_space<vmem>>, vector<80x128xbf16>
    tpu.vector_store %arg7[%c0_24, %c640], %22 {strides = array<i32>} : memref<80x1152xbf16, #tpu.memory_space<vmem>>, vector<80x128xbf16>,
    %c0_25 = arith.constant 0 : index
    %c0_26 = arith.constant 0 : index
    %c20 = arith.constant 20 : index
    %c0_27 = arith.constant 0 : index
    %24 = vector.load %arg2[%c0_25, %c0_26, %c20, %c0_27] : memref<1x1x110x128xf32, #tpu.memory_space<vmem>>, vector<1x1x80x128xf32>
    %25 = vector.shape_cast %24 : vector<1x1x80x128xf32> to vector<80x128xf32>
    %26 = arith.truncf %25 : vector<80x128xf32> to vector<80x128xbf16>
    %c0_28 = arith.constant 0 : index
    %c768 = arith.constant 768 : index
    %27 = vector.load %arg7[%c0_28, %c768] : memref<80x1152xbf16, #tpu.memory_space<vmem>>, vector<80x128xbf16>
    tpu.vector_store %arg7[%c0_28, %c768], %26 {strides = array<i32>} : memref<80x1152xbf16, #tpu.memory_space<vmem>>, vector<80x128xbf16>,
    %c0_29 = arith.constant 0 : index
    %c0_30 = arith.constant 0 : index
    %c21 = arith.constant 21 : index
    %c0_31 = arith.constant 0 : index
    %28 = vector.load %arg2[%c0_29, %c0_30, %c21, %c0_31] : memref<1x1x110x128xf32, #tpu.memory_space<vmem>>, vector<1x1x80x128xf32>
    %29 = vector.shape_cast %28 : vector<1x1x80x128xf32> to vector<80x128xf32>
    %30 = arith.truncf %29 : vector<80x128xf32> to vector<80x128xbf16>
    %c0_32 = arith.constant 0 : index
    %c896 = arith.constant 896 : index
    %31 = vector.load %arg7[%c0_32, %c896] : memref<80x1152xbf16, #tpu.memory_space<vmem>>, vector<80x128xbf16>
    tpu.vector_store %arg7[%c0_32, %c896], %30 {strides = array<i32>} : memref<80x1152xbf16, #tpu.memory_space<vmem>>, vector<80x128xbf16>,
    %c0_33 = arith.constant 0 : index
    %c0_34 = arith.constant 0 : index
    %c22 = arith.constant 22 : index
    %c0_35 = arith.constant 0 : index
    %32 = vector.load %arg2[%c0_33, %c0_34, %c22, %c0_35] : memref<1x1x110x128xf32, #tpu.memory_space<vmem>>, vector<1x1x80x128xf32>
    %33 = vector.shape_cast %32 : vector<1x1x80x128xf32> to vector<80x128xf32>
    %34 = arith.truncf %33 : vector<80x128xf32> to vector<80x128xbf16>
    %c0_36 = arith.constant 0 : index
    %c1024 = arith.constant 1024 : index
    %35 = vector.load %arg7[%c0_36, %c1024] : memref<80x1152xbf16, #tpu.memory_space<vmem>>, vector<80x128xbf16>
    tpu.vector_store %arg7[%c0_36, %c1024], %34 {strides = array<i32>} : memref<80x1152xbf16, #tpu.memory_space<vmem>>, vector<80x128xbf16>,
    %c0_37 = arith.constant 0 : index
    %c0_38 = arith.constant 0 : index
    %36 = vector.load %arg7[%c0_37, %c0_38] : memref<80x1152xbf16, #tpu.memory_space<vmem>>, vector<80x1152xbf16>
    %c0_39 = arith.constant 0 : index
    %c0_40 = arith.constant 0 : index
    %37 = vector.load %arg3[%c0_39, %c0_40] : memref<1152x128xbf16, #tpu.memory_space<vmem>>, vector<1152x128xbf16>
    %cst = arith.constant dense<0.000000e+00> : vector<80x128xf32>
    %38 = tpu.matmul %36, %37, %cst {dimension_numbers = #tpu.dot_dimension_numbers<[1], [0], [0], [1], [0, 0, 1, 1], [], []>} : vector<80x1152xbf16>, vector<1152x128xbf16>, vector<80x128xf32> -> vector<80x128xf32>
    %c0_41 = arith.constant 0 : index
    %c0_42 = arith.constant 0 : index
    %39 = vector.load %arg4[%c0_41, %c0_42] : memref<1x128xf32, #tpu.memory_space<vmem>>, vector<1x128xf32>
    %40 = vector.broadcast %39 : vector<1x128xf32> to vector<80x128xf32>
    %41 = arith.addf %38, %40 : vector<80x128xf32>
    %c0_43 = arith.constant 0 : index
    %c0_44 = arith.constant 0 : index
    %c0_45 = arith.constant 0 : index
    %42 = vector.load %arg5[%c0_43, %c0_44, %c0_45] : memref<1x80x128xf32, #tpu.memory_space<vmem>>, vector<1x80x128xf32>
    %43 = vector.shape_cast %42 : vector<1x80x128xf32> to vector<80x128xf32>
    %44 = arith.addf %41, %43 : vector<80x128xf32>
    %cst_46 = arith.constant 0.000000e+00 : f32
    %45 = vector.broadcast %cst_46 : f32 to vector<80x128xf32>
    %46 = arith.maximumf %44, %45 : vector<80x128xf32>
    %c0_47 = arith.constant 0 : index
    %c0_48 = arith.constant 0 : index
    %c0_49 = arith.constant 0 : index
    %47 = vector.load %arg6[%c0_47, %c0_48, %c0_49] : memref<1x80x128xf32, #tpu.memory_space<vmem>>, vector<1x80x128xf32>
    %48 = vector.shape_cast %47 : vector<1x80x128xf32> to vector<80x128xf32>
    %49 = vector.shape_cast %46 : vector<80x128xf32> to vector<1x80x128xf32>
    tpu.vector_store %arg6[%c0_47, %c0_48, %c0_49], %49 {strides = array<i32>} : memref<1x80x128xf32, #tpu.memory_space<vmem>>, vector<1x80x128xf32>,
    return
  }
  func.func @transform_0(%arg0: i32, %arg1: i32) -> (i32, i32, i32, i32) {
    %c0_i32 = arith.constant 0 : i32
    %c0_i32_0 = arith.constant 0 : i32
    %c0_i32_1 = arith.constant 0 : i32
    %c0_i32_2 = arith.constant 0 : i32
    return %c0_i32, %arg0, %c0_i32_0, %c0_i32_1 : i32, i32, i32, i32
  }
  func.func @transform_1(%arg0: i32, %arg1: i32) -> (i32, i32) {
    %c0_i32 = arith.constant 0 : i32
    %c0_i32_0 = arith.constant 0 : i32
    %c0_i32_1 = arith.constant 0 : i32
    return %c0_i32, %c0_i32_0 : i32, i32
  }
  func.func @transform_2(%arg0: i32, %arg1: i32) -> (i32, i32) {
    %c0_i32 = arith.constant 0 : i32
    %c0_i32_0 = arith.constant 0 : i32
    %c0_i32_1 = arith.constant 0 : i32
    return %c0_i32, %c0_i32_0 : i32, i32
  }
  func.func @transform_3(%arg0: i32, %arg1: i32) -> (i32, i32, i32) {
    %c0_i32 = arith.constant 0 : i32
    %c0_i32_0 = arith.constant 0 : i32
    return %arg0, %arg1, %c0_i32 : i32, i32, i32
  }
  func.func @transform_4(%arg0: i32, %arg1: i32) -> (i32, i32, i32) {
    %c0_i32 = arith.constant 0 : i32
    %c0_i32_0 = arith.constant 0 : i32
    return %arg0, %arg1, %c0_i32 : i32, i32, i32
  }
}

</mosaic_0001>

<llo_original>
// kernel: _lambda_.4
$region0: #{_lambda_.4}
  #allocation0 [shape = 'u32[]', space=smem, size = 0x4, offset = 0x4, fixed_abs, tag = 'smem constant byte address 0x4 - core index']
  #allocation1 [shape = 'u32[72,128]{1,0:T(1,128)}', space=vmem, size = 0x9000, scoped, tag = 'internal scratch']
  %s0 = inlined_call_operand.vmem [shape: f32[1,2,64,64], index: 0, kind: input, shape index: {}]
  %s1 = inlined_call_operand.vmem [shape: bf16[64,128], index: 1, kind: input, shape index: {}]
  %s2 = inlined_call_operand.vmem [shape: f32[1,128], index: 2, kind: input, shape index: {}]
  %s3 = inlined_call_operand.vmem [shape: f32[2,64,128], index: 3, kind: output, shape index: {}]
  %s4 = sld [smem:[#allocation0]]
  $region45: #{_lambda_.4} parent=0
    _
  %s6 = ssub.s32 1, %s4
  %s7 = scalar_select 0, %s6, %s4
  loop: start=0, step=1, limit=4
  $region2: #{_lambda_.4} parent=0 // loop_pre_header
    _
  $region3: #{_lambda_.4} parent=0 // loop_header
    %s9 = sphi 0, %s13
    %p10 = scmp.ge.s32.totalorder %s9, 4
    %s16 = sphi 0, %s28
    %s17 = sphi 0, %s24
    %s18 = sphi 0, %s16
    %s19 = sphi 0, %s17
    %s20 = sphi 0, %s18
    %s21 = sphi 0, %s19
    %s31 = sphi 0, %s33
    %s34 = sphi 0, %s31
    %s35 = sphi 0, %s34
    %s51 = sphi 0, %s35
    %s55 = sphi 0, %s55
    %s57 = sphi 0, %s55
    %s58 = sphi 0, %s57
    %s72 = sphi 0, %s58
    %s76 = sphi 0, %s76
    %s78 = sphi 0, %s76
    %s79 = sphi 0, %s78
    %s93 = sphi 0, %s79
    %s101 = sphi 0, %s103
    %s104 = sphi 0, %s101
    %s105 = sphi 0, %s104
    %s121 = sphi 0, %s105
  $region4: #{_lambda_.4} parent=0 // loop_header_branch
    %12 = sbr.rel (%p10) target = $region8
  $region5: #{_lambda_.4} parent=0 // loop_body
    %s14 = ssub.s32 %s9, 1
    %s15 = ssub.s32 %s9, 2
    %s22 = sadd.s32 1, %s17
    %p23 = scmp.ge.s32.totalorder %s22, 1
    %s24 = scalar_select %p23, 0, %s22
    %s25 = sadd.s32 1, %s16
    %s26 = scalar_select %p23, %s25, %s16
    %p27 = scmp.ge.s32.totalorder %s26, 2
    %s28 = scalar_select %p27, 0, %s26
    %s29 = ssub.s32 %s16, %s28
    %p30 = scmp.eq.s32.totalorder %s29, 0
    %s32 = sadd.s32 %s31, 1
    %s33 = scalar_select %p30, %s31, %s32
    %p36 = pneg %p30
    %p37 = scmp.eq.s32.totalorder %s9, 1
    %p38 = por %p36, %p37
    %p39 = scmp.ne.s32.totalorder %s31, %s34
    %p40 = scmp.eq.s32.totalorder %s9, 0
    %p41 = por %p39, %p40
    %p42 = scmp.ne.s32.totalorder %s31, %s34
    %p43 = scmp.eq.s32.totalorder %s14, 1
    %p44 = por %p42, %p43
    %p45 = scmp.ne.s32.totalorder %s34, %s35
    %p46 = scmp.eq.s32.totalorder %s14, 0
    %p47 = por %p45, %p46
    %p48 = scmp.ne.s32.totalorder %s34, %s35
    %p49 = scmp.eq.s32.totalorder %s15, 1
    %p50 = por %p48, %p49
    %p52 = scmp.ne.s32.totalorder %s35, %s51
    %p53 = scmp.eq.s32.totalorder %s15, 0
    %p54 = por %p52, %p53
    %s56 = sadd.s32 %s55, 1
    %p59 = scmp.eq.s32.totalorder %s9, 1
    %p60 = scmp.ne.s32.totalorder %s55, %s57
    %p61 = scmp.eq.s32.totalorder %s9, 0
    %p62 = por %p60, %p61
    %p63 = scmp.ne.s32.totalorder %s55, %s57
    %p64 = scmp.eq.s32.totalorder %s14, 1
    %p65 = por %p63, %p64
    %p66 = scmp.ne.s32.totalorder %s57, %s58
    %p67 = scmp.eq.s32.totalorder %s14, 0
    %p68 = por %p66, %p67
    %p69 = scmp.ne.s32.totalorder %s57, %s58
    %p70 = scmp.eq.s32.totalorder %s15, 1
    %p71 = por %p69, %p70
    %p73 = scmp.ne.s32.totalorder %s58, %s72
    %p74 = scmp.eq.s32.totalorder %s15, 0
    %p75 = por %p73, %p74
    %s77 = sadd.s32 %s76, 1
    %p80 = scmp.eq.s32.totalorder %s9, 1
    %p81 = scmp.ne.s32.totalorder %s76, %s78
    %p82 = scmp.eq.s32.totalorder %s9, 0
    %p83 = por %p81, %p82
    %p84 = scmp.ne.s32.totalorder %s76, %s78
    %p85 = scmp.eq.s32.totalorder %s14, 1
    %p86 = por %p84, %p85
    %p87 = scmp.ne.s32.totalorder %s78, %s79
    %p88 = scmp.eq.s32.totalorder %s14, 0
    %p89 = por %p87, %p88
    %p90 = scmp.ne.s32.totalorder %s78, %s79
    %p91 = scmp.eq.s32.totalorder %s15, 1
    %p92 = por %p90, %p91
    %p94 = scmp.ne.s32.totalorder %s79, %s93
    %p95 = scmp.eq.s32.totalorder %s15, 0
    %p96 = por %p94, %p95
    %s97 = ssub.s32 %s16, %s28
    %s98 = ssub.s32 %s17, %s24
    %s99 = sor.u32 %s97, %s98
    %p100 = scmp.eq.s32.totalorder %s99, 0
    %s102 = sadd.s32 %s101, 1
    %s103 = scalar_select %p100, %s101, %s102
    %p106 = pneg %p100
    %p107 = scmp.eq.s32.totalorder %s9, 1
    %p108 = por %p106, %p107
    %p109 = scmp.ne.s32.totalorder %s101, %s104
    %p110 = scmp.eq.s32.totalorder %s9, 0
    %p111 = por %p109, %p110
    %p112 = scmp.ne.s32.totalorder %s101, %s104
    %p113 = scmp.eq.s32.totalorder %s14, 1
    %p114 = por %p112, %p113
    %p115 = scmp.ne.s32.totalorder %s104, %s105
    %p116 = scmp.eq.s32.totalorder %s14, 0
    %p117 = por %p115, %p116
    %p118 = scmp.ne.s32.totalorder %s104, %s105
    %p119 = scmp.eq.s32.totalorder %s15, 1
    %p120 = por %p118, %p119
    %p122 = scmp.ne.s32.totalorder %s105, %s121
    %p123 = scmp.eq.s32.totalorder %s15, 0
    %p124 = por %p122, %p123
    %p125 = scmp.le.s32.totalorder 1, %s9
    %p126 = scmp.lt.s32.totalorder %s9, 3
    %p127 = pnand %p125, %p126
    %p128 = pneg %p127
    // Predicated region
    $region9: #{_lambda_.4} parent=5 // pred_check
      _
    $region10: #{_lambda_.4} parent=5 // pred_check_branch
      %130 = sbr.rel (%p127) target = $region12
    $region11: #{_lambda_.4} parent=5 // pred_region
      %s131 = ssub.s32 %s9, 1
      // Predicated region
      $region13: #{_lambda_.4} parent=11 // pred_check
        %p132 = pneg %p68
      $region14: #{_lambda_.4} parent=11 // pred_check_branch
        %134 = sbr.rel (%p132) target = $region16
      $region15: #{_lambda_.4} parent=11 // pred_region
        _
      $region16: #{_lambda_.4} parent=11 // pred_fallthru
        _
      // Predicated region
      $region17: #{_lambda_.4} parent=11 // pred_check
        %p135 = pneg %p89
      $region18: #{_lambda_.4} parent=11 // pred_check_branch
        %137 = sbr.rel (%p135) target = $region20
      $region19: #{_lambda_.4} parent=11 // pred_region
        _
      $region20: #{_lambda_.4} parent=11 // pred_fallthru
        _
    $region12: #{_lambda_.4} parent=5 // pred_fallthru
      _
    %p138 = scmp.lt.s32.totalorder %s9, 2
    // Predicated region
    $region21: #{_lambda_.4} parent=5 // pred_check
      %p139 = pneg %p138
    $region22: #{_lambda_.4} parent=5 // pred_check_branch
      %141 = sbr.rel (%p139) target = $region24
    $region23: #{_lambda_.4} parent=5 // pred_region
      // Predicated region
      $region25: #{_lambda_.4} parent=23 // pred_check
        %p142 = pneg %p41
      $region26: #{_lambda_.4} parent=23 // pred_check_branch
        %144 = sbr.rel (%p142) target = $region28
      $region27: #{_lambda_.4} parent=23 // pred_region
        %p145 = scmp.lt.s32.totalorder %s16, 1
        %s146 = scalar_select %p145, %s16, 1
        %s147 = smul.addr %s146, 8
        %s148 = smul.addr %s147, 8
        %s149 = scalar_lea.vmem %s0, %s148
      $region28: #{_lambda_.4} parent=23 // pred_fallthru
        _
    $region24: #{_lambda_.4} parent=5 // pred_fallthru
      _
    %p150 = scmp.le.s32.totalorder 1, %s9
    %p151 = scmp.lt.s32.totalorder %s9, 3
    %p152 = pnand %p150, %p151
    %p153 = pneg %p152
    // Predicated region
    $region29: #{_lambda_.4} parent=5 // pred_check
      _
    $region30: #{_lambda_.4} parent=5 // pred_check_branch
      %155 = sbr.rel (%p152) target = $region32
    $region31: #{_lambda_.4} parent=5 // pred_region
      %s156 = ssub.s32 %s9, 1
      %p157 = scmp.lt.s32.totalorder %s18, 1
      %s158 = scalar_select %p157, %s18, 1
      %s159 = smul.addr %s158, 8
      %s160 = smul.addr %s159, 8
      %s161 = scalar_lea.vmem %s0, %s160
      %p162 = pneg %p47
      %p163 = pneg %p44
      %p164 = pneg %p68
      %p165 = pneg %p65
      %p166 = pneg %p89
      %p167 = pneg %p86
      %p168 = pneg %p117
      %p169 = pneg %p114
      %s170 = smul.u32 8, %s19
      %p171 = scmp.lt.s32.totalorder %s18, 1
      %s172 = scalar_select %p171, %s18, 1
      %p173 = scmp.lt.s32.totalorder %s170, 7
      %s174 = scalar_select %p173, %s170, 7
      %s175 = smul.addr %s172, 8
      %s176 = sadd.s32 %s174, %s175
      %s177 = smul.addr %s176, 8
      %s178 = scalar_lea.vmem %s3, %s177
      %p179 = scmp.lt.s32.totalorder %s18, 1
      %s180 = scalar_select %p179, %s18, 1
      %s181 = smul.addr %s180, 8
      %s182 = smul.addr %s181, 8
      %s183 = scalar_lea.vmem %s0, %s182
      %s184 = smul.u32 8, %s19
      %p185 = scmp.lt.s32.totalorder %s18, 1
      %s186 = scalar_select %p185, %s18, 1
      %p187 = scmp.lt.s32.totalorder %s184, 7
      %s188 = scalar_select %p187, %s184, 7
      %s189 = smul.addr %s186, 8
      %s190 = sadd.s32 %s188, %s189
      %s191 = smul.addr %s190, 8
      %s192 = scalar_lea.vmem %s3, %s191
      %s193 = smul.u32 8, %s19
      %v195 = vld [vmem:[%s183] sm:$0xff]
      %v196 = vld [vmem:[%s183 + $0x8] sm:$0xff]
      %v197 = vld [vmem:[%s183 + $0x10] sm:$0xff]
      %v198 = vld [vmem:[%s183 + $0x18] sm:$0xff]
      %v199 = vld [vmem:[%s183 + $0x20] sm:$0xff]
      %v200 = vld [vmem:[%s183 + $0x28] sm:$0xff]
      %v201 = vld [vmem:[%s183 + $0x30] sm:$0xff]
      %v202 = vld [vmem:[%s183 + $0x38] sm:$0xff]
      %v203 = vpack.c.bf16 %v196, %v195
      %v204 = vpack.c.bf16 %v198, %v197
      %v205 = vpack.c.bf16 %v200, %v199
      %v206 = vpack.c.bf16 %v202, %v201
      %v207 = vld [vmem:[%s1] sm:$0xf]
      %v208 = vld [vmem:[%s1 + $0x4] sm:$0xf]
      %v209 = vld [vmem:[%s1 + $0x8] sm:$0xf]
      %v210 = vld [vmem:[%s1 + $0xc] sm:$0xf]
      %v211 = vld [vmem:[%s1 + $0x10] sm:$0xf]
      %v212 = vld [vmem:[%s1 + $0x14] sm:$0xf]
      %v213 = vld [vmem:[%s1 + $0x18] sm:$0xf]
      %v214 = vld [vmem:[%s1 + $0x1c] sm:$0xf]
      %v215 = vld [vmem:[%s2] sm:$0x1]
      %v217 = vperm.slane %v215, 0
      %v227 = vunpack.c.l.b16 %v207
      %v228 = vunpack.c.l.b16 %v208
      %v229 = vunpack.c.l.b16 %v209
      %v230 = vunpack.c.l.b16 %v210
      %v231 = vunpack.c.l.b16 %v211
      %v232 = vunpack.c.l.b16 %v212
      %v233 = vunpack.c.l.b16 %v213
      %v234 = vunpack.c.l.b16 %v214
      %v235 = vpack.c.b16 %v228, %v227
      %v236 = vpack.c.b16 %v230, %v229
      %v237 = vpack.c.b16 %v232, %v231
      %v238 = vpack.c.b16 %v234, %v233
      %vm243 = vcmask 523264
      %v245 = vsel %vm243, %v203, 0
      %v248 = vsel %vm243, %v204, 0
      %v251 = vsel %vm243, %v205, 0
      %v254 = vsel %vm243, %v206, 0
      %256 = vmatpush.bf16.msra.mxu0 0
      %257 = vmatpush.bf16.msra.mxu0 0
      %258 = vmatpush.bf16.msra.mxu0 0
      %259 = vmatpush.bf16.msra.mxu0 0
      %260 = vmatpush.bf16.msra.mxu0 %v238
      %261 = vmatpush.bf16.msra.mxu0 %v237
      %262 = vmatpush.bf16.msra.mxu0 %v236
      %263 = vmatpush.bf16.msra.mxu0 %v235
      %264 = vmatmul.bf16.gmra.mxu0 %v245
      %v265 = vpop.f32.mrf.mxu0
      %v266 = vadd.f32 %v217, %v265
      %v267 = vpop.f32.mrf.mxu0
      %v268 = vadd.f32 %v217, %v267
      %269 = vmatmul.bf16.gmra.mxu0 %v248
      %v270 = vpop.f32.mrf.mxu0
      %v271 = vadd.f32 %v217, %v270
      %v272 = vpop.f32.mrf.mxu0
      %v273 = vadd.f32 %v217, %v272
      %274 = vmatmul.bf16.gmra.mxu0 %v251
      %v275 = vpop.f32.mrf.mxu0
      %v276 = vadd.f32 %v217, %v275
      %v277 = vpop.f32.mrf.mxu0
      %v278 = vadd.f32 %v217, %v277
      %279 = vmatmul.bf16.gmra.mxu0 %v254
      %v280 = vpop.f32.mrf.mxu0
      %v281 = vadd.f32 %v217, %v280
      %v282 = vpop.f32.mrf.mxu0
      %v283 = vadd.f32 %v217, %v282
      %284 = vdwg.mxu0
      %285 = vst [vmem:[%s192] sm:$0xff] %v266
      %286 = vst [vmem:[%s192 + $0x8] sm:$0xff] %v268
      %287 = vst [vmem:[%s192 + $0x10] sm:$0xff] %v271
      %288 = vst [vmem:[%s192 + $0x18] sm:$0xff] %v273
      %289 = vst [vmem:[%s192 + $0x20] sm:$0xff] %v276
      %290 = vst [vmem:[%s192 + $0x28] sm:$0xff] %v278
      %291 = vst [vmem:[%s192 + $0x30] sm:$0xff] %v281
      %292 = vst [vmem:[%s192 + $0x38] sm:$0xff] %v283
      %s293 = smul.u32 8, %s19
      %p294 = scmp.lt.s32.totalorder %s18, 1
      %s295 = scalar_select %p294, %s18, 1
      %p296 = scmp.lt.s32.totalorder %s293, 7
      %s297 = scalar_select %p296, %s293, 7
      %s298 = smul.addr %s295, 8
      %s299 = sadd.s32 %s297, %s298
      %s300 = smul.addr %s299, 8
      %s301 = scalar_lea.vmem %s3, %s300
      // Predicated region
      $region33: #{_lambda_.4} parent=31 // pred_check
        %p302 = pneg %p114
      $region34: #{_lambda_.4} parent=31 // pred_check_branch
        %304 = sbr.rel (%p302) target = $region36
      $region35: #{_lambda_.4} parent=31 // pred_region
        %s305 = smul.u32 8, %s19
      $region36: #{_lambda_.4} parent=31 // pred_fallthru
        _
    $region32: #{_lambda_.4} parent=5 // pred_fallthru
      _
    %p306 = scmp.le.s32.totalorder 2, %s9
    // Predicated region
    $region37: #{_lambda_.4} parent=5 // pred_check
      %p307 = pneg %p306
    $region38: #{_lambda_.4} parent=5 // pred_check_branch
      %309 = sbr.rel (%p307) target = $region40
    $region39: #{_lambda_.4} parent=5 // pred_region
      %s310 = ssub.s32 %s9, 2
      // Predicated region
      $region41: #{_lambda_.4} parent=39 // pred_check
        %p311 = pneg %p120
      $region42: #{_lambda_.4} parent=39 // pred_check_branch
        %313 = sbr.rel (%p311) target = $region44
      $region43: #{_lambda_.4} parent=39 // pred_region
        %s314 = smul.u32 8, %s21
        %p315 = scmp.lt.s32.totalorder %s20, 1
        %s316 = scalar_select %p315, %s20, 1
        %p317 = scmp.lt.s32.totalorder %s314, 7
        %s318 = scalar_select %p317, %s314, 7
        %s319 = smul.addr %s316, 8
        %s320 = sadd.s32 %s318, %s319
        %s321 = smul.addr %s320, 8
        %s322 = scalar_lea.vmem %s3, %s321
      $region44: #{_lambda_.4} parent=39 // pred_fallthru
        _
    $region40: #{_lambda_.4} parent=5 // pred_fallthru
      _
  $region6: #{_lambda_.4} parent=0 // loop_footer
    %s13 = sadd.s32 1, %s9
  $region7: #{_lambda_.4} parent=0 // loop_footer_branch
    %8 = sbr.rel target = $region3
  $region8: #{_lambda_.4} parent=0 // loop_exit
    _

// kernel: _lambda_.3
$region0: #{_lambda_.3}
  #allocation0 [shape = 'u32[]', space=smem, size = 0x4, offset = 0x4, fixed_abs, tag = 'smem constant byte address 0x4 - core index']
  #allocation1 [shape = 'u32[72,128]{1,0:T(1,128)}', space=vmem, size = 0x9000, scoped, tag = 'internal scratch']
  #allocation2 [shape = 'bf16[72,576]{1,0:T(8,128)(2,1)}', space=vmem, size = 0x16800, scoped, tag = 'scratch operand']
  %s0 = inlined_call_operand.vmem [shape: f32[4,2,90,64], index: 0, kind: input, shape index: {}]
  %s1 = inlined_call_operand.vmem [shape: bf16[576,128], index: 1, kind: input, shape index: {}]
  %s2 = inlined_call_operand.vmem [shape: f32[1,128], index: 2, kind: input, shape index: {}]
  %s3 = inlined_call_operand.vmem [shape: f32[2,72,128], index: 3, kind: output, shape index: {}]
  %s4 = sld [smem:[#allocation0]]
  $region83: #{_lambda_.3} parent=0
    _
  %s6 = ssub.s32 1, %s4
  %s7 = scalar_select 0, %s6, %s4
  $region1: #{_lambda_.3} parent=0
    #allocation3 [shape = 'u8[393216]{0}', space=vmem, size = 0x60000, scoped, tag = 'input window, operand 0']
    loop: start=0, step=1, limit=4
    $region2: #{_lambda_.3} parent=1 // loop_pre_header
      _
    $region3: #{_lambda_.3} parent=1 // loop_header
      %s9 = sphi 0, %s13
      %p10 = scmp.ge.s32.totalorder %s9, 4
      %s16 = sphi 0, %s28
      %s17 = sphi 0, %s24
      %s18 = sphi 0, %s16
      %s19 = sphi 0, %s17
      %s20 = sphi 0, %s18
      %s21 = sphi 0, %s19
      %s31 = sphi 0, %s33
      %s34 = sphi 0, %s31
      %s35 = sphi 0, %s34
      %s51 = sphi 0, %s35
      %s55 = sphi 0, %s55
      %s57 = sphi 0, %s55
      %s58 = sphi 0, %s57
      %s72 = sphi 0, %s58
      %s76 = sphi 0, %s76
      %s78 = sphi 0, %s76
      %s79 = sphi 0, %s78
      %s93 = sphi 0, %s79
      %s101 = sphi 0, %s103
      %s104 = sphi 0, %s101
      %s105 = sphi 0, %s104
      %s121 = sphi 0, %s105
    $region4: #{_lambda_.3} parent=1 // loop_header_branch
      %12 = sbr.rel (%p10) target = $region8
    $region5: #{_lambda_.3} parent=1 // loop_body
      %s14 = ssub.s32 %s9, 1
      %s15 = ssub.s32 %s9, 2
      %s22 = sadd.s32 1, %s17
      %p23 = scmp.ge.s32.totalorder %s22, 1
      %s24 = scalar_select %p23, 0, %s22
      %s25 = sadd.s32 1, %s16
      %s26 = scalar_select %p23, %s25, %s16
      %p27 = scmp.ge.s32.totalorder %s26, 2
      %s28 = scalar_select %p27, 0, %s26
      %s29 = ssub.s32 %s16, %s28
      %p30 = scmp.eq.s32.totalorder %s29, 0
      %s32 = sadd.s32 %s31, 1
      %s33 = scalar_select %p30, %s31, %s32
      %p36 = pneg %p30
      %p37 = scmp.eq.s32.totalorder %s9, 1
      %p38 = por %p36, %p37
      %p39 = scmp.ne.s32.totalorder %s31, %s34
      %p40 = scmp.eq.s32.totalorder %s9, 0
      %p41 = por %p39, %p40
      %p42 = scmp.ne.s32.totalorder %s31, %s34
      %p43 = scmp.eq.s32.totalorder %s14, 1
      %p44 = por %p42, %p43
      %p45 = scmp.ne.s32.totalorder %s34, %s35
      %p46 = scmp.eq.s32.totalorder %s14, 0
      %p47 = por %p45, %p46
      %p48 = scmp.ne.s32.totalorder %s34, %s35
      %p49 = scmp.eq.s32.totalorder %s15, 1
      %p50 = por %p48, %p49
      %p52 = scmp.ne.s32.totalorder %s35, %s51
      %p53 = scmp.eq.s32.totalorder %s15, 0
      %p54 = por %p52, %p53
      %s56 = sadd.s32 %s55, 1
      %p59 = scmp.eq.s32.totalorder %s9, 1
      %p60 = scmp.ne.s32.totalorder %s55, %s57
      %p61 = scmp.eq.s32.totalorder %s9, 0
      %p62 = por %p60, %p61
      %p63 = scmp.ne.s32.totalorder %s55, %s57
      %p64 = scmp.eq.s32.totalorder %s14, 1
      %p65 = por %p63, %p64
      %p66 = scmp.ne.s32.totalorder %s57, %s58
      %p67 = scmp.eq.s32.totalorder %s14, 0
      %p68 = por %p66, %p67
      %p69 = scmp.ne.s32.totalorder %s57, %s58
      %p70 = scmp.eq.s32.totalorder %s15, 1
      %p71 = por %p69, %p70
      %p73 = scmp.ne.s32.totalorder %s58, %s72
      %p74 = scmp.eq.s32.totalorder %s15, 0
      %p75 = por %p73, %p74
      %s77 = sadd.s32 %s76, 1
      %p80 = scmp.eq.s32.totalorder %s9, 1
      %p81 = scmp.ne.s32.totalorder %s76, %s78
      %p82 = scmp.eq.s32.totalorder %s9, 0
      %p83 = por %p81, %p82
      %p84 = scmp.ne.s32.totalorder %s76, %s78
      %p85 = scmp.eq.s32.totalorder %s14, 1
      %p86 = por %p84, %p85
      %p87 = scmp.ne.s32.totalorder %s78, %s79
      %p88 = scmp.eq.s32.totalorder %s14, 0
      %p89 = por %p87, %p88
      %p90 = scmp.ne.s32.totalorder %s78, %s79
      %p91 = scmp.eq.s32.totalorder %s15, 1
      %p92 = por %p90, %p91
      %p94 = scmp.ne.s32.totalorder %s79, %s93
      %p95 = scmp.eq.s32.totalorder %s15, 0
      %p96 = por %p94, %p95
      %s97 = ssub.s32 %s16, %s28
      %s98 = ssub.s32 %s17, %s24
      %s99 = sor.u32 %s97, %s98
      %p100 = scmp.eq.s32.totalorder %s99, 0
      %s102 = sadd.s32 %s101, 1
      %s103 = scalar_select %p100, %s101, %s102
      %p106 = pneg %p100
      %p107 = scmp.eq.s32.totalorder %s9, 1
      %p108 = por %p106, %p107
      %p109 = scmp.ne.s32.totalorder %s101, %s104
      %p110 = scmp.eq.s32.totalorder %s9, 0
      %p111 = por %p109, %p110
      %p112 = scmp.ne.s32.totalorder %s101, %s104
      %p113 = scmp.eq.s32.totalorder %s14, 1
      %p114 = por %p112, %p113
      %p115 = scmp.ne.s32.totalorder %s104, %s105
      %p116 = scmp.eq.s32.totalorder %s14, 0
      %p117 = por %p115, %p116
      %p118 = scmp.ne.s32.totalorder %s104, %s105
      %p119 = scmp.eq.s32.totalorder %s15, 1
      %p120 = por %p118, %p119
      %p122 = scmp.ne.s32.totalorder %s105, %s121
      %p123 = scmp.eq.s32.totalorder %s15, 0
      %p124 = por %p122, %p123
      %p125 = scmp.le.s32.totalorder 1, %s9
      %p126 = scmp.lt.s32.totalorder %s9, 3
      %p127 = pnand %p125, %p126
      %p128 = pneg %p127
      // Predicated region
      $region9: #{_lambda_.3} parent=5 // pred_check
        _
      $region10: #{_lambda_.3} parent=5 // pred_check_branch
        %130 = sbr.rel (%p127) target = $region12
      $region11: #{_lambda_.3} parent=5 // pred_region
        %s131 = ssub.s32 %s9, 1
        // Predicated region
        $region13: #{_lambda_.3} parent=11 // pred_check
          %p132 = pneg %p68
        $region14: #{_lambda_.3} parent=11 // pred_check_branch
          %134 = sbr.rel (%p132) target = $region16
        $region15: #{_lambda_.3} parent=11 // pred_region
          _
        $region16: #{_lambda_.3} parent=11 // pred_fallthru
          _
        // Predicated region
        $region17: #{_lambda_.3} parent=11 // pred_check
          %p135 = pneg %p89
        $region18: #{_lambda_.3} parent=11 // pred_check_branch
          %137 = sbr.rel (%p135) target = $region20
        $region19: #{_lambda_.3} parent=11 // pred_region
          _
        $region20: #{_lambda_.3} parent=11 // pred_fallthru
          _
      $region12: #{_lambda_.3} parent=5 // pred_fallthru
        _
      %p138 = scmp.lt.s32.totalorder %s9, 2
      // Predicated region
      $region21: #{_lambda_.3} parent=5 // pred_check
        %p139 = pneg %p138
      $region22: #{_lambda_.3} parent=5 // pred_check_branch
        %141 = sbr.rel (%p139) target = $region24
      $region23: #{_lambda_.3} parent=5 // pred_region
        // Predicated region
        $region25: #{_lambda_.3} parent=23 // pred_check
          %p142 = pneg %p41
        $region26: #{_lambda_.3} parent=23 // pred_check_branch
          %144 = sbr.rel (%p142) target = $region28
        $region27: #{_lambda_.3} parent=23 // pred_region
          %s145 = sand.u32 %s31, 1
          %s146 = sand.u32 %s31, 1
          %s147 = smul.addr %s146, 384
          %s148 = scalar_lea.vmem [#allocation3], %s147
          %s149 = smul.addr %s16, 12
          %s150 = smul.addr %s149, 8
          %s151 = scalar_lea.vmem %s0, %s150
          // Predicated region
          $region29: #{_lambda_.3} parent=27 // pred_check
            _
          $region30: #{_lambda_.3} parent=27 // pred_check_branch
            %153 = sbr.rel (0) target = $region32
          $region31: #{_lambda_.3} parent=27 // pred_region
            // Predicated region
            $region33: #{_lambda_.3} parent=31 // pred_check
              _
            $region34: #{_lambda_.3} parent=31 // pred_check_branch
              %155 = sbr.rel (0) target = $region36
            $region35: #{_lambda_.3} parent=31 // pred_region
              // Predicated region
              $region48: #{_lambda_.3} parent=35 // pred_check
                _
              $region49: #{_lambda_.3} parent=35 // pred_check_branch
                %265 = sbr.rel (0) target = $region51
              $region50: #{_lambda_.3} parent=35 // pred_region
                loop: start=0, step=1, limit=1
                $region52: #{_lambda_.3} parent=50 // loop_pre_header
                  _
                $region53: #{_lambda_.3} parent=50 // loop_header
                  %s267 = sphi 0, %s271
                  %p268 = scmp.ge.s32.totalorder %s267, 1
                  %s272 = sphi %s151, %s151
                  %s273 = sphi %s148, %s148
                $region54: #{_lambda_.3} parent=50 // loop_header_branch
                  %270 = sbr.rel (%p268) target = $region58
                $region55: #{_lambda_.3} parent=50 // loop_body
                  %v274 = vld [vmem:[%s272] sm:$0xff]
                  %275 = vst [vmem:[%s273] sm:$0xff] %v274
                  %v276 = vld [vmem:[%s272 + $0x8] sm:$0xff]
                  %277 = vst [vmem:[%s273 + $0x8] sm:$0xff] %v276
                  %v278 = vld [vmem:[%s272 + $0x10] sm:$0xff]
                  %279 = vst [vmem:[%s273 + $0x10] sm:$0xff] %v278
                  %v280 = vld [vmem:[%s272 + $0x18] sm:$0xff]
                  %281 = vst [vmem:[%s273 + $0x18] sm:$0xff] %v280
                  %v282 = vld [vmem:[%s272 + $0x20] sm:$0xff]
                  %283 = vst [vmem:[%s273 + $0x20] sm:$0xff] %v282
                  %v284 = vld [vmem:[%s272 + $0x28] sm:$0xff]
                  %285 = vst [vmem:[%s273 + $0x28] sm:$0xff] %v284
                  %v286 = vld [vmem:[%s272 + $0x30] sm:$0xff]
                  %287 = vst [vmem:[%s273 + $0x30] sm:$0xff] %v286
                  %v288 = vld [vmem:[%s272 + $0x38] sm:$0xff]
                  %289 = vst [vmem:[%s273 + $0x38] sm:$0xff] %v288
                  %v290 = vld [vmem:[%s272 + $0x40] sm:$0xff]
                  %291 = vst [vmem:[%s273 + $0x40] sm:$0xff] %v290
                  %v292 = vld [vmem:[%s272 + $0x48] sm:$0xff]
                  %293 = vst [vmem:[%s273 + $0x48] sm:$0xff] %v292
                  %v294 = vld [vmem:[%s272 + $0x50] sm:$0xff]
                  %295 = vst [vmem:[%s273 + $0x50] sm:$0xff] %v294
                  %v296 = vld [vmem:[%s272 + $0x58] sm:$0xff]
                  %297 = vst [vmem:[%s273 + $0x58] sm:$0xff] %v296
                  %v298 = vld [vmem:[%s272 + $0xc0] sm:$0xff]
                  %299 = vst [vmem:[%s273 + $0x60] sm:$0xff] %v298
                  %v300 = vld [vmem:[%s272 + $0xc8] sm:$0xff]
                  %301 = vst [vmem:[%s273 + $0x68] sm:$0xff] %v300
                  %v302 = vld [vmem:[%s272 + $0xd0] sm:$0xff]
                  %303 = vst [vmem:[%s273 + $0x70] sm:$0xff] %v302
                  %v304 = vld [vmem:[%s272 + $0xd8] sm:$0xff]
                  %305 = vst [vmem:[%s273 + $0x78] sm:$0xff] %v304
                  %v306 = vld [vmem:[%s272 + $0xe0] sm:$0xff]
                  %307 = vst [vmem:[%s273 + $0x80] sm:$0xff] %v306
                  %v308 = vld [vmem:[%s272 + $0xe8] sm:$0xff]
                  %309 = vst [vmem:[%s273 + $0x88] sm:$0xff] %v308
                  %v310 = vld [vmem:[%s272 + $0xf0] sm:$0xff]
                  %311 = vst [vmem:[%s273 + $0x90] sm:$0xff] %v310
                  %v312 = vld [vmem:[%s272 + $0xf8] sm:$0xff]
                  %313 = vst [vmem:[%s273 + $0x98] sm:$0xff] %v312
                  %v314 = vld [vmem:[%s272 + $0x100] sm:$0xff]
                  %315 = vst [vmem:[%s273 + $0xa0] sm:$0xff] %v314
                  %v316 = vld [vmem:[%s272 + $0x108] sm:$0xff]
                  %317 = vst [vmem:[%s273 + $0xa8] sm:$0xff] %v316
                  %v318 = vld [vmem:[%s272 + $0x110] sm:$0xff]
                  %319 = vst [vmem:[%s273 + $0xb0] sm:$0xff] %v318
                  %v320 = vld [vmem:[%s272 + $0x118] sm:$0xff]
                  %321 = vst [vmem:[%s273 + $0xb8] sm:$0xff] %v320
                  %v322 = vld [vmem:[%s272 + $0x180] sm:$0xff]
                  %323 = vst [vmem:[%s273 + $0xc0] sm:$0xff] %v322
                  %v324 = vld [vmem:[%s272 + $0x188] sm:$0xff]
                  %325 = vst [vmem:[%s273 + $0xc8] sm:$0xff] %v324
                  %v326 = vld [vmem:[%s272 + $0x190] sm:$0xff]
                  %327 = vst [vmem:[%s273 + $0xd0] sm:$0xff] %v326
                  %v328 = vld [vmem:[%s272 + $0x198] sm:$0xff]
                  %329 = vst [vmem:[%s273 + $0xd8] sm:$0xff] %v328
                  %v330 = vld [vmem:[%s272 + $0x1a0] sm:$0xff]
                  %331 = vst [vmem:[%s273 + $0xe0] sm:$0xff] %v330
                  %v332 = vld [vmem:[%s272 + $0x1a8] sm:$0xff]
                  %333 = vst [vmem:[%s273 + $0xe8] sm:$0xff] %v332
                  %v334 = vld [vmem:[%s272 + $0x1b0] sm:$0xff]
                  %335 = vst [vmem:[%s273 + $0xf0] sm:$0xff] %v334
                  %v336 = vld [vmem:[%s272 + $0x1b8] sm:$0xff]
                  %337 = vst [vmem:[%s273 + $0xf8] sm:$0xff] %v336
                  %v338 = vld [vmem:[%s272 + $0x1c0] sm:$0xff]
                  %339 = vst [vmem:[%s273 + $0x100] sm:$0xff] %v338
                  %v340 = vld [vmem:[%s272 + $0x1c8] sm:$0xff]
                  %341 = vst [vmem:[%s273 + $0x108] sm:$0xff] %v340
                  %v342 = vld [vmem:[%s272 + $0x1d0] sm:$0xff]
                  %343 = vst [vmem:[%s273 + $0x110] sm:$0xff] %v342
                  %v344 = vld [vmem:[%s272 + $0x1d8] sm:$0xff]
                  %345 = vst [vmem:[%s273 + $0x118] sm:$0xff] %v344
                  %v346 = vld [vmem:[%s272 + $0x240] sm:$0xff]
                  %347 = vst [vmem:[%s273 + $0x120] sm:$0xff] %v346
                  %v348 = vld [vmem:[%s272 + $0x248] sm:$0xff]
                  %349 = vst [vmem:[%s273 + $0x128] sm:$0xff] %v348
                  %v350 = vld [vmem:[%s272 + $0x250] sm:$0xff]
                  %351 = vst [vmem:[%s273 + $0x130] sm:$0xff] %v350
                  %v352 = vld [vmem:[%s272 + $0x258] sm:$0xff]
                  %353 = vst [vmem:[%s273 + $0x138] sm:$0xff] %v352
                  %v354 = vld [vmem:[%s272 + $0x260] sm:$0xff]
                  %355 = vst [vmem:[%s273 + $0x140] sm:$0xff] %v354
                  %v356 = vld [vmem:[%s272 + $0x268] sm:$0xff]
                  %357 = vst [vmem:[%s273 + $0x148] sm:$0xff] %v356
                  %v358 = vld [vmem:[%s272 + $0x270] sm:$0xff]
                  %359 = vst [vmem:[%s273 + $0x150] sm:$0xff] %v358
                  %v360 = vld [vmem:[%s272 + $0x278] sm:$0xff]
                  %361 = vst [vmem:[%s273 + $0x158] sm:$0xff] %v360
                  %v362 = vld [vmem:[%s272 + $0x280] sm:$0xff]
                  %363 = vst [vmem:[%s273 + $0x160] sm:$0xff] %v362
                  %v364 = vld [vmem:[%s272 + $0x288] sm:$0xff]
                  %365 = vst [vmem:[%s273 + $0x168] sm:$0xff] %v364
                  %v366 = vld [vmem:[%s272 + $0x290] sm:$0xff]
                  %367 = vst [vmem:[%s273 + $0x170] sm:$0xff] %v366
                  %v368 = vld [vmem:[%s272 + $0x298] sm:$0xff]
                  %369 = vst [vmem:[%s273 + $0x178] sm:$0xff] %v368
                $region56: #{_lambda_.3} parent=50 // loop_footer
                  %s271 = sadd.s32 1, %s267
                $region57: #{_lambda_.3} parent=50 // loop_footer_branch
                  %266 = sbr.rel target = $region53
                $region58: #{_lambda_.3} parent=50 // loop_exit
                  _
              $region51: #{_lambda_.3} parent=35 // pred_fallthru
                _
              // Predicated region
              $region59: #{_lambda_.3} parent=35 // pred_check
                _
              $region60: #{_lambda_.3} parent=35 // pred_check_branch
                %371 = sbr.rel target = $region62
              $region61: #{_lambda_.3} parent=35 // pred_region
                _
              $region62: #{_lambda_.3} parent=35 // pred_fallthru
                _
            $region36: #{_lambda_.3} parent=31 // pred_fallthru
              _
            // Predicated region
            $region37: #{_lambda_.3} parent=31 // pred_check
              _
            $region38: #{_lambda_.3} parent=31 // pred_check_branch
              %157 = sbr.rel target = $region40
            $region39: #{_lambda_.3} parent=31 // pred_region
              %s159 = ssub.s32 256, 1
              loop: start=0, step=1, limit=1
              $region41: #{_lambda_.3} parent=39 // loop_pre_header
                _
              $region42: #{_lambda_.3} parent=39 // loop_header
                %s161 = sphi 0, %s165
                %p162 = scmp.ge.s32.totalorder %s161, 1
                %s166 = sphi %s151, %s151
                %s167 = sphi %s148, %s148
              $region43: #{_lambda_.3} parent=39 // loop_header_branch
                %164 = sbr.rel (%p162) target = $region47
              $region44: #{_lambda_.3} parent=39 // loop_body
                %v168 = vld [vmem:[%s166] sm:%s159]
                %169 = vst [vmem:[%s167] sm:%s159] %v168
                %v170 = vld [vmem:[%s166 + $0x8] sm:%s159]
                %171 = vst [vmem:[%s167 + $0x8] sm:%s159] %v170
                %v172 = vld [vmem:[%s166 + $0x10] sm:%s159]
                %173 = vst [vmem:[%s167 + $0x10] sm:%s159] %v172
                %v174 = vld [vmem:[%s166 + $0x18] sm:%s159]
                %175 = vst [vmem:[%s167 + $0x18] sm:%s159] %v174
                %v176 = vld [vmem:[%s166 + $0x20] sm:%s159]
                %177 = vst [vmem:[%s167 + $0x20] sm:%s159] %v176
                %v178 = vld [vmem:[%s166 + $0x28] sm:%s159]
                %179 = vst [vmem:[%s167 + $0x28] sm:%s159] %v178
                %v180 = vld [vmem:[%s166 + $0x30] sm:%s159]
                %181 = vst [vmem:[%s167 + $0x30] sm:%s159] %v180
                %v182 = vld [vmem:[%s166 + $0x38] sm:%s159]
                %183 = vst [vmem:[%s167 + $0x38] sm:%s159] %v182
                %v184 = vld [vmem:[%s166 + $0x40] sm:%s159]
                %185 = vst [vmem:[%s167 + $0x40] sm:%s159] %v184
                %v186 = vld [vmem:[%s166 + $0x48] sm:%s159]
                %187 = vst [vmem:[%s167 + $0x48] sm:%s159] %v186
                %v188 = vld [vmem:[%s166 + $0x50] sm:%s159]
                %189 = vst [vmem:[%s167 + $0x50] sm:%s159] %v188
                %v190 = vld [vmem:[%s166 + $0x58] sm:%s159]
                %191 = vst [vmem:[%s167 + $0x58] sm:%s159] %v190
                %v192 = vld [vmem:[%s166 + $0xc0] sm:%s159]
                %193 = vst [vmem:[%s167 + $0x60] sm:%s159] %v192
                %v194 = vld [vmem:[%s166 + $0xc8] sm:%s159]
                %195 = vst [vmem:[%s167 + $0x68] sm:%s159] %v194
                %v196 = vld [vmem:[%s166 + $0xd0] sm:%s159]
                %197 = vst [vmem:[%s167 + $0x70] sm:%s159] %v196
                %v198 = vld [vmem:[%s166 + $0xd8] sm:%s159]
                %199 = vst [vmem:[%s167 + $0x78] sm:%s159] %v198
                %v200 = vld [vmem:[%s166 + $0xe0] sm:%s159]
                %201 = vst [vmem:[%s167 + $0x80] sm:%s159] %v200
                %v202 = vld [vmem:[%s166 + $0xe8] sm:%s159]
                %203 = vst [vmem:[%s167 + $0x88] sm:%s159] %v202
                %v204 = vld [vmem:[%s166 + $0xf0] sm:%s159]
                %205 = vst [vmem:[%s167 + $0x90] sm:%s159] %v204
                %v206 = vld [vmem:[%s166 + $0xf8] sm:%s159]
                %207 = vst [vmem:[%s167 + $0x98] sm:%s159] %v206
                %v208 = vld [vmem:[%s166 + $0x100] sm:%s159]
                %209 = vst [vmem:[%s167 + $0xa0] sm:%s159] %v208
                %v210 = vld [vmem:[%s166 + $0x108] sm:%s159]
                %211 = vst [vmem:[%s167 + $0xa8] sm:%s159] %v210
                %v212 = vld [vmem:[%s166 + $0x110] sm:%s159]
                %213 = vst [vmem:[%s167 + $0xb0] sm:%s159] %v212
                %v214 = vld [vmem:[%s166 + $0x118] sm:%s159]
                %215 = vst [vmem:[%s167 + $0xb8] sm:%s159] %v214
                %v216 = vld [vmem:[%s166 + $0x180] sm:%s159]
                %217 = vst [vmem:[%s167 + $0xc0] sm:%s159] %v216
                %v218 = vld [vmem:[%s166 + $0x188] sm:%s159]
                %219 = vst [vmem:[%s167 + $0xc8] sm:%s159] %v218
                %v220 = vld [vmem:[%s166 + $0x190] sm:%s159]
                %221 = vst [vmem:[%s167 + $0xd0] sm:%s159] %v220
                %v222 = vld [vmem:[%s166 + $0x198] sm:%s159]
                %223 = vst [vmem:[%s167 + $0xd8] sm:%s159] %v222
                %v224 = vld [vmem:[%s166 + $0x1a0] sm:%s159]
                %225 = vst [vmem:[%s167 + $0xe0] sm:%s159] %v224
                %v226 = vld [vmem:[%s166 + $0x1a8] sm:%s159]
                %227 = vst [vmem:[%s167 + $0xe8] sm:%s159] %v226
                %v228 = vld [vmem:[%s166 + $0x1b0] sm:%s159]
                %229 = vst [vmem:[%s167 + $0xf0] sm:%s159] %v228
                %v230 = vld [vmem:[%s166 + $0x1b8] sm:%s159]
                %231 = vst [vmem:[%s167 + $0xf8] sm:%s159] %v230
                %v232 = vld [vmem:[%s166 + $0x1c0] sm:%s159]
                %233 = vst [vmem:[%s167 + $0x100] sm:%s159] %v232
                %v234 = vld [vmem:[%s166 + $0x1c8] sm:%s159]
                %235 = vst [vmem:[%s167 + $0x108] sm:%s159] %v234
                %v236 = vld [vmem:[%s166 + $0x1d0] sm:%s159]
                %237 = vst [vmem:[%s167 + $0x110] sm:%s159] %v236
                %v238 = vld [vmem:[%s166 + $0x1d8] sm:%s159]
                %239 = vst [vmem:[%s167 + $0x118] sm:%s159] %v238
                %v240 = vld [vmem:[%s166 + $0x240] sm:%s159]
                %241 = vst [vmem:[%s167 + $0x120] sm:%s159] %v240
                %v242 = vld [vmem:[%s166 + $0x248] sm:%s159]
                %243 = vst [vmem:[%s167 + $0x128] sm:%s159] %v242
                %v244 = vld [vmem:[%s166 + $0x250] sm:%s159]
                %245 = vst [vmem:[%s167 + $0x130] sm:%s159] %v244
                %v246 = vld [vmem:[%s166 + $0x258] sm:%s159]
                %247 = vst [vmem:[%s167 + $0x138] sm:%s159] %v246
                %v248 = vld [vmem:[%s166 + $0x260] sm:%s159]
                %249 = vst [vmem:[%s167 + $0x140] sm:%s159] %v248
                %v250 = vld [vmem:[%s166 + $0x268] sm:%s159]
                %251 = vst [vmem:[%s167 + $0x148] sm:%s159] %v250
                %v252 = vld [vmem:[%s166 + $0x270] sm:%s159]
                %253 = vst [vmem:[%s167 + $0x150] sm:%s159] %v252
                %v254 = vld [vmem:[%s166 + $0x278] sm:%s159]
                %255 = vst [vmem:[%s167 + $0x158] sm:%s159] %v254
                %v256 = vld [vmem:[%s166 + $0x280] sm:%s159]
                %257 = vst [vmem:[%s167 + $0x160] sm:%s159] %v256
                %v258 = vld [vmem:[%s166 + $0x288] sm:%s159]
                %259 = vst [vmem:[%s167 + $0x168] sm:%s159] %v258
                %v260 = vld [vmem:[%s166 + $0x290] sm:%s159]
                %261 = vst [vmem:[%s167 + $0x170] sm:%s159] %v260
                %v262 = vld [vmem:[%s166 + $0x298] sm:%s159]
                %263 = vst [vmem:[%s167 + $0x178] sm:%s159] %v262
              $region45: #{_lambda_.3} parent=39 // loop_footer
                %s165 = sadd.s32 1, %s161
              $region46: #{_lambda_.3} parent=39 // loop_footer_branch
                %160 = sbr.rel target = $region42
              $region47: #{_lambda_.3} parent=39 // loop_exit
                _
            $region40: #{_lambda_.3} parent=31 // pred_fallthru
              _
          $region32: #{_lambda_.3} parent=27 // pred_fallthru
            _
          %372 = vnop
        $region28: #{_lambda_.3} parent=23 // pred_fallthru
          _
      $region24: #{_lambda_.3} parent=5 // pred_fallthru
        _
      %p373 = scmp.le.s32.totalorder 1, %s9
      %p374 = scmp.lt.s32.totalorder %s9, 3
      %p375 = pnand %p373, %p374
      %p376 = pneg %p375
      // Predicated region
      $region63: #{_lambda_.3} parent=5 // pred_check
        _
      $region64: #{_lambda_.3} parent=5 // pred_check_branch
        %378 = sbr.rel (%p375) target = $region66
      $region65: #{_lambda_.3} parent=5 // pred_region
        %s379 = ssub.s32 %s9, 1
        %s380 = sand.u32 %s34, 1
        %s381 = sand.u32 %s34, 1
        %s382 = smul.addr %s381, 384
        %s383 = scalar_lea.vmem [#allocation3], %s382
        // Predicated region
        $region67: #{_lambda_.3} parent=65 // pred_check
          %p384 = pneg %p47
        $region68: #{_lambda_.3} parent=65 // pred_check_branch
          %386 = sbr.rel (%p384) target = $region70
        $region69: #{_lambda_.3} parent=65 // pred_region
          _
        $region70: #{_lambda_.3} parent=65 // pred_fallthru
          _
        %s387 = sand.u32 %s34, 1
        %s388 = sand.u32 %s34, 1
        %s389 = smul.addr %s388, 384
        %s390 = scalar_lea.vmem [#allocation3], %s389
        %p391 = pneg %p47
        %p392 = pneg %p44
        %p393 = pneg %p68
        %p394 = pneg %p65
        %p395 = pneg %p89
        %p396 = pneg %p86
        %p397 = pneg %p117
        %p398 = pneg %p114
        %s399 = smul.u32 9, %s19
        %p400 = scmp.lt.s32.totalorder %s18, 1
        %s401 = scalar_select %p400, %s18, 1
        %p402 = scmp.lt.s32.totalorder %s399, 8
        %s403 = scalar_select %p402, %s399, 8
        %s404 = smul.addr %s401, 9
        %s405 = sadd.s32 %s403, %s404
        %s406 = smul.addr %s405, 8
        %s407 = scalar_lea.vmem %s3, %s406
        %s408 = smul.u32 9, %s19
        %p409 = scmp.lt.s32.totalorder %s18, 1
        %s410 = scalar_select %p409, %s18, 1
        %p411 = scmp.lt.s32.totalorder %s408, 8
        %s412 = scalar_select %p411, %s408, 8
        %s413 = smul.addr %s410, 9
        %s414 = sadd.s32 %s412, %s413
        %s415 = smul.addr %s414, 8
        %s416 = scalar_lea.vmem %s3, %s415
        %s417 = smul.u32 9, %s19
        %v419 = vld [vmem:[%s383] sm:$0xff]
        %v420 = vld [vmem:[%s383 + $0x8] sm:$0xff]
        %v421 = vld [vmem:[%s383 + $0x10] sm:$0xff]
        %v422 = vld [vmem:[%s383 + $0x18] sm:$0xff]
        %v423 = vld [vmem:[%s383 + $0x20] sm:$0xff]
        %v424 = vld [vmem:[%s383 + $0x28] sm:$0xff]
        %v425 = vld [vmem:[%s383 + $0x30] sm:$0xff]
        %v426 = vld [vmem:[%s383 + $0x38] sm:$0xff]
        %v427 = vld [vmem:[%s383 + $0x40] sm:$0xff]
        %v428 = vpack.c.bf16 %v419, %v419
        %v429 = vpack.c.bf16 %v420, %v420
        %v430 = vpack.c.bf16 %v421, %v421
        %v431 = vpack.c.bf16 %v422, %v422
        %v432 = vpack.c.bf16 %v423, %v423
        %v433 = vpack.c.bf16 %v424, %v424
        %v434 = vpack.c.bf16 %v425, %v425
        %v435 = vpack.c.bf16 %v426, %v426
        %v436 = vpack.c.bf16 %v427, %v427
        %vm437 = vcmask 519168
        %438 = vst.msk [vmem:[#allocation2] sm:$0xf] %vm437, %v428
        %439 = vst.msk [vmem:[#allocation2 + $0x14] sm:$0xf] %vm437, %v429
        %440 = vst.msk [vmem:[#allocation2 + $0x28] sm:$0xf] %vm437, %v430
        %441 = vst.msk [vmem:[#allocation2 + $0x3c] sm:$0xf] %vm437, %v431
        %442 = vst.msk [vmem:[#allocation2 + $0x50] sm:$0xf] %vm437, %v432
        %443 = vst.msk [vmem:[#allocation2 + $0x64] sm:$0xf] %vm437, %v433
        %444 = vst.msk [vmem:[#allocation2 + $0x78] sm:$0xf] %vm437, %v434
        %445 = vst.msk [vmem:[#allocation2 + $0x8c] sm:$0xf] %vm437, %v435
        %446 = vst.msk [vmem:[#allocation2 + $0xa0] sm:$0xf] %vm437, %v436
        %s447 = scalar_lea.vmem %s383, 96 [#allocation3]
        %v448 = vld [vmem:[%s447] sm:$0xff]
        %v449 = vld [vmem:[%s447 + $0x8] sm:$0xff]
        %v450 = vld [vmem:[%s447 + $0x10] sm:$0xff]
        %v451 = vld [vmem:[%s447 + $0x18] sm:$0xff]
        %v452 = vld [vmem:[%s447 + $0x20] sm:$0xff]
        %v453 = vld [vmem:[%s447 + $0x28] sm:$0xff]
        %v454 = vld [vmem:[%s447 + $0x30] sm:$0xff]
        %v455 = vld [vmem:[%s447 + $0x38] sm:$0xff]
        %v456 = vld [vmem:[%s447 + $0x40] sm:$0xff]
        %v457 = vpack.c.bf16 %v448, %v448
        %v458 = vpack.c.bf16 %v449, %v449
        %v459 = vpack.c.bf16 %v450, %v450
        %v460 = vpack.c.bf16 %v451, %v451
        %v461 = vpack.c.bf16 %v452, %v452
        %v462 = vpack.c.bf16 %v453, %v453
        %v463 = vpack.c.bf16 %v454, %v454
        %v464 = vpack.c.bf16 %v455, %v455
        %v465 = vpack.c.bf16 %v456, %v456
        %475 = vrot.lane.b32.xlu0 %v457, 64
        %v476 = vpop.permute.xlu0 %475
        %477 = vrot.lane.b32.xlu0 %v458, 64
        %v478 = vpop.permute.xlu0 %477
        %479 = vrot.lane.b32.xlu0 %v459, 64
        %v480 = vpop.permute.xlu0 %479
        %481 = vrot.lane.b32.xlu0 %v460, 64
        %v482 = vpop.permute.xlu0 %481
        %483 = vrot.lane.b32.xlu0 %v461, 64
        %v484 = vpop.permute.xlu0 %483
        %485 = vrot.lane.b32.xlu0 %v462, 64
        %v486 = vpop.permute.xlu0 %485
        %487 = vrot.lane.b32.xlu0 %v463, 64
        %v488 = vpop.permute.xlu0 %487
        %489 = vrot.lane.b32.xlu0 %v464, 64
        %v490 = vpop.permute.xlu0 %489
        %491 = vrot.lane.b32.xlu0 %v465, 64
        %v492 = vpop.permute.xlu0 %491
        %vm502 = vcmask 1043968
        %503 = vst.msk [vmem:[#allocation2] sm:$0xf] %vm502, %v476
        %504 = vst.msk [vmem:[#allocation2 + $0x14] sm:$0xf] %vm502, %v478
        %505 = vst.msk [vmem:[#allocation2 + $0x28] sm:$0xf] %vm502, %v480
        %506 = vst.msk [vmem:[#allocation2 + $0x3c] sm:$0xf] %vm502, %v482
        %507 = vst.msk [vmem:[#allocation2 + $0x50] sm:$0xf] %vm502, %v484
        %508 = vst.msk [vmem:[#allocation2 + $0x64] sm:$0xf] %vm502, %v486
        %509 = vst.msk [vmem:[#allocation2 + $0x78] sm:$0xf] %vm502, %v488
        %510 = vst.msk [vmem:[#allocation2 + $0x8c] sm:$0xf] %vm502, %v490
        %511 = vst.msk [vmem:[#allocation2 + $0xa0] sm:$0xf] %vm502, %v492
        %v512 = vld [vmem:[%s383 + $0x1] sm:$0xff]
        %v513 = vld [vmem:[%s383 + $0x9] sm:$0xff]
        %v514 = vld [vmem:[%s383 + $0x11] sm:$0xff]
        %v515 = vld [vmem:[%s383 + $0x19] sm:$0xff]
        %v516 = vld [vmem:[%s383 + $0x21] sm:$0xff]
        %v517 = vld [vmem:[%s383 + $0x29] sm:$0xff]
        %v518 = vld [vmem:[%s383 + $0x31] sm:$0xff]
        %v519 = vld [vmem:[%s383 + $0x39] sm:$0xff]
        %v520 = vld [vmem:[%s383 + $0x41] sm:$0xff]
        %v521 = vpack.c.bf16 %v512, %v512
        %v522 = vpack.c.bf16 %v513, %v513
        %v523 = vpack.c.bf16 %v514, %v514
        %v524 = vpack.c.bf16 %v515, %v515
        %v525 = vpack.c.bf16 %v516, %v516
        %v526 = vpack.c.bf16 %v517, %v517
        %v527 = vpack.c.bf16 %v518, %v518
        %v528 = vpack.c.bf16 %v519, %v519
        %v529 = vpack.c.bf16 %v520, %v520
        %530 = vst.msk [vmem:[#allocation2 + $0x4] sm:$0xf] %vm437, %v521
        %531 = vst.msk [vmem:[#allocation2 + $0x18] sm:$0xf] %vm437, %v522
        %532 = vst.msk [vmem:[#allocation2 + $0x2c] sm:$0xf] %vm437, %v523
        %533 = vst.msk [vmem:[#allocation2 + $0x40] sm:$0xf] %vm437, %v524
        %534 = vst.msk [vmem:[#allocation2 + $0x54] sm:$0xf] %vm437, %v525
        %535 = vst.msk [vmem:[#allocation2 + $0x68] sm:$0xf] %vm437, %v526
        %536 = vst.msk [vmem:[#allocation2 + $0x7c] sm:$0xf] %vm437, %v527
        %537 = vst.msk [vmem:[#allocation2 + $0x90] sm:$0xf] %vm437, %v528
        %538 = vst.msk [vmem:[#allocation2 + $0xa4] sm:$0xf] %vm437, %v529
        %s539 = scalar_lea.vmem %s383, 192 [#allocation3]
        %v540 = vld [vmem:[%s539] sm:$0xff]
        %v541 = vld [vmem:[%s539 + $0x8] sm:$0xff]
        %v542 = vld [vmem:[%s539 + $0x10] sm:$0xff]
        %v543 = vld [vmem:[%s539 + $0x18] sm:$0xff]
        %v544 = vld [vmem:[%s539 + $0x20] sm:$0xff]
        %v545 = vld [vmem:[%s539 + $0x28] sm:$0xff]
        %v546 = vld [vmem:[%s539 + $0x30] sm:$0xff]
        %v547 = vld [vmem:[%s539 + $0x38] sm:$0xff]
        %v548 = vld [vmem:[%s539 + $0x40] sm:$0xff]
        %v549 = vpack.c.bf16 %v540, %v540
        %v550 = vpack.c.bf16 %v541, %v541
        %v551 = vpack.c.bf16 %v542, %v542
        %v552 = vpack.c.bf16 %v543, %v543
        %v553 = vpack.c.bf16 %v544, %v544
        %v554 = vpack.c.bf16 %v545, %v545
        %v555 = vpack.c.bf16 %v546, %v546
        %v556 = vpack.c.bf16 %v547, %v547
        %v557 = vpack.c.bf16 %v548, %v548
        %567 = vrot.lane.b32.xlu0 %v549, 64
        %v568 = vpop.permute.xlu0 %567
        %569 = vrot.lane.b32.xlu0 %v550, 64
        %v570 = vpop.permute.xlu0 %569
        %571 = vrot.lane.b32.xlu0 %v551, 64
        %v572 = vpop.permute.xlu0 %571
        %573 = vrot.lane.b32.xlu0 %v552, 64
        %v574 = vpop.permute.xlu0 %573
        %575 = vrot.lane.b32.xlu0 %v553, 64
        %v576 = vpop.permute.xlu0 %575
        %577 = vrot.lane.b32.xlu0 %v554, 64
        %v578 = vpop.permute.xlu0 %577
        %579 = vrot.lane.b32.xlu0 %v555, 64
        %v580 = vpop.permute.xlu0 %579
        %581 = vrot.lane.b32.xlu0 %v556, 64
        %v582 = vpop.permute.xlu0 %581
        %583 = vrot.lane.b32.xlu0 %v557, 64
        %v584 = vpop.permute.xlu0 %583
        %594 = vst.msk [vmem:[#allocation2 + $0x4] sm:$0xf] %vm502, %v568
        %595 = vst.msk [vmem:[#allocation2 + $0x18] sm:$0xf] %vm502, %v570
        %596 = vst.msk [vmem:[#allocation2 + $0x2c] sm:$0xf] %vm502, %v572
        %597 = vst.msk [vmem:[#allocation2 + $0x40] sm:$0xf] %vm502, %v574
        %598 = vst.msk [vmem:[#allocation2 + $0x54] sm:$0xf] %vm502, %v576
        %599 = vst.msk [vmem:[#allocation2 + $0x68] sm:$0xf] %vm502, %v578
        %600 = vst.msk [vmem:[#allocation2 + $0x7c] sm:$0xf] %vm502, %v580
        %601 = vst.msk [vmem:[#allocation2 + $0x90] sm:$0xf] %vm502, %v582
        %602 = vst.msk [vmem:[#allocation2 + $0xa4] sm:$0xf] %vm502, %v584
        %s603 = scalar_lea.vmem %s383, 288 [#allocation3]
        %v604 = vld [vmem:[%s603] sm:$0xff]
        %v605 = vld [vmem:[%s603 + $0x8] sm:$0xff]
        %v606 = vld [vmem:[%s603 + $0x10] sm:$0xff]
        %v607 = vld [vmem:[%s603 + $0x18] sm:$0xff]
        %v608 = vld [vmem:[%s603 + $0x20] sm:$0xff]
        %v609 = vld [vmem:[%s603 + $0x28] sm:$0xff]
        %v610 = vld [vmem:[%s603 + $0x30] sm:$0xff]
        %v611 = vld [vmem:[%s603 + $0x38] sm:$0xff]
        %v612 = vld [vmem:[%s603 + $0x40] sm:$0xff]
        %v613 = vpack.c.bf16 %v604, %v604
        %v614 = vpack.c.bf16 %v605, %v605
        %v615 = vpack.c.bf16 %v606, %v606
        %v616 = vpack.c.bf16 %v607, %v607
        %v617 = vpack.c.bf16 %v608, %v608
        %v618 = vpack.c.bf16 %v609, %v609
        %v619 = vpack.c.bf16 %v610, %v610
        %v620 = vpack.c.bf16 %v611, %v611
        %v621 = vpack.c.bf16 %v612, %v612
        %622 = vst.msk [vmem:[#allocation2 + $0x8] sm:$0xf] %vm437, %v613
        %623 = vst.msk [vmem:[#allocation2 + $0x1c] sm:$0xf] %vm437, %v614
        %624 = vst.msk [vmem:[#allocation2 + $0x30] sm:$0xf] %vm437, %v615
        %625 = vst.msk [vmem:[#allocation2 + $0x44] sm:$0xf] %vm437, %v616
        %626 = vst.msk [vmem:[#allocation2 + $0x58] sm:$0xf] %vm437, %v617
        %627 = vst.msk [vmem:[#allocation2 + $0x6c] sm:$0xf] %vm437, %v618
        %628 = vst.msk [vmem:[#allocation2 + $0x80] sm:$0xf] %vm437, %v619
        %629 = vst.msk [vmem:[#allocation2 + $0x94] sm:$0xf] %vm437, %v620
        %630 = vst.msk [vmem:[#allocation2 + $0xa8] sm:$0xf] %vm437, %v621
        %v631 = vld [vmem:[%s539 + $0x1] sm:$0xff]
        %v632 = vld [vmem:[%s539 + $0x9] sm:$0xff]
        %v633 = vld [vmem:[%s539 + $0x11] sm:$0xff]
        %v634 = vld [vmem:[%s539 + $0x19] sm:$0xff]
        %v635 = vld [vmem:[%s539 + $0x21] sm:$0xff]
        %v636 = vld [vmem:[%s539 + $0x29] sm:$0xff]
        %v637 = vld [vmem:[%s539 + $0x31] sm:$0xff]
        %v638 = vld [vmem:[%s539 + $0x39] sm:$0xff]
        %v639 = vld [vmem:[%s539 + $0x41] sm:$0xff]
        %v640 = vpack.c.bf16 %v631, %v631
        %v641 = vpack.c.bf16 %v632, %v632
        %v642 = vpack.c.bf16 %v633, %v633
        %v643 = vpack.c.bf16 %v634, %v634
        %v644 = vpack.c.bf16 %v635, %v635
        %v645 = vpack.c.bf16 %v636, %v636
        %v646 = vpack.c.bf16 %v637, %v637
        %v647 = vpack.c.bf16 %v638, %v638
        %v648 = vpack.c.bf16 %v639, %v639
        %658 = vrot.lane.b32.xlu0 %v640, 64
        %v659 = vpop.permute.xlu0 %658
        %660 = vrot.lane.b32.xlu0 %v641, 64
        %v661 = vpop.permute.xlu0 %660
        %662 = vrot.lane.b32.xlu0 %v642, 64
        %v663 = vpop.permute.xlu0 %662
        %664 = vrot.lane.b32.xlu0 %v643, 64
        %v665 = vpop.permute.xlu0 %664
        %666 = vrot.lane.b32.xlu0 %v644, 64
        %v667 = vpop.permute.xlu0 %666
        %668 = vrot.lane.b32.xlu0 %v645, 64
        %v669 = vpop.permute.xlu0 %668
        %670 = vrot.lane.b32.xlu0 %v646, 64
        %v671 = vpop.permute.xlu0 %670
        %672 = vrot.lane.b32.xlu0 %v647, 64
        %v673 = vpop.permute.xlu0 %672
        %674 = vrot.lane.b32.xlu0 %v648, 64
        %v675 = vpop.permute.xlu0 %674
        %685 = vst.msk [vmem:[#allocation2 + $0x8] sm:$0xf] %vm502, %v659
        %686 = vst.msk [vmem:[#allocation2 + $0x1c] sm:$0xf] %vm502, %v661
        %687 = vst.msk [vmem:[#allocation2 + $0x30] sm:$0xf] %vm502, %v663
        %688 = vst.msk [vmem:[#allocation2 + $0x44] sm:$0xf] %vm502, %v665
        %689 = vst.msk [vmem:[#allocation2 + $0x58] sm:$0xf] %vm502, %v667
        %690 = vst.msk [vmem:[#allocation2 + $0x6c] sm:$0xf] %vm502, %v669
        %691 = vst.msk [vmem:[#allocation2 + $0x80] sm:$0xf] %vm502, %v671
        %692 = vst.msk [vmem:[#allocation2 + $0x94] sm:$0xf] %vm502, %v673
        %693 = vst.msk [vmem:[#allocation2 + $0xa8] sm:$0xf] %vm502, %v675
        %v694 = vld [vmem:[%s383 + $0x9] sm:$0xff]
        %v695 = vld [vmem:[%s383 + $0x11] sm:$0xff]
        %v696 = vld [vmem:[%s383 + $0x19] sm:$0xff]
        %v697 = vld [vmem:[%s383 + $0x21] sm:$0xff]
        %v698 = vld [vmem:[%s383 + $0x29] sm:$0xff]
        %v699 = vld [vmem:[%s383 + $0x31] sm:$0xff]
        %v700 = vld [vmem:[%s383 + $0x39] sm:$0xff]
        %v701 = vld [vmem:[%s383 + $0x41] sm:$0xff]
        %v702 = vld [vmem:[%s383 + $0x49] sm:$0xff]
        %v703 = vpack.c.bf16 %v694, %v694
        %v704 = vpack.c.bf16 %v695, %v695
        %v705 = vpack.c.bf16 %v696, %v696
        %v706 = vpack.c.bf16 %v697, %v697
        %v707 = vpack.c.bf16 %v698, %v698
        %v708 = vpack.c.bf16 %v699, %v699
        %v709 = vpack.c.bf16 %v700, %v700
        %v710 = vpack.c.bf16 %v701, %v701
        %v711 = vpack.c.bf16 %v702, %v702
        %712 = vst.msk [vmem:[#allocation2 + $0xc] sm:$0xf] %vm437, %v703
        %713 = vst.msk [vmem:[#allocation2 + $0x20] sm:$0xf] %vm437, %v704
        %714 = vst.msk [vmem:[#allocation2 + $0x34] sm:$0xf] %vm437, %v705
        %715 = vst.msk [vmem:[#allocation2 + $0x48] sm:$0xf] %vm437, %v706
        %716 = vst.msk [vmem:[#allocation2 + $0x5c] sm:$0xf] %vm437, %v707
        %717 = vst.msk [vmem:[#allocation2 + $0x70] sm:$0xf] %vm437, %v708
        %718 = vst.msk [vmem:[#allocation2 + $0x84] sm:$0xf] %vm437, %v709
        %719 = vst.msk [vmem:[#allocation2 + $0x98] sm:$0xf] %vm437, %v710
        %720 = vst.msk [vmem:[#allocation2 + $0xac] sm:$0xf] %vm437, %v711
        %v721 = vld [vmem:[%s447 + $0x9] sm:$0xff]
        %v722 = vld [vmem:[%s447 + $0x11] sm:$0xff]
        %v723 = vld [vmem:[%s447 + $0x19] sm:$0xff]
        %v724 = vld [vmem:[%s447 + $0x21] sm:$0xff]
        %v725 = vld [vmem:[%s447 + $0x29] sm:$0xff]
        %v726 = vld [vmem:[%s447 + $0x31] sm:$0xff]
        %v727 = vld [vmem:[%s447 + $0x39] sm:$0xff]
        %v728 = vld [vmem:[%s447 + $0x41] sm:$0xff]
        %v729 = vld [vmem:[%s447 + $0x49] sm:$0xff]
        %v730 = vpack.c.bf16 %v721, %v721
        %v731 = vpack.c.bf16 %v722, %v722
        %v732 = vpack.c.bf16 %v723, %v723
        %v733 = vpack.c.bf16 %v724, %v724
        %v734 = vpack.c.bf16 %v725, %v725
        %v735 = vpack.c.bf16 %v726, %v726
        %v736 = vpack.c.bf16 %v727, %v727
        %v737 = vpack.c.bf16 %v728, %v728
        %v738 = vpack.c.bf16 %v729, %v729
        %748 = vrot.lane.b32.xlu0 %v730, 64
        %v749 = vpop.permute.xlu0 %748
        %750 = vrot.lane.b32.xlu0 %v731, 64
        %v751 = vpop.permute.xlu0 %750
        %752 = vrot.lane.b32.xlu0 %v732, 64
        %v753 = vpop.permute.xlu0 %752
        %754 = vrot.lane.b32.xlu0 %v733, 64
        %v755 = vpop.permute.xlu0 %754
        %756 = vrot.lane.b32.xlu0 %v734, 64
        %v757 = vpop.permute.xlu0 %756
        %758 = vrot.lane.b32.xlu0 %v735, 64
        %v759 = vpop.permute.xlu0 %758
        %760 = vrot.lane.b32.xlu0 %v736, 64
        %v761 = vpop.permute.xlu0 %760
        %762 = vrot.lane.b32.xlu0 %v737, 64
        %v763 = vpop.permute.xlu0 %762
        %764 = vrot.lane.b32.xlu0 %v738, 64
        %v765 = vpop.permute.xlu0 %764
        %775 = vst.msk [vmem:[#allocation2 + $0xc] sm:$0xf] %vm502, %v749
        %776 = vst.msk [vmem:[#allocation2 + $0x20] sm:$0xf] %vm502, %v751
        %777 = vst.msk [vmem:[#allocation2 + $0x34] sm:$0xf] %vm502, %v753
        %778 = vst.msk [vmem:[#allocation2 + $0x48] sm:$0xf] %vm502, %v755
        %779 = vst.msk [vmem:[#allocation2 + $0x5c] sm:$0xf] %vm502, %v757
        %780 = vst.msk [vmem:[#allocation2 + $0x70] sm:$0xf] %vm502, %v759
        %781 = vst.msk [vmem:[#allocation2 + $0x84] sm:$0xf] %vm502, %v761
        %782 = vst.msk [vmem:[#allocation2 + $0x98] sm:$0xf] %vm502, %v763
        %783 = vst.msk [vmem:[#allocation2 + $0xac] sm:$0xf] %vm502, %v765
        %v784 = vld [vmem:[%s383 + $0xa] sm:$0xff]
        %v785 = vld [vmem:[%s383 + $0x12] sm:$0xff]
        %v786 = vld [vmem:[%s383 + $0x1a] sm:$0xff]
        %v787 = vld [vmem:[%s383 + $0x22] sm:$0xff]
        %v788 = vld [vmem:[%s383 + $0x2a] sm:$0xff]
        %v789 = vld [vmem:[%s383 + $0x32] sm:$0xff]
        %v790 = vld [vmem:[%s383 + $0x3a] sm:$0xff]
        %v791 = vld [vmem:[%s383 + $0x42] sm:$0xff]
        %v792 = vld [vmem:[%s383 + $0x4a] sm:$0xff]
        %v793 = vpack.c.bf16 %v784, %v784
        %v794 = vpack.c.bf16 %v785, %v785
        %v795 = vpack.c.bf16 %v786, %v786
        %v796 = vpack.c.bf16 %v787, %v787
        %v797 = vpack.c.bf16 %v788, %v788
        %v798 = vpack.c.bf16 %v789, %v789
        %v799 = vpack.c.bf16 %v790, %v790
        %v800 = vpack.c.bf16 %v791, %v791
        %v801 = vpack.c.bf16 %v792, %v792
        %802 = vst.msk [vmem:[#allocation2 + $0x10] sm:$0xf] %vm437, %v793
        %803 = vst.msk [vmem:[#allocation2 + $0x24] sm:$0xf] %vm437, %v794
        %804 = vst.msk [vmem:[#allocation2 + $0x38] sm:$0xf] %vm437, %v795
        %805 = vst.msk [vmem:[#allocation2 + $0x4c] sm:$0xf] %vm437, %v796
        %806 = vst.msk [vmem:[#allocation2 + $0x60] sm:$0xf] %vm437, %v797
        %807 = vst.msk [vmem:[#allocation2 + $0x74] sm:$0xf] %vm437, %v798
        %808 = vst.msk [vmem:[#allocation2 + $0x88] sm:$0xf] %vm437, %v799
        %809 = vst.msk [vmem:[#allocation2 + $0x9c] sm:$0xf] %vm437, %v800
        %810 = vst.msk [vmem:[#allocation2 + $0xb0] sm:$0xf] %vm437, %v801
        %v811 = vld [vmem:[#allocation2] sm:$0xff]
        %v812 = vld [vmem:[#allocation2 + $0x8] sm:$0xff]
        %v813 = vld [vmem:[#allocation2 + $0x10] sm:$0xf]
        %v814 = vld [vmem:[#allocation2 + $0x14] sm:$0xff]
        %v815 = vld [vmem:[#allocation2 + $0x1c] sm:$0xff]
        %v816 = vld [vmem:[#allocation2 + $0x24] sm:$0xf]
        %v817 = vld [vmem:[#allocation2 + $0x28] sm:$0xff]
        %v818 = vld [vmem:[#allocation2 + $0x30] sm:$0xff]
        %v819 = vld [vmem:[#allocation2 + $0x38] sm:$0xf]
        %v820 = vld [vmem:[#allocation2 + $0x3c] sm:$0xff]
        %v821 = vld [vmem:[#allocation2 + $0x44] sm:$0xff]
        %v822 = vld [vmem:[#allocation2 + $0x4c] sm:$0xf]
        %v823 = vld [vmem:[#allocation2 + $0x50] sm:$0xff]
        %v824 = vld [vmem:[#allocation2 + $0x58] sm:$0xff]
        %v825 = vld [vmem:[#allocation2 + $0x60] sm:$0xf]
        %v826 = vld [vmem:[#allocation2 + $0x64] sm:$0xff]
        %v827 = vld [vmem:[#allocation2 + $0x6c] sm:$0xff]
        %v828 = vld [vmem:[#allocation2 + $0x74] sm:$0xf]
        %v829 = vld [vmem:[#allocation2 + $0x78] sm:$0xff]
        %v830 = vld [vmem:[#allocation2 + $0x80] sm:$0xff]
        %v831 = vld [vmem:[#allocation2 + $0x88] sm:$0xf]
        %v832 = vld [vmem:[#allocation2 + $0x8c] sm:$0xff]
        %v833 = vld [vmem:[#allocation2 + $0x94] sm:$0xff]
        %v834 = vld [vmem:[#allocation2 + $0x9c] sm:$0xf]
        %v835 = vld [vmem:[#allocation2 + $0xa0] sm:$0xff]
        %v836 = vld [vmem:[#allocation2 + $0xa8] sm:$0xff]
        %v837 = vld [vmem:[#allocation2 + $0xb0] sm:$0xf]
        %v838 = vld [vmem:[%s1] sm:$0xf]
        %v839 = vld [vmem:[%s1 + $0x4] sm:$0xf]
        %v840 = vld [vmem:[%s1 + $0x8] sm:$0xf]
        %v841 = vld [vmem:[%s1 + $0xc] sm:$0xf]
        %v842 = vld [vmem:[%s1 + $0x10] sm:$0xf]
        %v843 = vld [vmem:[%s1 + $0x14] sm:$0xf]
        %v844 = vld [vmem:[%s1 + $0x18] sm:$0xf]
        %v845 = vld [vmem:[%s1 + $0x1c] sm:$0xf]
        %v846 = vld [vmem:[%s1 + $0x20] sm:$0xf]
        %v847 = vld [vmem:[%s1 + $0x24] sm:$0xf]
        %v848 = vld [vmem:[%s1 + $0x28] sm:$0xf]
        %v849 = vld [vmem:[%s1 + $0x2c] sm:$0xf]
        %v850 = vld [vmem:[%s1 + $0x30] sm:$0xf]
        %v851 = vld [vmem:[%s1 + $0x34] sm:$0xf]
        %v852 = vld [vmem:[%s1 + $0x38] sm:$0xf]
        %v853 = vld [vmem:[%s1 + $0x3c] sm:$0xf]
        %v854 = vld [vmem:[%s1 + $0x40] sm:$0xf]
        %v855 = vld [vmem:[%s1 + $0x44] sm:$0xf]
        %v856 = vld [vmem:[%s1 + $0x48] sm:$0xf]
        %v857 = vld [vmem:[%s1 + $0x4c] sm:$0xf]
        %v858 = vld [vmem:[%s1 + $0x50] sm:$0xf]
        %v859 = vld [vmem:[%s1 + $0x54] sm:$0xf]
        %v860 = vld [vmem:[%s1 + $0x58] sm:$0xf]
        %v861 = vld [vmem:[%s1 + $0x5c] sm:$0xf]
        %v862 = vld [vmem:[%s1 + $0x60] sm:$0xf]
        %v863 = vld [vmem:[%s1 + $0x64] sm:$0xf]
        %v864 = vld [vmem:[%s1 + $0x68] sm:$0xf]
        %v865 = vld [vmem:[%s1 + $0x6c] sm:$0xf]
        %v866 = vld [vmem:[%s1 + $0x70] sm:$0xf]
        %v867 = vld [vmem:[%s1 + $0x74] sm:$0xf]
        %v868 = vld [vmem:[%s1 + $0x78] sm:$0xf]
        %v869 = vld [vmem:[%s1 + $0x7c] sm:$0xf]
        %v870 = vld [vmem:[%s1 + $0x80] sm:$0xf]
        %v871 = vld [vmem:[%s1 + $0x84] sm:$0xf]
        %v872 = vld [vmem:[%s1 + $0x88] sm:$0xf]
        %v873 = vld [vmem:[%s1 + $0x8c] sm:$0xf]
        %v874 = vld [vmem:[%s1 + $0x90] sm:$0xf]
        %v875 = vld [vmem:[%s1 + $0x94] sm:$0xf]
        %v876 = vld [vmem:[%s1 + $0x98] sm:$0xf]
        %v877 = vld [vmem:[%s1 + $0x9c] sm:$0xf]
        %v878 = vld [vmem:[%s1 + $0xa0] sm:$0xf]
        %v879 = vld [vmem:[%s1 + $0xa4] sm:$0xf]
        %v880 = vld [vmem:[%s1 + $0xa8] sm:$0xf]
        %v881 = vld [vmem:[%s1 + $0xac] sm:$0xf]
        %v882 = vld [vmem:[%s1 + $0xb0] sm:$0xf]
        %v883 = vld [vmem:[%s1 + $0xb4] sm:$0xf]
        %v884 = vld [vmem:[%s1 + $0xb8] sm:$0xf]
        %v885 = vld [vmem:[%s1 + $0xbc] sm:$0xf]
        %v886 = vld [vmem:[%s1 + $0xc0] sm:$0xf]
        %v887 = vld [vmem:[%s1 + $0xc4] sm:$0xf]
        %v888 = vld [vmem:[%s1 + $0xc8] sm:$0xf]
        %v889 = vld [vmem:[%s1 + $0xcc] sm:$0xf]
        %v890 = vld [vmem:[%s1 + $0xd0] sm:$0xf]
        %v891 = vld [vmem:[%s1 + $0xd4] sm:$0xf]
        %v892 = vld [vmem:[%s1 + $0xd8] sm:$0xf]
        %v893 = vld [vmem:[%s1 + $0xdc] sm:$0xf]
        %v894 = vld [vmem:[%s1 + $0xe0] sm:$0xf]
        %v895 = vld [vmem:[%s1 + $0xe4] sm:$0xf]
        %v896 = vld [vmem:[%s1 + $0xe8] sm:$0xf]
        %v897 = vld [vmem:[%s1 + $0xec] sm:$0xf]
        %v898 = vld [vmem:[%s1 + $0xf0] sm:$0xf]
        %v899 = vld [vmem:[%s1 + $0xf4] sm:$0xf]
        %v900 = vld [vmem:[%s1 + $0xf8] sm:$0xf]
        %v901 = vld [vmem:[%s1 + $0xfc] sm:$0xf]
        %v902 = vld [vmem:[%s1 + $0x100] sm:$0xf]
        %v903 = vld [vmem:[%s1 + $0x104] sm:$0xf]
        %v904 = vld [vmem:[%s1 + $0x108] sm:$0xf]
        %v905 = vld [vmem:[%s1 + $0x10c] sm:$0xf]
        %v906 = vld [vmem:[%s1 + $0x110] sm:$0xf]
        %v907 = vld [vmem:[%s1 + $0x114] sm:$0xf]
        %v908 = vld [vmem:[%s1 + $0x118] sm:$0xf]
        %v909 = vld [vmem:[%s1 + $0x11c] sm:$0xf]
        %v910 = vld [vmem:[%s2] sm:$0x1]
        %v912 = vperm.slane %v910, 0
        %v941 = vunpack.c.l.b16 %v811
        %v942 = vunpack.c.h.b16 %v811
        %v943 = vunpack.c.l.b16 %v812
        %v944 = vunpack.c.h.b16 %v812
        %v945 = vunpack.c.l.b16 %v813
        %v946 = vunpack.c.l.b16 %v814
        %v947 = vunpack.c.h.b16 %v814
        %v948 = vunpack.c.l.b16 %v815
        %v949 = vunpack.c.h.b16 %v815
        %v950 = vunpack.c.l.b16 %v816
        %v951 = vunpack.c.l.b16 %v817
        %v952 = vunpack.c.h.b16 %v817
        %v953 = vunpack.c.l.b16 %v818
        %v954 = vunpack.c.h.b16 %v818
        %v955 = vunpack.c.l.b16 %v819
        %v956 = vunpack.c.l.b16 %v820
        %v957 = vunpack.c.h.b16 %v820
        %v958 = vunpack.c.l.b16 %v821
        %v959 = vunpack.c.h.b16 %v821
        %v960 = vunpack.c.l.b16 %v822
        %v961 = vunpack.c.l.b16 %v823
        %v962 = vunpack.c.h.b16 %v823
        %v963 = vunpack.c.l.b16 %v824
        %v964 = vunpack.c.h.b16 %v824
        %v965 = vunpack.c.l.b16 %v825
        %v966 = vunpack.c.l.b16 %v826
        %v967 = vunpack.c.h.b16 %v826
        %v968 = vunpack.c.l.b16 %v827
        %v969 = vunpack.c.h.b16 %v827
        %v970 = vunpack.c.l.b16 %v828
        %v971 = vunpack.c.l.b16 %v829
        %v972 = vunpack.c.h.b16 %v829
        %v973 = vunpack.c.l.b16 %v830
        %v974 = vunpack.c.h.b16 %v830
        %v975 = vunpack.c.l.b16 %v831
        %v976 = vunpack.c.l.b16 %v832
        %v977 = vunpack.c.h.b16 %v832
        %v978 = vunpack.c.l.b16 %v833
        %v979 = vunpack.c.h.b16 %v833
        %v980 = vunpack.c.l.b16 %v834
        %v981 = vunpack.c.l.b16 %v835
        %v982 = vunpack.c.h.b16 %v835
        %v983 = vunpack.c.l.b16 %v836
        %v984 = vunpack.c.h.b16 %v836
        %v985 = vunpack.c.l.b16 %v837
        %v986 = vpack.c.b16 %v946, %v941
        %v987 = vpack.c.b16 %v947, %v942
        %v988 = vpack.c.b16 %v948, %v943
        %v989 = vpack.c.b16 %v949, %v944
        %v990 = vpack.c.b16 %v950, %v945
        %v991 = vpack.c.b16 %v956, %v951
        %v992 = vpack.c.b16 %v957, %v952
        %v993 = vpack.c.b16 %v958, %v953
        %v994 = vpack.c.b16 %v959, %v954
        %v995 = vpack.c.b16 %v960, %v955
        %v996 = vpack.c.b16 %v966, %v961
        %v997 = vpack.c.b16 %v967, %v962
        %v998 = vpack.c.b16 %v968, %v963
        %v999 = vpack.c.b16 %v969, %v964
        %v1000 = vpack.c.b16 %v970, %v965
        %v1001 = vpack.c.b16 %v976, %v971
        %v1002 = vpack.c.b16 %v977, %v972
        %v1003 = vpack.c.b16 %v978, %v973
        %v1004 = vpack.c.b16 %v979, %v974
        %v1005 = vpack.c.b16 %v980, %v975
        %v1006 = vpack.c.b16 %v981, %v981
        %v1007 = vpack.c.b16 %v982, %v982
        %v1008 = vpack.c.b16 %v983, %v983
        %v1009 = vpack.c.b16 %v984, %v984
        %v1010 = vpack.c.b16 %v985, %v985
        %v1103 = vunpack.c.l.b16 %v838
        %v1104 = vunpack.c.l.b16 %v839
        %v1105 = vunpack.c.l.b16 %v840
        %v1106 = vunpack.c.l.b16 %v841
        %v1107 = vunpack.c.l.b16 %v842
        %v1108 = vunpack.c.l.b16 %v843
        %v1109 = vunpack.c.l.b16 %v844
        %v1110 = vunpack.c.l.b16 %v845
        %v1111 = vunpack.c.l.b16 %v846
        %v1112 = vunpack.c.l.b16 %v847
        %v1113 = vunpack.c.l.b16 %v848
        %v1114 = vunpack.c.l.b16 %v849
        %v1115 = vunpack.c.l.b16 %v850
        %v1116 = vunpack.c.l.b16 %v851
        %v1117 = vunpack.c.l.b16 %v852
        %v1118 = vunpack.c.l.b16 %v853
        %v1119 = vunpack.c.l.b16 %v854
        %v1120 = vunpack.c.l.b16 %v855
        %v1121 = vunpack.c.l.b16 %v856
        %v1122 = vunpack.c.l.b16 %v857
        %v1123 = vunpack.c.l.b16 %v858
        %v1124 = vunpack.c.l.b16 %v859
        %v1125 = vunpack.c.l.b16 %v860
        %v1126 = vunpack.c.l.b16 %v861
        %v1127 = vunpack.c.l.b16 %v862
        %v1128 = vunpack.c.l.b16 %v863
        %v1129 = vunpack.c.l.b16 %v864
        %v1130 = vunpack.c.l.b16 %v865
        %v1131 = vunpack.c.l.b16 %v866
        %v1132 = vunpack.c.l.b16 %v867
        %v1133 = vunpack.c.l.b16 %v868
        %v1134 = vunpack.c.l.b16 %v869
        %v1135 = vunpack.c.l.b16 %v870
        %v1136 = vunpack.c.l.b16 %v871
        %v1137 = vunpack.c.l.b16 %v872
        %v1138 = vunpack.c.l.b16 %v873
        %v1139 = vunpack.c.l.b16 %v874
        %v1140 = vunpack.c.l.b16 %v875
        %v1141 = vunpack.c.l.b16 %v876
        %v1142 = vunpack.c.l.b16 %v877
        %v1143 = vunpack.c.l.b16 %v878
        %v1144 = vunpack.c.l.b16 %v879
        %v1145 = vunpack.c.l.b16 %v880
        %v1146 = vunpack.c.l.b16 %v881
        %v1147 = vunpack.c.l.b16 %v882
        %v1148 = vunpack.c.l.b16 %v883
        %v1149 = vunpack.c.l.b16 %v884
        %v1150 = vunpack.c.l.b16 %v885
        %v1151 = vunpack.c.l.b16 %v886
        %v1152 = vunpack.c.l.b16 %v887
        %v1153 = vunpack.c.l.b16 %v888
        %v1154 = vunpack.c.l.b16 %v889
        %v1155 = vunpack.c.l.b16 %v890
        %v1156 = vunpack.c.l.b16 %v891
        %v1157 = vunpack.c.l.b16 %v892
        %v1158 = vunpack.c.l.b16 %v893
        %v1159 = vunpack.c.l.b16 %v894
        %v1160 = vunpack.c.l.b16 %v895
        %v1161 = vunpack.c.l.b16 %v896
        %v1162 = vunpack.c.l.b16 %v897
        %v1163 = vunpack.c.l.b16 %v898
        %v1164 = vunpack.c.l.b16 %v899
        %v1165 = vunpack.c.l.b16 %v900
        %v1166 = vunpack.c.l.b16 %v901
        %v1167 = vunpack.c.l.b16 %v902
        %v1168 = vunpack.c.l.b16 %v903
        %v1169 = vunpack.c.l.b16 %v904
        %v1170 = vunpack.c.l.b16 %v905
        %v1171 = vunpack.c.l.b16 %v906
        %v1172 = vunpack.c.l.b16 %v907
        %v1173 = vunpack.c.l.b16 %v908
        %v1174 = vunpack.c.l.b16 %v909
        %v1175 = vpack.c.b16 %v1104, %v1103
        %v1176 = vpack.c.b16 %v1106, %v1105
        %v1177 = vpack.c.b16 %v1108, %v1107
        %v1178 = vpack.c.b16 %v1110, %v1109
        %v1179 = vpack.c.b16 %v1112, %v1111
        %v1180 = vpack.c.b16 %v1114, %v1113
        %v1181 = vpack.c.b16 %v1116, %v1115
        %v1182 = vpack.c.b16 %v1118, %v1117
        %v1183 = vpack.c.b16 %v1120, %v1119
        %v1184 = vpack.c.b16 %v1122, %v1121
        %v1185 = vpack.c.b16 %v1124, %v1123
        %v1186 = vpack.c.b16 %v1126, %v1125
        %v1187 = vpack.c.b16 %v1128, %v1127
        %v1188 = vpack.c.b16 %v1130, %v1129
        %v1189 = vpack.c.b16 %v1132, %v1131
        %v1190 = vpack.c.b16 %v1134, %v1133
        %v1191 = vpack.c.b16 %v1136, %v1135
        %v1192 = vpack.c.b16 %v1138, %v1137
        %v1193 = vpack.c.b16 %v1140, %v1139
        %v1194 = vpack.c.b16 %v1142, %v1141
        %v1195 = vpack.c.b16 %v1144, %v1143
        %v1196 = vpack.c.b16 %v1146, %v1145
        %v1197 = vpack.c.b16 %v1148, %v1147
        %v1198 = vpack.c.b16 %v1150, %v1149
        %v1199 = vpack.c.b16 %v1152, %v1151
        %v1200 = vpack.c.b16 %v1154, %v1153
        %v1201 = vpack.c.b16 %v1156, %v1155
        %v1202 = vpack.c.b16 %v1158, %v1157
        %v1203 = vpack.c.b16 %v1160, %v1159
        %v1204 = vpack.c.b16 %v1162, %v1161
        %v1205 = vpack.c.b16 %v1164, %v1163
        %v1206 = vpack.c.b16 %v1166, %v1165
        %v1207 = vpack.c.b16 %v1168, %v1167
        %v1208 = vpack.c.b16 %v1170, %v1169
        %v1209 = vpack.c.b16 %v1172, %v1171
        %v1210 = vpack.c.b16 %v1174, %v1173
        %vm1247 = vcmask 523264
        %v1249 = vsel %vm1247, %v990, 0
        %v1252 = vsel %vm1247, %v995, 0
        %v1255 = vsel %vm1247, %v1000, 0
        %v1258 = vsel %vm1247, %v1005, 0
        %v1261 = vsel %vm1247, %v1010, 0
        %1263 = vmatpush.bf16.msra.mxu0 %v1182
        %1264 = vmatpush.bf16.msra.mxu0 %v1181
        %1265 = vmatpush.bf16.msra.mxu0 %v1180
        %1266 = vmatpush.bf16.msra.mxu0 %v1179
        %1267 = vmatpush.bf16.msra.mxu0 %v1178
        %1268 = vmatpush.bf16.msra.mxu0 %v1177
        %1269 = vmatpush.bf16.msra.mxu0 %v1176
        %1270 = vmatpush.bf16.msra.mxu0 %v1175
        %1271 = vmatmul.bf16.gmra.mxu0 %v986
        %v1272 = vpop.f32.mrf.mxu0
        %v1273 = vadd.f32 %v912, %v1272
        %v1274 = vpop.f32.mrf.mxu0
        %v1275 = vadd.f32 %v912, %v1274
        %1276 = vmatmul.bf16.gmra.mxu0 %v991
        %v1277 = vpop.f32.mrf.mxu0
        %v1278 = vadd.f32 %v912, %v1277
        %v1279 = vpop.f32.mrf.mxu0
        %v1280 = vadd.f32 %v912, %v1279
        %1281 = vmatmul.bf16.gmra.mxu0 %v996
        %v1282 = vpop.f32.mrf.mxu0
        %v1283 = vadd.f32 %v912, %v1282
        %v1284 = vpop.f32.mrf.mxu0
        %v1285 = vadd.f32 %v912, %v1284
        %1286 = vmatmul.bf16.gmra.mxu0 %v1001
        %v1287 = vpop.f32.mrf.mxu0
        %v1288 = vadd.f32 %v912, %v1287
        %v1289 = vpop.f32.mrf.mxu0
        %v1290 = vadd.f32 %v912, %v1289
        %1291 = vmatmul.bf16.gmra.mxu0 %v1006
        %v1292 = vpop.f32.mrf.mxu0
        %v1293 = vadd.f32 %v912, %v1292
        %v1294 = vpop.f32.mrf.mxu0
        %1295 = vdwg.mxu0
        %1296 = vmatpush.bf16.msra.mxu0 %v1190
        %1297 = vmatpush.bf16.msra.mxu0 %v1189
        %1298 = vmatpush.bf16.msra.mxu0 %v1188
        %1299 = vmatpush.bf16.msra.mxu0 %v1187
        %1300 = vmatpush.bf16.msra.mxu0 %v1186
        %1301 = vmatpush.bf16.msra.mxu0 %v1185
        %1302 = vmatpush.bf16.msra.mxu0 %v1184
        %1303 = vmatpush.bf16.msra.mxu0 %v1183
        %1304 = vmatmul.bf16.gmra.mxu0 %v987
        %v1305 = vpop.f32.mrf.mxu0
        %v1306 = vadd.f32 %v1273, %v1305
        %v1307 = vpop.f32.mrf.mxu0
        %v1308 = vadd.f32 %v1275, %v1307
        %1309 = vmatmul.bf16.gmra.mxu0 %v992
        %v1310 = vpop.f32.mrf.mxu0
        %v1311 = vadd.f32 %v1278, %v1310
        %v1312 = vpop.f32.mrf.mxu0
        %v1313 = vadd.f32 %v1280, %v1312
        %1314 = vmatmul.bf16.gmra.mxu0 %v997
        %v1315 = vpop.f32.mrf.mxu0
        %v1316 = vadd.f32 %v1283, %v1315
        %v1317 = vpop.f32.mrf.mxu0
        %v1318 = vadd.f32 %v1285, %v1317
        %1319 = vmatmul.bf16.gmra.mxu0 %v1002
        %v1320 = vpop.f32.mrf.mxu0
        %v1321 = vadd.f32 %v1288, %v1320
        %v1322 = vpop.f32.mrf.mxu0
        %v1323 = vadd.f32 %v1290, %v1322
        %1324 = vmatmul.bf16.gmra.mxu0 %v1007
        %v1325 = vpop.f32.mrf.mxu0
        %v1326 = vadd.f32 %v1293, %v1325
        %v1327 = vpop.f32.mrf.mxu0
        %1328 = vdwg.mxu0
        %1329 = vmatpush.bf16.msra.mxu0 %v1198
        %1330 = vmatpush.bf16.msra.mxu0 %v1197
        %1331 = vmatpush.bf16.msra.mxu0 %v1196
        %1332 = vmatpush.bf16.msra.mxu0 %v1195
        %1333 = vmatpush.bf16.msra.mxu0 %v1194
        %1334 = vmatpush.bf16.msra.mxu0 %v1193
        %1335 = vmatpush.bf16.msra.mxu0 %v1192
        %1336 = vmatpush.bf16.msra.mxu0 %v1191
        %1337 = vmatmul.bf16.gmra.mxu0 %v988
        %v1338 = vpop.f32.mrf.mxu0
        %v1339 = vadd.f32 %v1306, %v1338
        %v1340 = vpop.f32.mrf.mxu0
        %v1341 = vadd.f32 %v1308, %v1340
        %1342 = vmatmul.bf16.gmra.mxu0 %v993
        %v1343 = vpop.f32.mrf.mxu0
        %v1344 = vadd.f32 %v1311, %v1343
        %v1345 = vpop.f32.mrf.mxu0
        %v1346 = vadd.f32 %v1313, %v1345
        %1347 = vmatmul.bf16.gmra.mxu0 %v998
        %v1348 = vpop.f32.mrf.mxu0
        %v1349 = vadd.f32 %v1316, %v1348
        %v1350 = vpop.f32.mrf.mxu0
        %v1351 = vadd.f32 %v1318, %v1350
        %1352 = vmatmul.bf16.gmra.mxu0 %v1003
        %v1353 = vpop.f32.mrf.mxu0
        %v1354 = vadd.f32 %v1321, %v1353
        %v1355 = vpop.f32.mrf.mxu0
        %v1356 = vadd.f32 %v1323, %v1355
        %1357 = vmatmul.bf16.gmra.mxu0 %v1008
        %v1358 = vpop.f32.mrf.mxu0
        %v1359 = vadd.f32 %v1326, %v1358
        %v1360 = vpop.f32.mrf.mxu0
        %1361 = vdwg.mxu0
        %1362 = vmatpush.bf16.msra.mxu0 %v1206
        %1363 = vmatpush.bf16.msra.mxu0 %v1205
        %1364 = vmatpush.bf16.msra.mxu0 %v1204
        %1365 = vmatpush.bf16.msra.mxu0 %v1203
        %1366 = vmatpush.bf16.msra.mxu0 %v1202
        %1367 = vmatpush.bf16.msra.mxu0 %v1201
        %1368 = vmatpush.bf16.msra.mxu0 %v1200
        %1369 = vmatpush.bf16.msra.mxu0 %v1199
        %1370 = vmatmul.bf16.gmra.mxu0 %v989
        %v1371 = vpop.f32.mrf.mxu0
        %v1372 = vadd.f32 %v1339, %v1371
        %v1373 = vpop.f32.mrf.mxu0
        %v1374 = vadd.f32 %v1341, %v1373
        %1375 = vmatmul.bf16.gmra.mxu0 %v994
        %v1376 = vpop.f32.mrf.mxu0
        %v1377 = vadd.f32 %v1344, %v1376
        %v1378 = vpop.f32.mrf.mxu0
        %v1379 = vadd.f32 %v1346, %v1378
        %1380 = vmatmul.bf16.gmra.mxu0 %v999
        %v1381 = vpop.f32.mrf.mxu0
        %v1382 = vadd.f32 %v1349, %v1381
        %v1383 = vpop.f32.mrf.mxu0
        %v1384 = vadd.f32 %v1351, %v1383
        %1385 = vmatmul.bf16.gmra.mxu0 %v1004
        %v1386 = vpop.f32.mrf.mxu0
        %v1387 = vadd.f32 %v1354, %v1386
        %v1388 = vpop.f32.mrf.mxu0
        %v1389 = vadd.f32 %v1356, %v1388
        %1390 = vmatmul.bf16.gmra.mxu0 %v1009
        %v1391 = vpop.f32.mrf.mxu0
        %v1392 = vadd.f32 %v1359, %v1391
        %v1393 = vpop.f32.mrf.mxu0
        %1394 = vdwg.mxu0
        %1395 = vmatpush.bf16.msra.mxu0 0
        %1396 = vmatpush.bf16.msra.mxu0 0
        %1397 = vmatpush.bf16.msra.mxu0 0
        %1398 = vmatpush.bf16.msra.mxu0 0
        %1399 = vmatpush.bf16.msra.mxu0 %v1210
        %1400 = vmatpush.bf16.msra.mxu0 %v1209
        %1401 = vmatpush.bf16.msra.mxu0 %v1208
        %1402 = vmatpush.bf16.msra.mxu0 %v1207
        %1403 = vmatmul.bf16.gmra.mxu0 %v1249
        %v1404 = vpop.f32.mrf.mxu0
        %v1405 = vadd.f32 %v1372, %v1404
        %v1406 = vpop.f32.mrf.mxu0
        %v1407 = vadd.f32 %v1374, %v1406
        %1408 = vmatmul.bf16.gmra.mxu0 %v1252
        %v1409 = vpop.f32.mrf.mxu0
        %v1410 = vadd.f32 %v1377, %v1409
        %v1411 = vpop.f32.mrf.mxu0
        %v1412 = vadd.f32 %v1379, %v1411
        %1413 = vmatmul.bf16.gmra.mxu0 %v1255
        %v1414 = vpop.f32.mrf.mxu0
        %v1415 = vadd.f32 %v1382, %v1414
        %v1416 = vpop.f32.mrf.mxu0
        %v1417 = vadd.f32 %v1384, %v1416
        %1418 = vmatmul.bf16.gmra.mxu0 %v1258
        %v1419 = vpop.f32.mrf.mxu0
        %v1420 = vadd.f32 %v1387, %v1419
        %v1421 = vpop.f32.mrf.mxu0
        %v1422 = vadd.f32 %v1389, %v1421
        %1423 = vmatmul.bf16.gmra.mxu0 %v1261
        %v1424 = vpop.f32.mrf.mxu0
        %v1425 = vadd.f32 %v1392, %v1424
        %v1426 = vpop.f32.mrf.mxu0
        %1427 = vdwg.mxu0
        %v1428 = vmax.f32 %v1405, 0.0
        %v1429 = vmax.f32 %v1407, 0.0
        %v1430 = vmax.f32 %v1410, 0.0
        %v1431 = vmax.f32 %v1412, 0.0
        %v1432 = vmax.f32 %v1415, 0.0
        %v1433 = vmax.f32 %v1417, 0.0
        %v1434 = vmax.f32 %v1420, 0.0
        %v1435 = vmax.f32 %v1422, 0.0
        %v1436 = vmax.f32 %v1425, 0.0
        %1437 = vst [vmem:[%s416] sm:$0xff] %v1428
        %1438 = vst [vmem:[%s416 + $0x8] sm:$0xff] %v1429
        %1439 = vst [vmem:[%s416 + $0x10] sm:$0xff] %v1430
        %1440 = vst [vmem:[%s416 + $0x18] sm:$0xff] %v1431
        %1441 = vst [vmem:[%s416 + $0x20] sm:$0xff] %v1432
        %1442 = vst [vmem:[%s416 + $0x28] sm:$0xff] %v1433
        %1443 = vst [vmem:[%s416 + $0x30] sm:$0xff] %v1434
        %1444 = vst [vmem:[%s416 + $0x38] sm:$0xff] %v1435
        %1445 = vst [vmem:[%s416 + $0x40] sm:$0xff] %v1436
        %s1446 = smul.u32 9, %s19
        %p1447 = scmp.lt.s32.totalorder %s18, 1
        %s1448 = scalar_select %p1447, %s18, 1
        %p1449 = scmp.lt.s32.totalorder %s1446, 8
        %s1450 = scalar_select %p1449, %s1446, 8
        %s1451 = smul.addr %s1448, 9
        %s1452 = sadd.s32 %s1450, %s1451
        %s1453 = smul.addr %s1452, 8
        %s1454 = scalar_lea.vmem %s3, %s1453
        // Predicated region
        $region71: #{_lambda_.3} parent=65 // pred_check
          %p1455 = pneg %p114
        $region72: #{_lambda_.3} parent=65 // pred_check_branch
          %1457 = sbr.rel (%p1455) target = $region74
        $region73: #{_lambda_.3} parent=65 // pred_region
          %s1458 = smul.u32 9, %s19
        $region74: #{_lambda_.3} parent=65 // pred_fallthru
          _
      $region66: #{_lambda_.3} parent=5 // pred_fallthru
        _
      %p1459 = scmp.le.s32.totalorder 2, %s9
      // Predicated region
      $region75: #{_lambda_.3} parent=5 // pred_check
        %p1460 = pneg %p1459
      $region76: #{_lambda_.3} parent=5 // pred_check_branch
        %1462 = sbr.rel (%p1460) target = $region78
      $region77: #{_lambda_.3} parent=5 // pred_region
        %s1463 = ssub.s32 %s9, 2
        // Predicated region
        $region79: #{_lambda_.3} parent=77 // pred_check
          %p1464 = pneg %p120
        $region80: #{_lambda_.3} parent=77 // pred_check_branch
          %1466 = sbr.rel (%p1464) target = $region82
        $region81: #{_lambda_.3} parent=77 // pred_region
          %s1467 = smul.u32 9, %s21
          %p1468 = scmp.lt.s32.totalorder %s20, 1
          %s1469 = scalar_select %p1468, %s20, 1
          %p1470 = scmp.lt.s32.totalorder %s1467, 8
          %s1471 = scalar_select %p1470, %s1467, 8
          %s1472 = smul.addr %s1469, 9
          %s1473 = sadd.s32 %s1471, %s1472
          %s1474 = smul.addr %s1473, 8
          %s1475 = scalar_lea.vmem %s3, %s1474
        $region82: #{_lambda_.3} parent=77 // pred_fallthru
          _
      $region78: #{_lambda_.3} parent=5 // pred_fallthru
        _
    $region6: #{_lambda_.3} parent=1 // loop_footer
      %s13 = sadd.s32 1, %s9
    $region7: #{_lambda_.3} parent=1 // loop_footer_branch
      %8 = sbr.rel target = $region3
    $region8: #{_lambda_.3} parent=1 // loop_exit
      _

// kernel: _lambda_.5
$region0: #{_lambda_.5}
  #allocation0 [shape = 'u32[]', space=smem, size = 0x4, offset = 0x4, fixed_abs, tag = 'smem constant byte address 0x4 - core index']
  #allocation1 [shape = 'u32[72,128]{1,0:T(1,128)}', space=vmem, size = 0x9000, scoped, tag = 'internal scratch']
  #allocation2 [shape = 'bf16[80,1152]{1,0:T(8,128)(2,1)}', space=vmem, size = 0x2d000, scoped, tag = 'scratch operand']
  %s0 = inlined_call_operand.vmem [shape: f32[1,2,110,128], index: 0, kind: input, shape index: {}]
  %s1 = inlined_call_operand.vmem [shape: bf16[1152,128], index: 1, kind: input, shape index: {}]
  %s2 = inlined_call_operand.vmem [shape: f32[1,128], index: 2, kind: input, shape index: {}]
  %s3 = inlined_call_operand.vmem [shape: f32[2,80,128], index: 3, kind: input, shape index: {}]
  %s4 = inlined_call_operand.vmem [shape: f32[2,80,128], index: 4, kind: output, shape index: {}]
  %s5 = sld [smem:[#allocation0]]
  $region49: #{_lambda_.5} parent=0
    _
  %s7 = ssub.s32 1, %s5
  %s8 = scalar_select 0, %s7, %s5
  loop: start=0, step=1, limit=4
  $region2: #{_lambda_.5} parent=0 // loop_pre_header
    _
  $region3: #{_lambda_.5} parent=0 // loop_header
    %s10 = sphi 0, %s14
    %p11 = scmp.ge.s32.totalorder %s10, 4
    %s17 = sphi 0, %s29
    %s18 = sphi 0, %s25
    %s19 = sphi 0, %s17
    %s20 = sphi 0, %s18
    %s21 = sphi 0, %s19
    %s22 = sphi 0, %s20
    %s32 = sphi 0, %s34
    %s35 = sphi 0, %s32
    %s36 = sphi 0, %s35
    %s52 = sphi 0, %s36
    %s56 = sphi 0, %s56
    %s58 = sphi 0, %s56
    %s59 = sphi 0, %s58
    %s73 = sphi 0, %s59
    %s77 = sphi 0, %s77
    %s79 = sphi 0, %s77
    %s80 = sphi 0, %s79
    %s94 = sphi 0, %s80
    %s102 = sphi 0, %s104
    %s105 = sphi 0, %s102
    %s106 = sphi 0, %s105
    %s122 = sphi 0, %s106
    %s130 = sphi 0, %s132
    %s133 = sphi 0, %s130
    %s134 = sphi 0, %s133
    %s150 = sphi 0, %s134
  $region4: #{_lambda_.5} parent=0 // loop_header_branch
    %13 = sbr.rel (%p11) target = $region8
  $region5: #{_lambda_.5} parent=0 // loop_body
    %s15 = ssub.s32 %s10, 1
    %s16 = ssub.s32 %s10, 2
    %s23 = sadd.s32 1, %s18
    %p24 = scmp.ge.s32.totalorder %s23, 1
    %s25 = scalar_select %p24, 0, %s23
    %s26 = sadd.s32 1, %s17
    %s27 = scalar_select %p24, %s26, %s17
    %p28 = scmp.ge.s32.totalorder %s27, 2
    %s29 = scalar_select %p28, 0, %s27
    %s30 = ssub.s32 %s17, %s29
    %p31 = scmp.eq.s32.totalorder %s30, 0
    %s33 = sadd.s32 %s32, 1
    %s34 = scalar_select %p31, %s32, %s33
    %p37 = pneg %p31
    %p38 = scmp.eq.s32.totalorder %s10, 1
    %p39 = por %p37, %p38
    %p40 = scmp.ne.s32.totalorder %s32, %s35
    %p41 = scmp.eq.s32.totalorder %s10, 0
    %p42 = por %p40, %p41
    %p43 = scmp.ne.s32.totalorder %s32, %s35
    %p44 = scmp.eq.s32.totalorder %s15, 1
    %p45 = por %p43, %p44
    %p46 = scmp.ne.s32.totalorder %s35, %s36
    %p47 = scmp.eq.s32.totalorder %s15, 0
    %p48 = por %p46, %p47
    %p49 = scmp.ne.s32.totalorder %s35, %s36
    %p50 = scmp.eq.s32.totalorder %s16, 1
    %p51 = por %p49, %p50
    %p53 = scmp.ne.s32.totalorder %s36, %s52
    %p54 = scmp.eq.s32.totalorder %s16, 0
    %p55 = por %p53, %p54
    %s57 = sadd.s32 %s56, 1
    %p60 = scmp.eq.s32.totalorder %s10, 1
    %p61 = scmp.ne.s32.totalorder %s56, %s58
    %p62 = scmp.eq.s32.totalorder %s10, 0
    %p63 = por %p61, %p62
    %p64 = scmp.ne.s32.totalorder %s56, %s58
    %p65 = scmp.eq.s32.totalorder %s15, 1
    %p66 = por %p64, %p65
    %p67 = scmp.ne.s32.totalorder %s58, %s59
    %p68 = scmp.eq.s32.totalorder %s15, 0
    %p69 = por %p67, %p68
    %p70 = scmp.ne.s32.totalorder %s58, %s59
    %p71 = scmp.eq.s32.totalorder %s16, 1
    %p72 = por %p70, %p71
    %p74 = scmp.ne.s32.totalorder %s59, %s73
    %p75 = scmp.eq.s32.totalorder %s16, 0
    %p76 = por %p74, %p75
    %s78 = sadd.s32 %s77, 1
    %p81 = scmp.eq.s32.totalorder %s10, 1
    %p82 = scmp.ne.s32.totalorder %s77, %s79
    %p83 = scmp.eq.s32.totalorder %s10, 0
    %p84 = por %p82, %p83
    %p85 = scmp.ne.s32.totalorder %s77, %s79
    %p86 = scmp.eq.s32.totalorder %s15, 1
    %p87 = por %p85, %p86
    %p88 = scmp.ne.s32.totalorder %s79, %s80
    %p89 = scmp.eq.s32.totalorder %s15, 0
    %p90 = por %p88, %p89
    %p91 = scmp.ne.s32.totalorder %s79, %s80
    %p92 = scmp.eq.s32.totalorder %s16, 1
    %p93 = por %p91, %p92
    %p95 = scmp.ne.s32.totalorder %s80, %s94
    %p96 = scmp.eq.s32.totalorder %s16, 0
    %p97 = por %p95, %p96
    %s98 = ssub.s32 %s17, %s29
    %s99 = ssub.s32 %s18, %s25
    %s100 = sor.u32 %s98, %s99
    %p101 = scmp.eq.s32.totalorder %s100, 0
    %s103 = sadd.s32 %s102, 1
    %s104 = scalar_select %p101, %s102, %s103
    %p107 = pneg %p101
    %p108 = scmp.eq.s32.totalorder %s10, 1
    %p109 = por %p107, %p108
    %p110 = scmp.ne.s32.totalorder %s102, %s105
    %p111 = scmp.eq.s32.totalorder %s10, 0
    %p112 = por %p110, %p111
    %p113 = scmp.ne.s32.totalorder %s102, %s105
    %p114 = scmp.eq.s32.totalorder %s15, 1
    %p115 = por %p113, %p114
    %p116 = scmp.ne.s32.totalorder %s105, %s106
    %p117 = scmp.eq.s32.totalorder %s15, 0
    %p118 = por %p116, %p117
    %p119 = scmp.ne.s32.totalorder %s105, %s106
    %p120 = scmp.eq.s32.totalorder %s16, 1
    %p121 = por %p119, %p120
    %p123 = scmp.ne.s32.totalorder %s106, %s122
    %p124 = scmp.eq.s32.totalorder %s16, 0
    %p125 = por %p123, %p124
    %s126 = ssub.s32 %s17, %s29
    %s127 = ssub.s32 %s18, %s25
    %s128 = sor.u32 %s126, %s127
    %p129 = scmp.eq.s32.totalorder %s128, 0
    %s131 = sadd.s32 %s130, 1
    %s132 = scalar_select %p129, %s130, %s131
    %p135 = pneg %p129
    %p136 = scmp.eq.s32.totalorder %s10, 1
    %p137 = por %p135, %p136
    %p138 = scmp.ne.s32.totalorder %s130, %s133
    %p139 = scmp.eq.s32.totalorder %s10, 0
    %p140 = por %p138, %p139
    %p141 = scmp.ne.s32.totalorder %s130, %s133
    %p142 = scmp.eq.s32.totalorder %s15, 1
    %p143 = por %p141, %p142
    %p144 = scmp.ne.s32.totalorder %s133, %s134
    %p145 = scmp.eq.s32.totalorder %s15, 0
    %p146 = por %p144, %p145
    %p147 = scmp.ne.s32.totalorder %s133, %s134
    %p148 = scmp.eq.s32.totalorder %s16, 1
    %p149 = por %p147, %p148
    %p151 = scmp.ne.s32.totalorder %s134, %s150
    %p152 = scmp.eq.s32.totalorder %s16, 0
    %p153 = por %p151, %p152
    %p154 = scmp.le.s32.totalorder 1, %s10
    %p155 = scmp.lt.s32.totalorder %s10, 3
    %p156 = pnand %p154, %p155
    %p157 = pneg %p156
    // Predicated region
    $region9: #{_lambda_.5} parent=5 // pred_check
      _
    $region10: #{_lambda_.5} parent=5 // pred_check_branch
      %159 = sbr.rel (%p156) target = $region12
    $region11: #{_lambda_.5} parent=5 // pred_region
      %s160 = ssub.s32 %s10, 1
      // Predicated region
      $region13: #{_lambda_.5} parent=11 // pred_check
        %p161 = pneg %p69
      $region14: #{_lambda_.5} parent=11 // pred_check_branch
        %163 = sbr.rel (%p161) target = $region16
      $region15: #{_lambda_.5} parent=11 // pred_region
        _
      $region16: #{_lambda_.5} parent=11 // pred_fallthru
        _
      // Predicated region
      $region17: #{_lambda_.5} parent=11 // pred_check
        %p164 = pneg %p90
      $region18: #{_lambda_.5} parent=11 // pred_check_branch
        %166 = sbr.rel (%p164) target = $region20
      $region19: #{_lambda_.5} parent=11 // pred_region
        _
      $region20: #{_lambda_.5} parent=11 // pred_fallthru
        _
    $region12: #{_lambda_.5} parent=5 // pred_fallthru
      _
    %p167 = scmp.lt.s32.totalorder %s10, 2
    // Predicated region
    $region21: #{_lambda_.5} parent=5 // pred_check
      %p168 = pneg %p167
    $region22: #{_lambda_.5} parent=5 // pred_check_branch
      %170 = sbr.rel (%p168) target = $region24
    $region23: #{_lambda_.5} parent=5 // pred_region
      // Predicated region
      $region25: #{_lambda_.5} parent=23 // pred_check
        %p171 = pneg %p42
      $region26: #{_lambda_.5} parent=23 // pred_check_branch
        %173 = sbr.rel (%p171) target = $region28
      $region27: #{_lambda_.5} parent=23 // pred_region
        %p174 = scmp.lt.s32.totalorder %s17, 1
        %s175 = scalar_select %p174, %s17, 1
        %s176 = smul.addr %s175, 14
        %s177 = smul.addr %s176, 8
        %s178 = scalar_lea.vmem %s0, %s177
      $region28: #{_lambda_.5} parent=23 // pred_fallthru
        _
      // Predicated region
      $region29: #{_lambda_.5} parent=23 // pred_check
        %p179 = pneg %p112
      $region30: #{_lambda_.5} parent=23 // pred_check_branch
        %181 = sbr.rel (%p179) target = $region32
      $region31: #{_lambda_.5} parent=23 // pred_region
        %s182 = smul.u32 10, %s18
        %p183 = scmp.lt.s32.totalorder %s17, 1
        %s184 = scalar_select %p183, %s17, 1
        %p185 = scmp.lt.s32.totalorder %s182, 9
        %s186 = scalar_select %p185, %s182, 9
        %s187 = smul.addr %s184, 10
        %s188 = sadd.s32 %s186, %s187
        %s189 = smul.addr %s188, 8
        %s190 = scalar_lea.vmem %s3, %s189
        %s191 = smul.u32 10, %s18
      $region32: #{_lambda_.5} parent=23 // pred_fallthru
        _
    $region24: #{_lambda_.5} parent=5 // pred_fallthru
      _
    %p192 = scmp.le.s32.totalorder 1, %s10
    %p193 = scmp.lt.s32.totalorder %s10, 3
    %p194 = pnand %p192, %p193
    %p195 = pneg %p194
    // Predicated region
    $region33: #{_lambda_.5} parent=5 // pred_check
      _
    $region34: #{_lambda_.5} parent=5 // pred_check_branch
      %197 = sbr.rel (%p194) target = $region36
    $region35: #{_lambda_.5} parent=5 // pred_region
      %s198 = ssub.s32 %s10, 1
      %p199 = scmp.lt.s32.totalorder %s19, 1
      %s200 = scalar_select %p199, %s19, 1
      %s201 = smul.addr %s200, 14
      %s202 = smul.addr %s201, 8
      %s203 = scalar_lea.vmem %s0, %s202
      %p204 = pneg %p48
      %p205 = pneg %p45
      %p206 = pneg %p69
      %p207 = pneg %p66
      %p208 = pneg %p90
      %p209 = pneg %p87
      %s210 = smul.u32 10, %s20
      %p211 = scmp.lt.s32.totalorder %s19, 1
      %s212 = scalar_select %p211, %s19, 1
      %p213 = scmp.lt.s32.totalorder %s210, 9
      %s214 = scalar_select %p213, %s210, 9
      %s215 = smul.addr %s212, 10
      %s216 = sadd.s32 %s214, %s215
      %s217 = smul.addr %s216, 8
      %s218 = scalar_lea.vmem %s3, %s217
      %p219 = pneg %p118
      %p220 = pneg %p115
      %p221 = pneg %p146
      %p222 = pneg %p143
      %s223 = smul.u32 10, %s20
      %p224 = scmp.lt.s32.totalorder %s19, 1
      %s225 = scalar_select %p224, %s19, 1
      %p226 = scmp.lt.s32.totalorder %s223, 9
      %s227 = scalar_select %p226, %s223, 9
      %s228 = smul.addr %s225, 10
      %s229 = sadd.s32 %s227, %s228
      %s230 = smul.addr %s229, 8
      %s231 = scalar_lea.vmem %s4, %s230
      %p232 = scmp.lt.s32.totalorder %s19, 1
      %s233 = scalar_select %p232, %s19, 1
      %s234 = smul.addr %s233, 14
      %s235 = smul.addr %s234, 8
      %s236 = scalar_lea.vmem %s0, %s235
      %s237 = smul.u32 10, %s20
      %p238 = scmp.lt.s32.totalorder %s19, 1
      %s239 = scalar_select %p238, %s19, 1
      %p240 = scmp.lt.s32.totalorder %s237, 9
      %s241 = scalar_select %p240, %s237, 9
      %s242 = smul.addr %s239, 10
      %s243 = sadd.s32 %s241, %s242
      %s244 = smul.addr %s243, 8
      %s245 = scalar_lea.vmem %s3, %s244
      %s246 = smul.u32 10, %s20
      %s247 = smul.u32 10, %s20
      %p248 = scmp.lt.s32.totalorder %s19, 1
      %s249 = scalar_select %p248, %s19, 1
      %p250 = scmp.lt.s32.totalorder %s247, 9
      %s251 = scalar_select %p250, %s247, 9
      %s252 = smul.addr %s249, 10
      %s253 = sadd.s32 %s251, %s252
      %s254 = smul.addr %s253, 8
      %s255 = scalar_lea.vmem %s4, %s254
      %s256 = smul.u32 10, %s20
      %v257 = vld [vmem:[%s236] sm:$0xff]
      %v258 = vld [vmem:[%s236 + $0x8] sm:$0xff]
      %v259 = vld [vmem:[%s236 + $0x10] sm:$0xff]
      %v260 = vld [vmem:[%s236 + $0x18] sm:$0xff]
      %v261 = vld [vmem:[%s236 + $0x20] sm:$0xff]
      %v262 = vld [vmem:[%s236 + $0x28] sm:$0xff]
      %v263 = vld [vmem:[%s236 + $0x30] sm:$0xff]
      %v264 = vld [vmem:[%s236 + $0x38] sm:$0xff]
      %v265 = vld [vmem:[%s236 + $0x40] sm:$0xff]
      %v266 = vld [vmem:[%s236 + $0x48] sm:$0xff]
      %v267 = vpack.c.bf16 %v257, %v257
      %v268 = vpack.c.bf16 %v258, %v258
      %v269 = vpack.c.bf16 %v259, %v259
      %v270 = vpack.c.bf16 %v260, %v260
      %v271 = vpack.c.bf16 %v261, %v261
      %v272 = vpack.c.bf16 %v262, %v262
      %v273 = vpack.c.bf16 %v263, %v263
      %v274 = vpack.c.bf16 %v264, %v264
      %v275 = vpack.c.bf16 %v265, %v265
      %v276 = vpack.c.bf16 %v266, %v266
      %277 = vst [vmem:[#allocation2] sm:$0xf] %v267
      %278 = vst [vmem:[#allocation2 + $0x24] sm:$0xf] %v268
      %279 = vst [vmem:[#allocation2 + $0x48] sm:$0xf] %v269
      %280 = vst [vmem:[#allocation2 + $0x6c] sm:$0xf] %v270
      %281 = vst [vmem:[#allocation2 + $0x90] sm:$0xf] %v271
      %282 = vst [vmem:[#allocation2 + $0xb4] sm:$0xf] %v272
      %283 = vst [vmem:[#allocation2 + $0xd8] sm:$0xf] %v273
      %284 = vst [vmem:[#allocation2 + $0xfc] sm:$0xf] %v274
      %285 = vst [vmem:[#allocation2 + $0x120] sm:$0xf] %v275
      %286 = vst [vmem:[#allocation2 + $0x144] sm:$0xf] %v276
      %v287 = vld [vmem:[%s236 + $0x1] sm:$0xff]
      %v288 = vld [vmem:[%s236 + $0x9] sm:$0xff]
      %v289 = vld [vmem:[%s236 + $0x11] sm:$0xff]
      %v290 = vld [vmem:[%s236 + $0x19] sm:$0xff]
      %v291 = vld [vmem:[%s236 + $0x21] sm:$0xff]
      %v292 = vld [vmem:[%s236 + $0x29] sm:$0xff]
      %v293 = vld [vmem:[%s236 + $0x31] sm:$0xff]
      %v294 = vld [vmem:[%s236 + $0x39] sm:$0xff]
      %v295 = vld [vmem:[%s236 + $0x41] sm:$0xff]
      %v296 = vld [vmem:[%s236 + $0x49] sm:$0xff]
      %v297 = vpack.c.bf16 %v287, %v287
      %v298 = vpack.c.bf16 %v288, %v288
      %v299 = vpack.c.bf16 %v289, %v289
      %v300 = vpack.c.bf16 %v290, %v290
      %v301 = vpack.c.bf16 %v291, %v291
      %v302 = vpack.c.bf16 %v292, %v292
      %v303 = vpack.c.bf16 %v293, %v293
      %v304 = vpack.c.bf16 %v294, %v294
      %v305 = vpack.c.bf16 %v295, %v295
      %v306 = vpack.c.bf16 %v296, %v296
      %307 = vst [vmem:[#allocation2 + $0x4] sm:$0xf] %v297
      %308 = vst [vmem:[#allocation2 + $0x28] sm:$0xf] %v298
      %309 = vst [vmem:[#allocation2 + $0x4c] sm:$0xf] %v299
      %310 = vst [vmem:[#allocation2 + $0x70] sm:$0xf] %v300
      %311 = vst [vmem:[#allocation2 + $0x94] sm:$0xf] %v301
      %312 = vst [vmem:[#allocation2 + $0xb8] sm:$0xf] %v302
      %313 = vst [vmem:[#allocation2 + $0xdc] sm:$0xf] %v303
      %314 = vst [vmem:[#allocation2 + $0x100] sm:$0xf] %v304
      %315 = vst [vmem:[#allocation2 + $0x124] sm:$0xf] %v305
      %316 = vst [vmem:[#allocation2 + $0x148] sm:$0xf] %v306
      %v317 = vld [vmem:[%s236 + $0x2] sm:$0xff]
      %v318 = vld [vmem:[%s236 + $0xa] sm:$0xff]
      %v319 = vld [vmem:[%s236 + $0x12] sm:$0xff]
      %v320 = vld [vmem:[%s236 + $0x1a] sm:$0xff]
      %v321 = vld [vmem:[%s236 + $0x22] sm:$0xff]
      %v322 = vld [vmem:[%s236 + $0x2a] sm:$0xff]
      %v323 = vld [vmem:[%s236 + $0x32] sm:$0xff]
      %v324 = vld [vmem:[%s236 + $0x3a] sm:$0xff]
      %v325 = vld [vmem:[%s236 + $0x42] sm:$0xff]
      %v326 = vld [vmem:[%s236 + $0x4a] sm:$0xff]
      %v327 = vpack.c.bf16 %v317, %v317
      %v328 = vpack.c.bf16 %v318, %v318
      %v329 = vpack.c.bf16 %v319, %v319
      %v330 = vpack.c.bf16 %v320, %v320
      %v331 = vpack.c.bf16 %v321, %v321
      %v332 = vpack.c.bf16 %v322, %v322
      %v333 = vpack.c.bf16 %v323, %v323
      %v334 = vpack.c.bf16 %v324, %v324
      %v335 = vpack.c.bf16 %v325, %v325
      %v336 = vpack.c.bf16 %v326, %v326
      %337 = vst [vmem:[#allocation2 + $0x8] sm:$0xf] %v327
      %338 = vst [vmem:[#allocation2 + $0x2c] sm:$0xf] %v328
      %339 = vst [vmem:[#allocation2 + $0x50] sm:$0xf] %v329
      %340 = vst [vmem:[#allocation2 + $0x74] sm:$0xf] %v330
      %341 = vst [vmem:[#allocation2 + $0x98] sm:$0xf] %v331
      %342 = vst [vmem:[#allocation2 + $0xbc] sm:$0xf] %v332
      %343 = vst [vmem:[#allocation2 + $0xe0] sm:$0xf] %v333
      %344 = vst [vmem:[#allocation2 + $0x104] sm:$0xf] %v334
      %345 = vst [vmem:[#allocation2 + $0x128] sm:$0xf] %v335
      %346 = vst [vmem:[#allocation2 + $0x14c] sm:$0xf] %v336
      %v347 = vld [vmem:[%s236 + $0xa] sm:$0xff]
      %v348 = vld [vmem:[%s236 + $0x12] sm:$0xff]
      %v349 = vld [vmem:[%s236 + $0x1a] sm:$0xff]
      %v350 = vld [vmem:[%s236 + $0x22] sm:$0xff]
      %v351 = vld [vmem:[%s236 + $0x2a] sm:$0xff]
      %v352 = vld [vmem:[%s236 + $0x32] sm:$0xff]
      %v353 = vld [vmem:[%s236 + $0x3a] sm:$0xff]
      %v354 = vld [vmem:[%s236 + $0x42] sm:$0xff]
      %v355 = vld [vmem:[%s236 + $0x4a] sm:$0xff]
      %v356 = vld [vmem:[%s236 + $0x52] sm:$0xff]
      %v357 = vpack.c.bf16 %v347, %v347
      %v358 = vpack.c.bf16 %v348, %v348
      %v359 = vpack.c.bf16 %v349, %v349
      %v360 = vpack.c.bf16 %v350, %v350
      %v361 = vpack.c.bf16 %v351, %v351
      %v362 = vpack.c.bf16 %v352, %v352
      %v363 = vpack.c.bf16 %v353, %v353
      %v364 = vpack.c.bf16 %v354, %v354
      %v365 = vpack.c.bf16 %v355, %v355
      %v366 = vpack.c.bf16 %v356, %v356
      %367 = vst [vmem:[#allocation2 + $0xc] sm:$0xf] %v357
      %368 = vst [vmem:[#allocation2 + $0x30] sm:$0xf] %v358
      %369 = vst [vmem:[#allocation2 + $0x54] sm:$0xf] %v359
      %370 = vst [vmem:[#allocation2 + $0x78] sm:$0xf] %v360
      %371 = vst [vmem:[#allocation2 + $0x9c] sm:$0xf] %v361
      %372 = vst [vmem:[#allocation2 + $0xc0] sm:$0xf] %v362
      %373 = vst [vmem:[#allocation2 + $0xe4] sm:$0xf] %v363
      %374 = vst [vmem:[#allocation2 + $0x108] sm:$0xf] %v364
      %375 = vst [vmem:[#allocation2 + $0x12c] sm:$0xf] %v365
      %376 = vst [vmem:[#allocation2 + $0x150] sm:$0xf] %v366
      %v377 = vld [vmem:[%s236 + $0xb] sm:$0xff]
      %v378 = vld [vmem:[%s236 + $0x13] sm:$0xff]
      %v379 = vld [vmem:[%s236 + $0x1b] sm:$0xff]
      %v380 = vld [vmem:[%s236 + $0x23] sm:$0xff]
      %v381 = vld [vmem:[%s236 + $0x2b] sm:$0xff]
      %v382 = vld [vmem:[%s236 + $0x33] sm:$0xff]
      %v383 = vld [vmem:[%s236 + $0x3b] sm:$0xff]
      %v384 = vld [vmem:[%s236 + $0x43] sm:$0xff]
      %v385 = vld [vmem:[%s236 + $0x4b] sm:$0xff]
      %v386 = vld [vmem:[%s236 + $0x53] sm:$0xff]
      %v387 = vpack.c.bf16 %v377, %v377
      %v388 = vpack.c.bf16 %v378, %v378
      %v389 = vpack.c.bf16 %v379, %v379
      %v390 = vpack.c.bf16 %v380, %v380
      %v391 = vpack.c.bf16 %v381, %v381
      %v392 = vpack.c.bf16 %v382, %v382
      %v393 = vpack.c.bf16 %v383, %v383
      %v394 = vpack.c.bf16 %v384, %v384
      %v395 = vpack.c.bf16 %v385, %v385
      %v396 = vpack.c.bf16 %v386, %v386
      %397 = vst [vmem:[#allocation2 + $0x10] sm:$0xf] %v387
      %398 = vst [vmem:[#allocation2 + $0x34] sm:$0xf] %v388
      %399 = vst [vmem:[#allocation2 + $0x58] sm:$0xf] %v389
      %400 = vst [vmem:[#allocation2 + $0x7c] sm:$0xf] %v390
      %401 = vst [vmem:[#allocation2 + $0xa0] sm:$0xf] %v391
      %402 = vst [vmem:[#allocation2 + $0xc4] sm:$0xf] %v392
      %403 = vst [vmem:[#allocation2 + $0xe8] sm:$0xf] %v393
      %404 = vst [vmem:[#allocation2 + $0x10c] sm:$0xf] %v394
      %405 = vst [vmem:[#allocation2 + $0x130] sm:$0xf] %v395
      %406 = vst [vmem:[#allocation2 + $0x154] sm:$0xf] %v396
      %v407 = vld [vmem:[%s236 + $0xc] sm:$0xff]
      %v408 = vld [vmem:[%s236 + $0x14] sm:$0xff]
      %v409 = vld [vmem:[%s236 + $0x1c] sm:$0xff]
      %v410 = vld [vmem:[%s236 + $0x24] sm:$0xff]
      %v411 = vld [vmem:[%s236 + $0x2c] sm:$0xff]
      %v412 = vld [vmem:[%s236 + $0x34] sm:$0xff]
      %v413 = vld [vmem:[%s236 + $0x3c] sm:$0xff]
      %v414 = vld [vmem:[%s236 + $0x44] sm:$0xff]
      %v415 = vld [vmem:[%s236 + $0x4c] sm:$0xff]
      %v416 = vld [vmem:[%s236 + $0x54] sm:$0xff]
      %v417 = vpack.c.bf16 %v407, %v407
      %v418 = vpack.c.bf16 %v408, %v408
      %v419 = vpack.c.bf16 %v409, %v409
      %v420 = vpack.c.bf16 %v410, %v410
      %v421 = vpack.c.bf16 %v411, %v411
      %v422 = vpack.c.bf16 %v412, %v412
      %v423 = vpack.c.bf16 %v413, %v413
      %v424 = vpack.c.bf16 %v414, %v414
      %v425 = vpack.c.bf16 %v415, %v415
      %v426 = vpack.c.bf16 %v416, %v416
      %427 = vst [vmem:[#allocation2 + $0x14] sm:$0xf] %v417
      %428 = vst [vmem:[#allocation2 + $0x38] sm:$0xf] %v418
      %429 = vst [vmem:[#allocation2 + $0x5c] sm:$0xf] %v419
      %430 = vst [vmem:[#allocation2 + $0x80] sm:$0xf] %v420
      %431 = vst [vmem:[#allocation2 + $0xa4] sm:$0xf] %v421
      %432 = vst [vmem:[#allocation2 + $0xc8] sm:$0xf] %v422
      %433 = vst [vmem:[#allocation2 + $0xec] sm:$0xf] %v423
      %434 = vst [vmem:[#allocation2 + $0x110] sm:$0xf] %v424
      %435 = vst [vmem:[#allocation2 + $0x134] sm:$0xf] %v425
      %436 = vst [vmem:[#allocation2 + $0x158] sm:$0xf] %v426
      %v437 = vld [vmem:[%s236 + $0x14] sm:$0xff]
      %v438 = vld [vmem:[%s236 + $0x1c] sm:$0xff]
      %v439 = vld [vmem:[%s236 + $0x24] sm:$0xff]
      %v440 = vld [vmem:[%s236 + $0x2c] sm:$0xff]
      %v441 = vld [vmem:[%s236 + $0x34] sm:$0xff]
      %v442 = vld [vmem:[%s236 + $0x3c] sm:$0xff]
      %v443 = vld [vmem:[%s236 + $0x44] sm:$0xff]
      %v444 = vld [vmem:[%s236 + $0x4c] sm:$0xff]
      %v445 = vld [vmem:[%s236 + $0x54] sm:$0xff]
      %v446 = vld [vmem:[%s236 + $0x5c] sm:$0xff]
      %v447 = vpack.c.bf16 %v437, %v437
      %v448 = vpack.c.bf16 %v438, %v438
      %v449 = vpack.c.bf16 %v439, %v439
      %v450 = vpack.c.bf16 %v440, %v440
      %v451 = vpack.c.bf16 %v441, %v441
      %v452 = vpack.c.bf16 %v442, %v442
      %v453 = vpack.c.bf16 %v443, %v443
      %v454 = vpack.c.bf16 %v444, %v444
      %v455 = vpack.c.bf16 %v445, %v445
      %v456 = vpack.c.bf16 %v446, %v446
      %457 = vst [vmem:[#allocation2 + $0x18] sm:$0xf] %v447
      %458 = vst [vmem:[#allocation2 + $0x3c] sm:$0xf] %v448
      %459 = vst [vmem:[#allocation2 + $0x60] sm:$0xf] %v449
      %460 = vst [vmem:[#allocation2 + $0x84] sm:$0xf] %v450
      %461 = vst [vmem:[#allocation2 + $0xa8] sm:$0xf] %v451
      %462 = vst [vmem:[#allocation2 + $0xcc] sm:$0xf] %v452
      %463 = vst [vmem:[#allocation2 + $0xf0] sm:$0xf] %v453
      %464 = vst [vmem:[#allocation2 + $0x114] sm:$0xf] %v454
      %465 = vst [vmem:[#allocation2 + $0x138] sm:$0xf] %v455
      %466 = vst [vmem:[#allocation2 + $0x15c] sm:$0xf] %v456
      %v467 = vld [vmem:[%s236 + $0x15] sm:$0xff]
      %v468 = vld [vmem:[%s236 + $0x1d] sm:$0xff]
      %v469 = vld [vmem:[%s236 + $0x25] sm:$0xff]
      %v470 = vld [vmem:[%s236 + $0x2d] sm:$0xff]
      %v471 = vld [vmem:[%s236 + $0x35] sm:$0xff]
      %v472 = vld [vmem:[%s236 + $0x3d] sm:$0xff]
      %v473 = vld [vmem:[%s236 + $0x45] sm:$0xff]
      %v474 = vld [vmem:[%s236 + $0x4d] sm:$0xff]
      %v475 = vld [vmem:[%s236 + $0x55] sm:$0xff]
      %v476 = vld [vmem:[%s236 + $0x5d] sm:$0xff]
      %v477 = vpack.c.bf16 %v467, %v467
      %v478 = vpack.c.bf16 %v468, %v468
      %v479 = vpack.c.bf16 %v469, %v469
      %v480 = vpack.c.bf16 %v470, %v470
      %v481 = vpack.c.bf16 %v471, %v471
      %v482 = vpack.c.bf16 %v472, %v472
      %v483 = vpack.c.bf16 %v473, %v473
      %v484 = vpack.c.bf16 %v474, %v474
      %v485 = vpack.c.bf16 %v475, %v475
      %v486 = vpack.c.bf16 %v476, %v476
      %487 = vst [vmem:[#allocation2 + $0x1c] sm:$0xf] %v477
      %488 = vst [vmem:[#allocation2 + $0x40] sm:$0xf] %v478
      %489 = vst [vmem:[#allocation2 + $0x64] sm:$0xf] %v479
      %490 = vst [vmem:[#allocation2 + $0x88] sm:$0xf] %v480
      %491 = vst [vmem:[#allocation2 + $0xac] sm:$0xf] %v481
      %492 = vst [vmem:[#allocation2 + $0xd0] sm:$0xf] %v482
      %493 = vst [vmem:[#allocation2 + $0xf4] sm:$0xf] %v483
      %494 = vst [vmem:[#allocation2 + $0x118] sm:$0xf] %v484
      %495 = vst [vmem:[#allocation2 + $0x13c] sm:$0xf] %v485
      %496 = vst [vmem:[#allocation2 + $0x160] sm:$0xf] %v486
      %v497 = vld [vmem:[%s236 + $0x16] sm:$0xff]
      %v498 = vld [vmem:[%s236 + $0x1e] sm:$0xff]
      %v499 = vld [vmem:[%s236 + $0x26] sm:$0xff]
      %v500 = vld [vmem:[%s236 + $0x2e] sm:$0xff]
      %v501 = vld [vmem:[%s236 + $0x36] sm:$0xff]
      %v502 = vld [vmem:[%s236 + $0x3e] sm:$0xff]
      %v503 = vld [vmem:[%s236 + $0x46] sm:$0xff]
      %v504 = vld [vmem:[%s236 + $0x4e] sm:$0xff]
      %v505 = vld [vmem:[%s236 + $0x56] sm:$0xff]
      %v506 = vld [vmem:[%s236 + $0x5e] sm:$0xff]
      %v507 = vpack.c.bf16 %v497, %v497
      %v508 = vpack.c.bf16 %v498, %v498
      %v509 = vpack.c.bf16 %v499, %v499
      %v510 = vpack.c.bf16 %v500, %v500
      %v511 = vpack.c.bf16 %v501, %v501
      %v512 = vpack.c.bf16 %v502, %v502
      %v513 = vpack.c.bf16 %v503, %v503
      %v514 = vpack.c.bf16 %v504, %v504
      %v515 = vpack.c.bf16 %v505, %v505
      %v516 = vpack.c.bf16 %v506, %v506
      %517 = vst [vmem:[#allocation2 + $0x20] sm:$0xf] %v507
      %518 = vst [vmem:[#allocation2 + $0x44] sm:$0xf] %v508
      %519 = vst [vmem:[#allocation2 + $0x68] sm:$0xf] %v509
      %520 = vst [vmem:[#allocation2 + $0x8c] sm:$0xf] %v510
      %521 = vst [vmem:[#allocation2 + $0xb0] sm:$0xf] %v511
      %522 = vst [vmem:[#allocation2 + $0xd4] sm:$0xf] %v512
      %523 = vst [vmem:[#allocation2 + $0xf8] sm:$0xf] %v513
      %524 = vst [vmem:[#allocation2 + $0x11c] sm:$0xf] %v514
      %525 = vst [vmem:[#allocation2 + $0x140] sm:$0xf] %v515
      %526 = vst [vmem:[#allocation2 + $0x164] sm:$0xf] %v516
      %v527 = vld [vmem:[#allocation2] sm:$0xff]
      %v528 = vld [vmem:[#allocation2 + $0x8] sm:$0xff]
      %v529 = vld [vmem:[#allocation2 + $0x10] sm:$0xff]
      %v530 = vld [vmem:[#allocation2 + $0x18] sm:$0xff]
      %v531 = vld [vmem:[#allocation2 + $0x20] sm:$0xf]
      %v532 = vld [vmem:[#allocation2 + $0x24] sm:$0xff]
      %v533 = vld [vmem:[#allocation2 + $0x2c] sm:$0xff]
      %v534 = vld [vmem:[#allocation2 + $0x34] sm:$0xff]
      %v535 = vld [vmem:[#allocation2 + $0x3c] sm:$0xff]
      %v536 = vld [vmem:[#allocation2 + $0x44] sm:$0xf]
      %v537 = vld [vmem:[#allocation2 + $0x48] sm:$0xff]
      %v538 = vld [vmem:[#allocation2 + $0x50] sm:$0xff]
      %v539 = vld [vmem:[#allocation2 + $0x58] sm:$0xff]
      %v540 = vld [vmem:[#allocation2 + $0x60] sm:$0xff]
      %v541 = vld [vmem:[#allocation2 + $0x68] sm:$0xf]
      %v542 = vld [vmem:[#allocation2 + $0x6c] sm:$0xff]
      %v543 = vld [vmem:[#allocation2 + $0x74] sm:$0xff]
      %v544 = vld [vmem:[#allocation2 + $0x7c] sm:$0xff]
      %v545 = vld [vmem:[#allocation2 + $0x84] sm:$0xff]
      %v546 = vld [vmem:[#allocation2 + $0x8c] sm:$0xf]
      %v547 = vld [vmem:[#allocation2 + $0x90] sm:$0xff]
      %v548 = vld [vmem:[#allocation2 + $0x98] sm:$0xff]
      %v549 = vld [vmem:[#allocation2 + $0xa0] sm:$0xff]
      %v550 = vld [vmem:[#allocation2 + $0xa8] sm:$0xff]
      %v551 = vld [vmem:[#allocation2 + $0xb0] sm:$0xf]
      %v552 = vld [vmem:[#allocation2 + $0xb4] sm:$0xff]
      %v553 = vld [vmem:[#allocation2 + $0xbc] sm:$0xff]
      %v554 = vld [vmem:[#allocation2 + $0xc4] sm:$0xff]
      %v555 = vld [vmem:[#allocation2 + $0xcc] sm:$0xff]
      %v556 = vld [vmem:[#allocation2 + $0xd4] sm:$0xf]
      %v557 = vld [vmem:[#allocation2 + $0xd8] sm:$0xff]
      %v558 = vld [vmem:[#allocation2 + $0xe0] sm:$0xff]
      %v559 = vld [vmem:[#allocation2 + $0xe8] sm:$0xff]
      %v560 = vld [vmem:[#allocation2 + $0xf0] sm:$0xff]
      %v561 = vld [vmem:[#allocation2 + $0xf8] sm:$0xf]
      %v562 = vld [vmem:[#allocation2 + $0xfc] sm:$0xff]
      %v563 = vld [vmem:[#allocation2 + $0x104] sm:$0xff]
      %v564 = vld [vmem:[#allocation2 + $0x10c] sm:$0xff]
      %v565 = vld [vmem:[#allocation2 + $0x114] sm:$0xff]
      %v566 = vld [vmem:[#allocation2 + $0x11c] sm:$0xf]
      %v567 = vld [vmem:[#allocation2 + $0x120] sm:$0xff]
      %v568 = vld [vmem:[#allocation2 + $0x128] sm:$0xff]
      %v569 = vld [vmem:[#allocation2 + $0x130] sm:$0xff]
      %v570 = vld [vmem:[#allocation2 + $0x138] sm:$0xff]
      %v571 = vld [vmem:[#allocation2 + $0x140] sm:$0xf]
      %v572 = vld [vmem:[#allocation2 + $0x144] sm:$0xff]
      %v573 = vld [vmem:[#allocation2 + $0x14c] sm:$0xff]
      %v574 = vld [vmem:[#allocation2 + $0x154] sm:$0xff]
      %v575 = vld [vmem:[#allocation2 + $0x15c] sm:$0xff]
      %v576 = vld [vmem:[#allocation2 + $0x164] sm:$0xf]
      %v577 = vld [vmem:[%s1] sm:$0xf]
      %v578 = vld [vmem:[%s1 + $0x4] sm:$0xf]
      %v579 = vld [vmem:[%s1 + $0x8] sm:$0xf]
      %v580 = vld [vmem:[%s1 + $0xc] sm:$0xf]
      %v581 = vld [vmem:[%s1 + $0x10] sm:$0xf]
      %v582 = vld [vmem:[%s1 + $0x14] sm:$0xf]
      %v583 = vld [vmem:[%s1 + $0x18] sm:$0xf]
      %v584 = vld [vmem:[%s1 + $0x1c] sm:$0xf]
      %v585 = vld [vmem:[%s1 + $0x20] sm:$0xf]
      %v586 = vld [vmem:[%s1 + $0x24] sm:$0xf]
      %v587 = vld [vmem:[%s1 + $0x28] sm:$0xf]
      %v588 = vld [vmem:[%s1 + $0x2c] sm:$0xf]
      %v589 = vld [vmem:[%s1 + $0x30] sm:$0xf]
      %v590 = vld [vmem:[%s1 + $0x34] sm:$0xf]
      %v591 = vld [vmem:[%s1 + $0x38] sm:$0xf]
      %v592 = vld [vmem:[%s1 + $0x3c] sm:$0xf]
      %v593 = vld [vmem:[%s1 + $0x40] sm:$0xf]
      %v594 = vld [vmem:[%s1 + $0x44] sm:$0xf]
      %v595 = vld [vmem:[%s1 + $0x48] sm:$0xf]
      %v596 = vld [vmem:[%s1 + $0x4c] sm:$0xf]
      %v597 = vld [vmem:[%s1 + $0x50] sm:$0xf]
      %v598 = vld [vmem:[%s1 + $0x54] sm:$0xf]
      %v599 = vld [vmem:[%s1 + $0x58] sm:$0xf]
      %v600 = vld [vmem:[%s1 + $0x5c] sm:$0xf]
      %v601 = vld [vmem:[%s1 + $0x60] sm:$0xf]
      %v602 = vld [vmem:[%s1 + $0x64] sm:$0xf]
      %v603 = vld [vmem:[%s1 + $0x68] sm:$0xf]
      %v604 = vld [vmem:[%s1 + $0x6c] sm:$0xf]
      %v605 = vld [vmem:[%s1 + $0x70] sm:$0xf]
      %v606 = vld [vmem:[%s1 + $0x74] sm:$0xf]
      %v607 = vld [vmem:[%s1 + $0x78] sm:$0xf]
      %v608 = vld [vmem:[%s1 + $0x7c] sm:$0xf]
      %v609 = vld [vmem:[%s1 + $0x80] sm:$0xf]
      %v610 = vld [vmem:[%s1 + $0x84] sm:$0xf]
      %v611 = vld [vmem:[%s1 + $0x88] sm:$0xf]
      %v612 = vld [vmem:[%s1 + $0x8c] sm:$0xf]
      %v613 = vld [vmem:[%s1 + $0x90] sm:$0xf]
      %v614 = vld [vmem:[%s1 + $0x94] sm:$0xf]
      %v615 = vld [vmem:[%s1 + $0x98] sm:$0xf]
      %v616 = vld [vmem:[%s1 + $0x9c] sm:$0xf]
      %v617 = vld [vmem:[%s1 + $0xa0] sm:$0xf]
      %v618 = vld [vmem:[%s1 + $0xa4] sm:$0xf]
      %v619 = vld [vmem:[%s1 + $0xa8] sm:$0xf]
      %v620 = vld [vmem:[%s1 + $0xac] sm:$0xf]
      %v621 = vld [vmem:[%s1 + $0xb0] sm:$0xf]
      %v622 = vld [vmem:[%s1 + $0xb4] sm:$0xf]
      %v623 = vld [vmem:[%s1 + $0xb8] sm:$0xf]
      %v624 = vld [vmem:[%s1 + $0xbc] sm:$0xf]
      %v625 = vld [vmem:[%s1 + $0xc0] sm:$0xf]
      %v626 = vld [vmem:[%s1 + $0xc4] sm:$0xf]
      %v627 = vld [vmem:[%s1 + $0xc8] sm:$0xf]
      %v628 = vld [vmem:[%s1 + $0xcc] sm:$0xf]
      %v629 = vld [vmem:[%s1 + $0xd0] sm:$0xf]
      %v630 = vld [vmem:[%s1 + $0xd4] sm:$0xf]
      %v631 = vld [vmem:[%s1 + $0xd8] sm:$0xf]
      %v632 = vld [vmem:[%s1 + $0xdc] sm:$0xf]
      %v633 = vld [vmem:[%s1 + $0xe0] sm:$0xf]
      %v634 = vld [vmem:[%s1 + $0xe4] sm:$0xf]
      %v635 = vld [vmem:[%s1 + $0xe8] sm:$0xf]
      %v636 = vld [vmem:[%s1 + $0xec] sm:$0xf]
      %v637 = vld [vmem:[%s1 + $0xf0] sm:$0xf]
      %v638 = vld [vmem:[%s1 + $0xf4] sm:$0xf]
      %v639 = vld [vmem:[%s1 + $0xf8] sm:$0xf]
      %v640 = vld [vmem:[%s1 + $0xfc] sm:$0xf]
      %v641 = vld [vmem:[%s1 + $0x100] sm:$0xf]
      %v642 = vld [vmem:[%s1 + $0x104] sm:$0xf]
      %v643 = vld [vmem:[%s1 + $0x108] sm:$0xf]
      %v644 = vld [vmem:[%s1 + $0x10c] sm:$0xf]
      %v645 = vld [vmem:[%s1 + $0x110] sm:$0xf]
      %v646 = vld [vmem:[%s1 + $0x114] sm:$0xf]
      %v647 = vld [vmem:[%s1 + $0x118] sm:$0xf]
      %v648 = vld [vmem:[%s1 + $0x11c] sm:$0xf]
      %v649 = vld [vmem:[%s1 + $0x120] sm:$0xf]
      %v650 = vld [vmem:[%s1 + $0x124] sm:$0xf]
      %v651 = vld [vmem:[%s1 + $0x128] sm:$0xf]
      %v652 = vld [vmem:[%s1 + $0x12c] sm:$0xf]
      %v653 = vld [vmem:[%s1 + $0x130] sm:$0xf]
      %v654 = vld [vmem:[%s1 + $0x134] sm:$0xf]
      %v655 = vld [vmem:[%s1 + $0x138] sm:$0xf]
      %v656 = vld [vmem:[%s1 + $0x13c] sm:$0xf]
      %v657 = vld [vmem:[%s1 + $0x140] sm:$0xf]
      %v658 = vld [vmem:[%s1 + $0x144] sm:$0xf]
      %v659 = vld [vmem:[%s1 + $0x148] sm:$0xf]
      %v660 = vld [vmem:[%s1 + $0x14c] sm:$0xf]
      %v661 = vld [vmem:[%s1 + $0x150] sm:$0xf]
      %v662 = vld [vmem:[%s1 + $0x154] sm:$0xf]
      %v663 = vld [vmem:[%s1 + $0x158] sm:$0xf]
      %v664 = vld [vmem:[%s1 + $0x15c] sm:$0xf]
      %v665 = vld [vmem:[%s1 + $0x160] sm:$0xf]
      %v666 = vld [vmem:[%s1 + $0x164] sm:$0xf]
      %v667 = vld [vmem:[%s1 + $0x168] sm:$0xf]
      %v668 = vld [vmem:[%s1 + $0x16c] sm:$0xf]
      %v669 = vld [vmem:[%s1 + $0x170] sm:$0xf]
      %v670 = vld [vmem:[%s1 + $0x174] sm:$0xf]
      %v671 = vld [vmem:[%s1 + $0x178] sm:$0xf]
      %v672 = vld [vmem:[%s1 + $0x17c] sm:$0xf]
      %v673 = vld [vmem:[%s1 + $0x180] sm:$0xf]
      %v674 = vld [vmem:[%s1 + $0x184] sm:$0xf]
      %v675 = vld [vmem:[%s1 + $0x188] sm:$0xf]
      %v676 = vld [vmem:[%s1 + $0x18c] sm:$0xf]
      %v677 = vld [vmem:[%s1 + $0x190] sm:$0xf]
      %v678 = vld [vmem:[%s1 + $0x194] sm:$0xf]
      %v679 = vld [vmem:[%s1 + $0x198] sm:$0xf]
      %v680 = vld [vmem:[%s1 + $0x19c] sm:$0xf]
      %v681 = vld [vmem:[%s1 + $0x1a0] sm:$0xf]
      %v682 = vld [vmem:[%s1 + $0x1a4] sm:$0xf]
      %v683 = vld [vmem:[%s1 + $0x1a8] sm:$0xf]
      %v684 = vld [vmem:[%s1 + $0x1ac] sm:$0xf]
      %v685 = vld [vmem:[%s1 + $0x1b0] sm:$0xf]
      %v686 = vld [vmem:[%s1 + $0x1b4] sm:$0xf]
      %v687 = vld [vmem:[%s1 + $0x1b8] sm:$0xf]
      %v688 = vld [vmem:[%s1 + $0x1bc] sm:$0xf]
      %v689 = vld [vmem:[%s1 + $0x1c0] sm:$0xf]
      %v690 = vld [vmem:[%s1 + $0x1c4] sm:$0xf]
      %v691 = vld [vmem:[%s1 + $0x1c8] sm:$0xf]
      %v692 = vld [vmem:[%s1 + $0x1cc] sm:$0xf]
      %v693 = vld [vmem:[%s1 + $0x1d0] sm:$0xf]
      %v694 = vld [vmem:[%s1 + $0x1d4] sm:$0xf]
      %v695 = vld [vmem:[%s1 + $0x1d8] sm:$0xf]
      %v696 = vld [vmem:[%s1 + $0x1dc] sm:$0xf]
      %v697 = vld [vmem:[%s1 + $0x1e0] sm:$0xf]
      %v698 = vld [vmem:[%s1 + $0x1e4] sm:$0xf]
      %v699 = vld [vmem:[%s1 + $0x1e8] sm:$0xf]
      %v700 = vld [vmem:[%s1 + $0x1ec] sm:$0xf]
      %v701 = vld [vmem:[%s1 + $0x1f0] sm:$0xf]
      %v702 = vld [vmem:[%s1 + $0x1f4] sm:$0xf]
      %v703 = vld [vmem:[%s1 + $0x1f8] sm:$0xf]
      %v704 = vld [vmem:[%s1 + $0x1fc] sm:$0xf]
      %v705 = vld [vmem:[%s1 + $0x200] sm:$0xf]
      %v706 = vld [vmem:[%s1 + $0x204] sm:$0xf]
      %v707 = vld [vmem:[%s1 + $0x208] sm:$0xf]
      %v708 = vld [vmem:[%s1 + $0x20c] sm:$0xf]
      %v709 = vld [vmem:[%s1 + $0x210] sm:$0xf]
      %v710 = vld [vmem:[%s1 + $0x214] sm:$0xf]
      %v711 = vld [vmem:[%s1 + $0x218] sm:$0xf]
      %v712 = vld [vmem:[%s1 + $0x21c] sm:$0xf]
      %v713 = vld [vmem:[%s1 + $0x220] sm:$0xf]
      %v714 = vld [vmem:[%s1 + $0x224] sm:$0xf]
      %v715 = vld [vmem:[%s1 + $0x228] sm:$0xf]
      %v716 = vld [vmem:[%s1 + $0x22c] sm:$0xf]
      %v717 = vld [vmem:[%s1 + $0x230] sm:$0xf]
      %v718 = vld [vmem:[%s1 + $0x234] sm:$0xf]
      %v719 = vld [vmem:[%s1 + $0x238] sm:$0xf]
      %v720 = vld [vmem:[%s1 + $0x23c] sm:$0xf]
      %v721 = vld [vmem:[%s2] sm:$0x1]
      %v723 = vperm.slane %v721, 0
      %v775 = vunpack.c.l.b16 %v527
      %v776 = vunpack.c.h.b16 %v527
      %v777 = vunpack.c.l.b16 %v528
      %v778 = vunpack.c.h.b16 %v528
      %v779 = vunpack.c.l.b16 %v529
      %v780 = vunpack.c.h.b16 %v529
      %v781 = vunpack.c.l.b16 %v530
      %v782 = vunpack.c.h.b16 %v530
      %v783 = vunpack.c.l.b16 %v531
      %v784 = vunpack.c.l.b16 %v532
      %v785 = vunpack.c.h.b16 %v532
      %v786 = vunpack.c.l.b16 %v533
      %v787 = vunpack.c.h.b16 %v533
      %v788 = vunpack.c.l.b16 %v534
      %v789 = vunpack.c.h.b16 %v534
      %v790 = vunpack.c.l.b16 %v535
      %v791 = vunpack.c.h.b16 %v535
      %v792 = vunpack.c.l.b16 %v536
      %v793 = vunpack.c.l.b16 %v537
      %v794 = vunpack.c.h.b16 %v537
      %v795 = vunpack.c.l.b16 %v538
      %v796 = vunpack.c.h.b16 %v538
      %v797 = vunpack.c.l.b16 %v539
      %v798 = vunpack.c.h.b16 %v539
      %v799 = vunpack.c.l.b16 %v540
      %v800 = vunpack.c.h.b16 %v540
      %v801 = vunpack.c.l.b16 %v541
      %v802 = vunpack.c.l.b16 %v542
      %v803 = vunpack.c.h.b16 %v542
      %v804 = vunpack.c.l.b16 %v543
      %v805 = vunpack.c.h.b16 %v543
      %v806 = vunpack.c.l.b16 %v544
      %v807 = vunpack.c.h.b16 %v544
      %v808 = vunpack.c.l.b16 %v545
      %v809 = vunpack.c.h.b16 %v545
      %v810 = vunpack.c.l.b16 %v546
      %v811 = vunpack.c.l.b16 %v547
      %v812 = vunpack.c.h.b16 %v547
      %v813 = vunpack.c.l.b16 %v548
      %v814 = vunpack.c.h.b16 %v548
      %v815 = vunpack.c.l.b16 %v549
      %v816 = vunpack.c.h.b16 %v549
      %v817 = vunpack.c.l.b16 %v550
      %v818 = vunpack.c.h.b16 %v550
      %v819 = vunpack.c.l.b16 %v551
      %v820 = vunpack.c.l.b16 %v552
      %v821 = vunpack.c.h.b16 %v552
      %v822 = vunpack.c.l.b16 %v553
      %v823 = vunpack.c.h.b16 %v553
      %v824 = vunpack.c.l.b16 %v554
      %v825 = vunpack.c.h.b16 %v554
      %v826 = vunpack.c.l.b16 %v555
      %v827 = vunpack.c.h.b16 %v555
      %v828 = vunpack.c.l.b16 %v556
      %v829 = vunpack.c.l.b16 %v557
      %v830 = vunpack.c.h.b16 %v557
      %v831 = vunpack.c.l.b16 %v558
      %v832 = vunpack.c.h.b16 %v558
      %v833 = vunpack.c.l.b16 %v559
      %v834 = vunpack.c.h.b16 %v559
      %v835 = vunpack.c.l.b16 %v560
      %v836 = vunpack.c.h.b16 %v560
      %v837 = vunpack.c.l.b16 %v561
      %v838 = vunpack.c.l.b16 %v562
      %v839 = vunpack.c.h.b16 %v562
      %v840 = vunpack.c.l.b16 %v563
      %v841 = vunpack.c.h.b16 %v563
      %v842 = vunpack.c.l.b16 %v564
      %v843 = vunpack.c.h.b16 %v564
      %v844 = vunpack.c.l.b16 %v565
      %v845 = vunpack.c.h.b16 %v565
      %v846 = vunpack.c.l.b16 %v566
      %v847 = vunpack.c.l.b16 %v567
      %v848 = vunpack.c.h.b16 %v567
      %v849 = vunpack.c.l.b16 %v568
      %v850 = vunpack.c.h.b16 %v568
      %v851 = vunpack.c.l.b16 %v569
      %v852 = vunpack.c.h.b16 %v569
      %v853 = vunpack.c.l.b16 %v570
      %v854 = vunpack.c.h.b16 %v570
      %v855 = vunpack.c.l.b16 %v571
      %v856 = vunpack.c.l.b16 %v572
      %v857 = vunpack.c.h.b16 %v572
      %v858 = vunpack.c.l.b16 %v573
      %v859 = vunpack.c.h.b16 %v573
      %v860 = vunpack.c.l.b16 %v574
      %v861 = vunpack.c.h.b16 %v574
      %v862 = vunpack.c.l.b16 %v575
      %v863 = vunpack.c.h.b16 %v575
      %v864 = vunpack.c.l.b16 %v576
      %v865 = vpack.c.b16 %v784, %v775
      %v866 = vpack.c.b16 %v785, %v776
      %v867 = vpack.c.b16 %v786, %v777
      %v868 = vpack.c.b16 %v787, %v778
      %v869 = vpack.c.b16 %v788, %v779
      %v870 = vpack.c.b16 %v789, %v780
      %v871 = vpack.c.b16 %v790, %v781
      %v872 = vpack.c.b16 %v791, %v782
      %v873 = vpack.c.b16 %v792, %v783
      %v874 = vpack.c.b16 %v802, %v793
      %v875 = vpack.c.b16 %v803, %v794
      %v876 = vpack.c.b16 %v804, %v795
      %v877 = vpack.c.b16 %v805, %v796
      %v878 = vpack.c.b16 %v806, %v797
      %v879 = vpack.c.b16 %v807, %v798
      %v880 = vpack.c.b16 %v808, %v799
      %v881 = vpack.c.b16 %v809, %v800
      %v882 = vpack.c.b16 %v810, %v801
      %v883 = vpack.c.b16 %v820, %v811
      %v884 = vpack.c.b16 %v821, %v812
      %v885 = vpack.c.b16 %v822, %v813
      %v886 = vpack.c.b16 %v823, %v814
      %v887 = vpack.c.b16 %v824, %v815
      %v888 = vpack.c.b16 %v825, %v816
      %v889 = vpack.c.b16 %v826, %v817
      %v890 = vpack.c.b16 %v827, %v818
      %v891 = vpack.c.b16 %v828, %v819
      %v892 = vpack.c.b16 %v838, %v829
      %v893 = vpack.c.b16 %v839, %v830
      %v894 = vpack.c.b16 %v840, %v831
      %v895 = vpack.c.b16 %v841, %v832
      %v896 = vpack.c.b16 %v842, %v833
      %v897 = vpack.c.b16 %v843, %v834
      %v898 = vpack.c.b16 %v844, %v835
      %v899 = vpack.c.b16 %v845, %v836
      %v900 = vpack.c.b16 %v846, %v837
      %v901 = vpack.c.b16 %v856, %v847
      %v902 = vpack.c.b16 %v857, %v848
      %v903 = vpack.c.b16 %v858, %v849
      %v904 = vpack.c.b16 %v859, %v850
      %v905 = vpack.c.b16 %v860, %v851
      %v906 = vpack.c.b16 %v861, %v852
      %v907 = vpack.c.b16 %v862, %v853
      %v908 = vpack.c.b16 %v863, %v854
      %v909 = vpack.c.b16 %v864, %v855
      %v1099 = vunpack.c.l.b16 %v577
      %v1100 = vunpack.c.l.b16 %v578
      %v1101 = vunpack.c.l.b16 %v579
      %v1102 = vunpack.c.l.b16 %v580
      %v1103 = vunpack.c.l.b16 %v581
      %v1104 = vunpack.c.l.b16 %v582
      %v1105 = vunpack.c.l.b16 %v583
      %v1106 = vunpack.c.l.b16 %v584
      %v1107 = vunpack.c.l.b16 %v585
      %v1108 = vunpack.c.l.b16 %v586
      %v1109 = vunpack.c.l.b16 %v587
      %v1110 = vunpack.c.l.b16 %v588
      %v1111 = vunpack.c.l.b16 %v589
      %v1112 = vunpack.c.l.b16 %v590
      %v1113 = vunpack.c.l.b16 %v591
      %v1114 = vunpack.c.l.b16 %v592
      %v1115 = vunpack.c.l.b16 %v593
      %v1116 = vunpack.c.l.b16 %v594
      %v1117 = vunpack.c.l.b16 %v595
      %v1118 = vunpack.c.l.b16 %v596
      %v1119 = vunpack.c.l.b16 %v597
      %v1120 = vunpack.c.l.b16 %v598
      %v1121 = vunpack.c.l.b16 %v599
      %v1122 = vunpack.c.l.b16 %v600
      %v1123 = vunpack.c.l.b16 %v601
      %v1124 = vunpack.c.l.b16 %v602
      %v1125 = vunpack.c.l.b16 %v603
      %v1126 = vunpack.c.l.b16 %v604
      %v1127 = vunpack.c.l.b16 %v605
      %v1128 = vunpack.c.l.b16 %v606
      %v1129 = vunpack.c.l.b16 %v607
      %v1130 = vunpack.c.l.b16 %v608
      %v1131 = vunpack.c.l.b16 %v609
      %v1132 = vunpack.c.l.b16 %v610
      %v1133 = vunpack.c.l.b16 %v611
      %v1134 = vunpack.c.l.b16 %v612
      %v1135 = vunpack.c.l.b16 %v613
      %v1136 = vunpack.c.l.b16 %v614
      %v1137 = vunpack.c.l.b16 %v615
      %v1138 = vunpack.c.l.b16 %v616
      %v1139 = vunpack.c.l.b16 %v617
      %v1140 = vunpack.c.l.b16 %v618
      %v1141 = vunpack.c.l.b16 %v619
      %v1142 = vunpack.c.l.b16 %v620
      %v1143 = vunpack.c.l.b16 %v621
      %v1144 = vunpack.c.l.b16 %v622
      %v1145 = vunpack.c.l.b16 %v623
      %v1146 = vunpack.c.l.b16 %v624
      %v1147 = vunpack.c.l.b16 %v625
      %v1148 = vunpack.c.l.b16 %v626
      %v1149 = vunpack.c.l.b16 %v627
      %v1150 = vunpack.c.l.b16 %v628
      %v1151 = vunpack.c.l.b16 %v629
      %v1152 = vunpack.c.l.b16 %v630
      %v1153 = vunpack.c.l.b16 %v631
      %v1154 = vunpack.c.l.b16 %v632
      %v1155 = vunpack.c.l.b16 %v633
      %v1156 = vunpack.c.l.b16 %v634
      %v1157 = vunpack.c.l.b16 %v635
      %v1158 = vunpack.c.l.b16 %v636
      %v1159 = vunpack.c.l.b16 %v637
      %v1160 = vunpack.c.l.b16 %v638
      %v1161 = vunpack.c.l.b16 %v639
      %v1162 = vunpack.c.l.b16 %v640
      %v1163 = vunpack.c.l.b16 %v641
      %v1164 = vunpack.c.l.b16 %v642
      %v1165 = vunpack.c.l.b16 %v643
      %v1166 = vunpack.c.l.b16 %v644
      %v1167 = vunpack.c.l.b16 %v645
      %v1168 = vunpack.c.l.b16 %v646
      %v1169 = vunpack.c.l.b16 %v647
      %v1170 = vunpack.c.l.b16 %v648
      %v1171 = vunpack.c.l.b16 %v649
      %v1172 = vunpack.c.l.b16 %v650
      %v1173 = vunpack.c.l.b16 %v651
      %v1174 = vunpack.c.l.b16 %v652
      %v1175 = vunpack.c.l.b16 %v653
      %v1176 = vunpack.c.l.b16 %v654
      %v1177 = vunpack.c.l.b16 %v655
      %v1178 = vunpack.c.l.b16 %v656
      %v1179 = vunpack.c.l.b16 %v657
      %v1180 = vunpack.c.l.b16 %v658
      %v1181 = vunpack.c.l.b16 %v659
      %v1182 = vunpack.c.l.b16 %v660
      %v1183 = vunpack.c.l.b16 %v661
      %v1184 = vunpack.c.l.b16 %v662
      %v1185 = vunpack.c.l.b16 %v663
      %v1186 = vunpack.c.l.b16 %v664
      %v1187 = vunpack.c.l.b16 %v665
      %v1188 = vunpack.c.l.b16 %v666
      %v1189 = vunpack.c.l.b16 %v667
      %v1190 = vunpack.c.l.b16 %v668
      %v1191 = vunpack.c.l.b16 %v669
      %v1192 = vunpack.c.l.b16 %v670
      %v1193 = vunpack.c.l.b16 %v671
      %v1194 = vunpack.c.l.b16 %v672
      %v1195 = vunpack.c.l.b16 %v673
      %v1196 = vunpack.c.l.b16 %v674
      %v1197 = vunpack.c.l.b16 %v675
      %v1198 = vunpack.c.l.b16 %v676
      %v1199 = vunpack.c.l.b16 %v677
      %v1200 = vunpack.c.l.b16 %v678
      %v1201 = vunpack.c.l.b16 %v679
      %v1202 = vunpack.c.l.b16 %v680
      %v1203 = vunpack.c.l.b16 %v681
      %v1204 = vunpack.c.l.b16 %v682
      %v1205 = vunpack.c.l.b16 %v683
      %v1206 = vunpack.c.l.b16 %v684
      %v1207 = vunpack.c.l.b16 %v685
      %v1208 = vunpack.c.l.b16 %v686
      %v1209 = vunpack.c.l.b16 %v687
      %v1210 = vunpack.c.l.b16 %v688
      %v1211 = vunpack.c.l.b16 %v689
      %v1212 = vunpack.c.l.b16 %v690
      %v1213 = vunpack.c.l.b16 %v691
      %v1214 = vunpack.c.l.b16 %v692
      %v1215 = vunpack.c.l.b16 %v693
      %v1216 = vunpack.c.l.b16 %v694
      %v1217 = vunpack.c.l.b16 %v695
      %v1218 = vunpack.c.l.b16 %v696
      %v1219 = vunpack.c.l.b16 %v697
      %v1220 = vunpack.c.l.b16 %v698
      %v1221 = vunpack.c.l.b16 %v699
      %v1222 = vunpack.c.l.b16 %v700
      %v1223 = vunpack.c.l.b16 %v701
      %v1224 = vunpack.c.l.b16 %v702
      %v1225 = vunpack.c.l.b16 %v703
      %v1226 = vunpack.c.l.b16 %v704
      %v1227 = vunpack.c.l.b16 %v705
      %v1228 = vunpack.c.l.b16 %v706
      %v1229 = vunpack.c.l.b16 %v707
      %v1230 = vunpack.c.l.b16 %v708
      %v1231 = vunpack.c.l.b16 %v709
      %v1232 = vunpack.c.l.b16 %v710
      %v1233 = vunpack.c.l.b16 %v711
      %v1234 = vunpack.c.l.b16 %v712
      %v1235 = vunpack.c.l.b16 %v713
      %v1236 = vunpack.c.l.b16 %v714
      %v1237 = vunpack.c.l.b16 %v715
      %v1238 = vunpack.c.l.b16 %v716
      %v1239 = vunpack.c.l.b16 %v717
      %v1240 = vunpack.c.l.b16 %v718
      %v1241 = vunpack.c.l.b16 %v719
      %v1242 = vunpack.c.l.b16 %v720
      %v1243 = vpack.c.b16 %v1100, %v1099
      %v1244 = vpack.c.b16 %v1102, %v1101
      %v1245 = vpack.c.b16 %v1104, %v1103
      %v1246 = vpack.c.b16 %v1106, %v1105
      %v1247 = vpack.c.b16 %v1108, %v1107
      %v1248 = vpack.c.b16 %v1110, %v1109
      %v1249 = vpack.c.b16 %v1112, %v1111
      %v1250 = vpack.c.b16 %v1114, %v1113
      %v1251 = vpack.c.b16 %v1116, %v1115
      %v1252 = vpack.c.b16 %v1118, %v1117
      %v1253 = vpack.c.b16 %v1120, %v1119
      %v1254 = vpack.c.b16 %v1122, %v1121
      %v1255 = vpack.c.b16 %v1124, %v1123
      %v1256 = vpack.c.b16 %v1126, %v1125
      %v1257 = vpack.c.b16 %v1128, %v1127
      %v1258 = vpack.c.b16 %v1130, %v1129
      %v1259 = vpack.c.b16 %v1132, %v1131
      %v1260 = vpack.c.b16 %v1134, %v1133
      %v1261 = vpack.c.b16 %v1136, %v1135
      %v1262 = vpack.c.b16 %v1138, %v1137
      %v1263 = vpack.c.b16 %v1140, %v1139
      %v1264 = vpack.c.b16 %v1142, %v1141
      %v1265 = vpack.c.b16 %v1144, %v1143
      %v1266 = vpack.c.b16 %v1146, %v1145
      %v1267 = vpack.c.b16 %v1148, %v1147
      %v1268 = vpack.c.b16 %v1150, %v1149
      %v1269 = vpack.c.b16 %v1152, %v1151
      %v1270 = vpack.c.b16 %v1154, %v1153
      %v1271 = vpack.c.b16 %v1156, %v1155
      %v1272 = vpack.c.b16 %v1158, %v1157
      %v1273 = vpack.c.b16 %v1160, %v1159
      %v1274 = vpack.c.b16 %v1162, %v1161
      %v1275 = vpack.c.b16 %v1164, %v1163
      %v1276 = vpack.c.b16 %v1166, %v1165
      %v1277 = vpack.c.b16 %v1168, %v1167
      %v1278 = vpack.c.b16 %v1170, %v1169
      %v1279 = vpack.c.b16 %v1172, %v1171
      %v1280 = vpack.c.b16 %v1174, %v1173
      %v1281 = vpack.c.b16 %v1176, %v1175
      %v1282 = vpack.c.b16 %v1178, %v1177
      %v1283 = vpack.c.b16 %v1180, %v1179
      %v1284 = vpack.c.b16 %v1182, %v1181
      %v1285 = vpack.c.b16 %v1184, %v1183
      %v1286 = vpack.c.b16 %v1186, %v1185
      %v1287 = vpack.c.b16 %v1188, %v1187
      %v1288 = vpack.c.b16 %v1190, %v1189
      %v1289 = vpack.c.b16 %v1192, %v1191
      %v1290 = vpack.c.b16 %v1194, %v1193
      %v1291 = vpack.c.b16 %v1196, %v1195
      %v1292 = vpack.c.b16 %v1198, %v1197
      %v1293 = vpack.c.b16 %v1200, %v1199
      %v1294 = vpack.c.b16 %v1202, %v1201
      %v1295 = vpack.c.b16 %v1204, %v1203
      %v1296 = vpack.c.b16 %v1206, %v1205
      %v1297 = vpack.c.b16 %v1208, %v1207
      %v1298 = vpack.c.b16 %v1210, %v1209
      %v1299 = vpack.c.b16 %v1212, %v1211
      %v1300 = vpack.c.b16 %v1214, %v1213
      %v1301 = vpack.c.b16 %v1216, %v1215
      %v1302 = vpack.c.b16 %v1218, %v1217
      %v1303 = vpack.c.b16 %v1220, %v1219
      %v1304 = vpack.c.b16 %v1222, %v1221
      %v1305 = vpack.c.b16 %v1224, %v1223
      %v1306 = vpack.c.b16 %v1226, %v1225
      %v1307 = vpack.c.b16 %v1228, %v1227
      %v1308 = vpack.c.b16 %v1230, %v1229
      %v1309 = vpack.c.b16 %v1232, %v1231
      %v1310 = vpack.c.b16 %v1234, %v1233
      %v1311 = vpack.c.b16 %v1236, %v1235
      %v1312 = vpack.c.b16 %v1238, %v1237
      %v1313 = vpack.c.b16 %v1240, %v1239
      %v1314 = vpack.c.b16 %v1242, %v1241
      %1387 = vmatpush.bf16.msra.mxu0 %v1250
      %1388 = vmatpush.bf16.msra.mxu0 %v1249
      %1389 = vmatpush.bf16.msra.mxu0 %v1248
      %1390 = vmatpush.bf16.msra.mxu0 %v1247
      %1391 = vmatpush.bf16.msra.mxu0 %v1246
      %1392 = vmatpush.bf16.msra.mxu0 %v1245
      %1393 = vmatpush.bf16.msra.mxu0 %v1244
      %1394 = vmatpush.bf16.msra.mxu0 %v1243
      %1395 = vmatmul.bf16.gmra.mxu0 %v865
      %v1396 = vpop.f32.mrf.mxu0
      %v1397 = vadd.f32 %v723, %v1396
      %v1398 = vpop.f32.mrf.mxu0
      %v1399 = vadd.f32 %v723, %v1398
      %1400 = vmatmul.bf16.gmra.mxu0 %v874
      %v1401 = vpop.f32.mrf.mxu0
      %v1402 = vadd.f32 %v723, %v1401
      %v1403 = vpop.f32.mrf.mxu0
      %v1404 = vadd.f32 %v723, %v1403
      %1405 = vmatmul.bf16.gmra.mxu0 %v883
      %v1406 = vpop.f32.mrf.mxu0
      %v1407 = vadd.f32 %v723, %v1406
      %v1408 = vpop.f32.mrf.mxu0
      %v1409 = vadd.f32 %v723, %v1408
      %1410 = vmatmul.bf16.gmra.mxu0 %v892
      %v1411 = vpop.f32.mrf.mxu0
      %v1412 = vadd.f32 %v723, %v1411
      %v1413 = vpop.f32.mrf.mxu0
      %v1414 = vadd.f32 %v723, %v1413
      %1415 = vmatmul.bf16.gmra.mxu0 %v901
      %v1416 = vpop.f32.mrf.mxu0
      %v1417 = vadd.f32 %v723, %v1416
      %v1418 = vpop.f32.mrf.mxu0
      %v1419 = vadd.f32 %v723, %v1418
      %1420 = vdwg.mxu0
      %1421 = vmatpush.bf16.msra.mxu0 %v1258
      %1422 = vmatpush.bf16.msra.mxu0 %v1257
      %1423 = vmatpush.bf16.msra.mxu0 %v1256
      %1424 = vmatpush.bf16.msra.mxu0 %v1255
      %1425 = vmatpush.bf16.msra.mxu0 %v1254
      %1426 = vmatpush.bf16.msra.mxu0 %v1253
      %1427 = vmatpush.bf16.msra.mxu0 %v1252
      %1428 = vmatpush.bf16.msra.mxu0 %v1251
      %1429 = vmatmul.bf16.gmra.mxu0 %v866
      %v1430 = vpop.f32.mrf.mxu0
      %v1431 = vadd.f32 %v1397, %v1430
      %v1432 = vpop.f32.mrf.mxu0
      %v1433 = vadd.f32 %v1399, %v1432
      %1434 = vmatmul.bf16.gmra.mxu0 %v875
      %v1435 = vpop.f32.mrf.mxu0
      %v1436 = vadd.f32 %v1402, %v1435
      %v1437 = vpop.f32.mrf.mxu0
      %v1438 = vadd.f32 %v1404, %v1437
      %1439 = vmatmul.bf16.gmra.mxu0 %v884
      %v1440 = vpop.f32.mrf.mxu0
      %v1441 = vadd.f32 %v1407, %v1440
      %v1442 = vpop.f32.mrf.mxu0
      %v1443 = vadd.f32 %v1409, %v1442
      %1444 = vmatmul.bf16.gmra.mxu0 %v893
      %v1445 = vpop.f32.mrf.mxu0
      %v1446 = vadd.f32 %v1412, %v1445
      %v1447 = vpop.f32.mrf.mxu0
      %v1448 = vadd.f32 %v1414, %v1447
      %1449 = vmatmul.bf16.gmra.mxu0 %v902
      %v1450 = vpop.f32.mrf.mxu0
      %v1451 = vadd.f32 %v1417, %v1450
      %v1452 = vpop.f32.mrf.mxu0
      %v1453 = vadd.f32 %v1419, %v1452
      %1454 = vdwg.mxu0
      %1455 = vmatpush.bf16.msra.mxu0 %v1266
      %1456 = vmatpush.bf16.msra.mxu0 %v1265
      %1457 = vmatpush.bf16.msra.mxu0 %v1264
      %1458 = vmatpush.bf16.msra.mxu0 %v1263
      %1459 = vmatpush.bf16.msra.mxu0 %v1262
      %1460 = vmatpush.bf16.msra.mxu0 %v1261
      %1461 = vmatpush.bf16.msra.mxu0 %v1260
      %1462 = vmatpush.bf16.msra.mxu0 %v1259
      %1463 = vmatmul.bf16.gmra.mxu0 %v867
      %v1464 = vpop.f32.mrf.mxu0
      %v1465 = vadd.f32 %v1431, %v1464
      %v1466 = vpop.f32.mrf.mxu0
      %v1467 = vadd.f32 %v1433, %v1466
      %1468 = vmatmul.bf16.gmra.mxu0 %v876
      %v1469 = vpop.f32.mrf.mxu0
      %v1470 = vadd.f32 %v1436, %v1469
      %v1471 = vpop.f32.mrf.mxu0
      %v1472 = vadd.f32 %v1438, %v1471
      %1473 = vmatmul.bf16.gmra.mxu0 %v885
      %v1474 = vpop.f32.mrf.mxu0
      %v1475 = vadd.f32 %v1441, %v1474
      %v1476 = vpop.f32.mrf.mxu0
      %v1477 = vadd.f32 %v1443, %v1476
      %1478 = vmatmul.bf16.gmra.mxu0 %v894
      %v1479 = vpop.f32.mrf.mxu0
      %v1480 = vadd.f32 %v1446, %v1479
      %v1481 = vpop.f32.mrf.mxu0
      %v1482 = vadd.f32 %v1448, %v1481
      %1483 = vmatmul.bf16.gmra.mxu0 %v903
      %v1484 = vpop.f32.mrf.mxu0
      %v1485 = vadd.f32 %v1451, %v1484
      %v1486 = vpop.f32.mrf.mxu0
      %v1487 = vadd.f32 %v1453, %v1486
      %1488 = vdwg.mxu0
      %1489 = vmatpush.bf16.msra.mxu0 %v1274
      %1490 = vmatpush.bf16.msra.mxu0 %v1273
      %1491 = vmatpush.bf16.msra.mxu0 %v1272
      %1492 = vmatpush.bf16.msra.mxu0 %v1271
      %1493 = vmatpush.bf16.msra.mxu0 %v1270
      %1494 = vmatpush.bf16.msra.mxu0 %v1269
      %1495 = vmatpush.bf16.msra.mxu0 %v1268
      %1496 = vmatpush.bf16.msra.mxu0 %v1267
      %1497 = vmatmul.bf16.gmra.mxu0 %v868
      %v1498 = vpop.f32.mrf.mxu0
      %v1499 = vadd.f32 %v1465, %v1498
      %v1500 = vpop.f32.mrf.mxu0
      %v1501 = vadd.f32 %v1467, %v1500
      %1502 = vmatmul.bf16.gmra.mxu0 %v877
      %v1503 = vpop.f32.mrf.mxu0
      %v1504 = vadd.f32 %v1470, %v1503
      %v1505 = vpop.f32.mrf.mxu0
      %v1506 = vadd.f32 %v1472, %v1505
      %1507 = vmatmul.bf16.gmra.mxu0 %v886
      %v1508 = vpop.f32.mrf.mxu0
      %v1509 = vadd.f32 %v1475, %v1508
      %v1510 = vpop.f32.mrf.mxu0
      %v1511 = vadd.f32 %v1477, %v1510
      %1512 = vmatmul.bf16.gmra.mxu0 %v895
      %v1513 = vpop.f32.mrf.mxu0
      %v1514 = vadd.f32 %v1480, %v1513
      %v1515 = vpop.f32.mrf.mxu0
      %v1516 = vadd.f32 %v1482, %v1515
      %1517 = vmatmul.bf16.gmra.mxu0 %v904
      %v1518 = vpop.f32.mrf.mxu0
      %v1519 = vadd.f32 %v1485, %v1518
      %v1520 = vpop.f32.mrf.mxu0
      %v1521 = vadd.f32 %v1487, %v1520
      %1522 = vdwg.mxu0
      %1523 = vmatpush.bf16.msra.mxu0 %v1282
      %1524 = vmatpush.bf16.msra.mxu0 %v1281
      %1525 = vmatpush.bf16.msra.mxu0 %v1280
      %1526 = vmatpush.bf16.msra.mxu0 %v1279
      %1527 = vmatpush.bf16.msra.mxu0 %v1278
      %1528 = vmatpush.bf16.msra.mxu0 %v1277
      %1529 = vmatpush.bf16.msra.mxu0 %v1276
      %1530 = vmatpush.bf16.msra.mxu0 %v1275
      %1531 = vmatmul.bf16.gmra.mxu0 %v869
      %v1532 = vpop.f32.mrf.mxu0
      %v1533 = vadd.f32 %v1499, %v1532
      %v1534 = vpop.f32.mrf.mxu0
      %v1535 = vadd.f32 %v1501, %v1534
      %1536 = vmatmul.bf16.gmra.mxu0 %v878
      %v1537 = vpop.f32.mrf.mxu0
      %v1538 = vadd.f32 %v1504, %v1537
      %v1539 = vpop.f32.mrf.mxu0
      %v1540 = vadd.f32 %v1506, %v1539
      %1541 = vmatmul.bf16.gmra.mxu0 %v887
      %v1542 = vpop.f32.mrf.mxu0
      %v1543 = vadd.f32 %v1509, %v1542
      %v1544 = vpop.f32.mrf.mxu0
      %v1545 = vadd.f32 %v1511, %v1544
      %1546 = vmatmul.bf16.gmra.mxu0 %v896
      %v1547 = vpop.f32.mrf.mxu0
      %v1548 = vadd.f32 %v1514, %v1547
      %v1549 = vpop.f32.mrf.mxu0
      %v1550 = vadd.f32 %v1516, %v1549
      %1551 = vmatmul.bf16.gmra.mxu0 %v905
      %v1552 = vpop.f32.mrf.mxu0
      %v1553 = vadd.f32 %v1519, %v1552
      %v1554 = vpop.f32.mrf.mxu0
      %v1555 = vadd.f32 %v1521, %v1554
      %1556 = vdwg.mxu0
      %1557 = vmatpush.bf16.msra.mxu0 %v1290
      %1558 = vmatpush.bf16.msra.mxu0 %v1289
      %1559 = vmatpush.bf16.msra.mxu0 %v1288
      %1560 = vmatpush.bf16.msra.mxu0 %v1287
      %1561 = vmatpush.bf16.msra.mxu0 %v1286
      %1562 = vmatpush.bf16.msra.mxu0 %v1285
      %1563 = vmatpush.bf16.msra.mxu0 %v1284
      %1564 = vmatpush.bf16.msra.mxu0 %v1283
      %1565 = vmatmul.bf16.gmra.mxu0 %v870
      %v1566 = vpop.f32.mrf.mxu0
      %v1567 = vadd.f32 %v1533, %v1566
      %v1568 = vpop.f32.mrf.mxu0
      %v1569 = vadd.f32 %v1535, %v1568
      %1570 = vmatmul.bf16.gmra.mxu0 %v879
      %v1571 = vpop.f32.mrf.mxu0
      %v1572 = vadd.f32 %v1538, %v1571
      %v1573 = vpop.f32.mrf.mxu0
      %v1574 = vadd.f32 %v1540, %v1573
      %1575 = vmatmul.bf16.gmra.mxu0 %v888
      %v1576 = vpop.f32.mrf.mxu0
      %v1577 = vadd.f32 %v1543, %v1576
      %v1578 = vpop.f32.mrf.mxu0
      %v1579 = vadd.f32 %v1545, %v1578
      %1580 = vmatmul.bf16.gmra.mxu0 %v897
      %v1581 = vpop.f32.mrf.mxu0
      %v1582 = vadd.f32 %v1548, %v1581
      %v1583 = vpop.f32.mrf.mxu0
      %v1584 = vadd.f32 %v1550, %v1583
      %1585 = vmatmul.bf16.gmra.mxu0 %v906
      %v1586 = vpop.f32.mrf.mxu0
      %v1587 = vadd.f32 %v1553, %v1586
      %v1588 = vpop.f32.mrf.mxu0
      %v1589 = vadd.f32 %v1555, %v1588
      %1590 = vdwg.mxu0
      %1591 = vmatpush.bf16.msra.mxu0 %v1298
      %1592 = vmatpush.bf16.msra.mxu0 %v1297
      %1593 = vmatpush.bf16.msra.mxu0 %v1296
      %1594 = vmatpush.bf16.msra.mxu0 %v1295
      %1595 = vmatpush.bf16.msra.mxu0 %v1294
      %1596 = vmatpush.bf16.msra.mxu0 %v1293
      %1597 = vmatpush.bf16.msra.mxu0 %v1292
      %1598 = vmatpush.bf16.msra.mxu0 %v1291
      %1599 = vmatmul.bf16.gmra.mxu0 %v871
      %v1600 = vpop.f32.mrf.mxu0
      %v1601 = vadd.f32 %v1567, %v1600
      %v1602 = vpop.f32.mrf.mxu0
      %v1603 = vadd.f32 %v1569, %v1602
      %1604 = vmatmul.bf16.gmra.mxu0 %v880
      %v1605 = vpop.f32.mrf.mxu0
      %v1606 = vadd.f32 %v1572, %v1605
      %v1607 = vpop.f32.mrf.mxu0
      %v1608 = vadd.f32 %v1574, %v1607
      %1609 = vmatmul.bf16.gmra.mxu0 %v889
      %v1610 = vpop.f32.mrf.mxu0
      %v1611 = vadd.f32 %v1577, %v1610
      %v1612 = vpop.f32.mrf.mxu0
      %v1613 = vadd.f32 %v1579, %v1612
      %1614 = vmatmul.bf16.gmra.mxu0 %v898
      %v1615 = vpop.f32.mrf.mxu0
      %v1616 = vadd.f32 %v1582, %v1615
      %v1617 = vpop.f32.mrf.mxu0
      %v1618 = vadd.f32 %v1584, %v1617
      %1619 = vmatmul.bf16.gmra.mxu0 %v907
      %v1620 = vpop.f32.mrf.mxu0
      %v1621 = vadd.f32 %v1587, %v1620
      %v1622 = vpop.f32.mrf.mxu0
      %v1623 = vadd.f32 %v1589, %v1622
      %1624 = vdwg.mxu0
      %1625 = vmatpush.bf16.msra.mxu0 %v1306
      %1626 = vmatpush.bf16.msra.mxu0 %v1305
      %1627 = vmatpush.bf16.msra.mxu0 %v1304
      %1628 = vmatpush.bf16.msra.mxu0 %v1303
      %1629 = vmatpush.bf16.msra.mxu0 %v1302
      %1630 = vmatpush.bf16.msra.mxu0 %v1301
      %1631 = vmatpush.bf16.msra.mxu0 %v1300
      %1632 = vmatpush.bf16.msra.mxu0 %v1299
      %1633 = vmatmul.bf16.gmra.mxu0 %v872
      %v1634 = vpop.f32.mrf.mxu0
      %v1635 = vadd.f32 %v1601, %v1634
      %v1636 = vpop.f32.mrf.mxu0
      %v1637 = vadd.f32 %v1603, %v1636
      %1638 = vmatmul.bf16.gmra.mxu0 %v881
      %v1639 = vpop.f32.mrf.mxu0
      %v1640 = vadd.f32 %v1606, %v1639
      %v1641 = vpop.f32.mrf.mxu0
      %v1642 = vadd.f32 %v1608, %v1641
      %1643 = vmatmul.bf16.gmra.mxu0 %v890
      %v1644 = vpop.f32.mrf.mxu0
      %v1645 = vadd.f32 %v1611, %v1644
      %v1646 = vpop.f32.mrf.mxu0
      %v1647 = vadd.f32 %v1613, %v1646
      %1648 = vmatmul.bf16.gmra.mxu0 %v899
      %v1649 = vpop.f32.mrf.mxu0
      %v1650 = vadd.f32 %v1616, %v1649
      %v1651 = vpop.f32.mrf.mxu0
      %v1652 = vadd.f32 %v1618, %v1651
      %1653 = vmatmul.bf16.gmra.mxu0 %v908
      %v1654 = vpop.f32.mrf.mxu0
      %v1655 = vadd.f32 %v1621, %v1654
      %v1656 = vpop.f32.mrf.mxu0
      %v1657 = vadd.f32 %v1623, %v1656
      %1658 = vdwg.mxu0
      %1659 = vmatpush.bf16.msra.mxu0 %v1314
      %1660 = vmatpush.bf16.msra.mxu0 %v1313
      %1661 = vmatpush.bf16.msra.mxu0 %v1312
      %1662 = vmatpush.bf16.msra.mxu0 %v1311
      %1663 = vmatpush.bf16.msra.mxu0 %v1310
      %1664 = vmatpush.bf16.msra.mxu0 %v1309
      %1665 = vmatpush.bf16.msra.mxu0 %v1308
      %1666 = vmatpush.bf16.msra.mxu0 %v1307
      %1667 = vmatmul.bf16.gmra.mxu0 %v873
      %v1668 = vpop.f32.mrf.mxu0
      %v1669 = vadd.f32 %v1635, %v1668
      %v1670 = vpop.f32.mrf.mxu0
      %v1671 = vadd.f32 %v1637, %v1670
      %1672 = vmatmul.bf16.gmra.mxu0 %v882
      %v1673 = vpop.f32.mrf.mxu0
      %v1674 = vadd.f32 %v1640, %v1673
      %v1675 = vpop.f32.mrf.mxu0
      %v1676 = vadd.f32 %v1642, %v1675
      %1677 = vmatmul.bf16.gmra.mxu0 %v891
      %v1678 = vpop.f32.mrf.mxu0
      %v1679 = vadd.f32 %v1645, %v1678
      %v1680 = vpop.f32.mrf.mxu0
      %v1681 = vadd.f32 %v1647, %v1680
      %1682 = vmatmul.bf16.gmra.mxu0 %v900
      %v1683 = vpop.f32.mrf.mxu0
      %v1684 = vadd.f32 %v1650, %v1683
      %v1685 = vpop.f32.mrf.mxu0
      %v1686 = vadd.f32 %v1652, %v1685
      %1687 = vmatmul.bf16.gmra.mxu0 %v909
      %v1688 = vpop.f32.mrf.mxu0
      %v1689 = vadd.f32 %v1655, %v1688
      %v1690 = vpop.f32.mrf.mxu0
      %v1691 = vadd.f32 %v1657, %v1690
      %1692 = vdwg.mxu0
      %v1693 = vld [vmem:[%s245] sm:$0xff]
      %v1694 = vld [vmem:[%s245 + $0x8] sm:$0xff]
      %v1695 = vld [vmem:[%s245 + $0x10] sm:$0xff]
      %v1696 = vld [vmem:[%s245 + $0x18] sm:$0xff]
      %v1697 = vld [vmem:[%s245 + $0x20] sm:$0xff]
      %v1698 = vld [vmem:[%s245 + $0x28] sm:$0xff]
      %v1699 = vld [vmem:[%s245 + $0x30] sm:$0xff]
      %v1700 = vld [vmem:[%s245 + $0x38] sm:$0xff]
      %v1701 = vld [vmem:[%s245 + $0x40] sm:$0xff]
      %v1702 = vld [vmem:[%s245 + $0x48] sm:$0xff]
      %v1703 = vadd.f32 %v1669, %v1693
      %v1704 = vadd.f32 %v1671, %v1694
      %v1705 = vadd.f32 %v1674, %v1695
      %v1706 = vadd.f32 %v1676, %v1696
      %v1707 = vadd.f32 %v1679, %v1697
      %v1708 = vadd.f32 %v1681, %v1698
      %v1709 = vadd.f32 %v1684, %v1699
      %v1710 = vadd.f32 %v1686, %v1700
      %v1711 = vadd.f32 %v1689, %v1701
      %v1712 = vadd.f32 %v1691, %v1702
      %v1713 = vmax.f32 %v1703, 0.0
      %v1714 = vmax.f32 %v1704, 0.0
      %v1715 = vmax.f32 %v1705, 0.0
      %v1716 = vmax.f32 %v1706, 0.0
      %v1717 = vmax.f32 %v1707, 0.0
      %v1718 = vmax.f32 %v1708, 0.0
      %v1719 = vmax.f32 %v1709, 0.0
      %v1720 = vmax.f32 %v1710, 0.0
      %v1721 = vmax.f32 %v1711, 0.0
      %v1722 = vmax.f32 %v1712, 0.0
      %1723 = vst [vmem:[%s255] sm:$0xff] %v1713
      %1724 = vst [vmem:[%s255 + $0x8] sm:$0xff] %v1714
      %1725 = vst [vmem:[%s255 + $0x10] sm:$0xff] %v1715
      %1726 = vst [vmem:[%s255 + $0x18] sm:$0xff] %v1716
      %1727 = vst [vmem:[%s255 + $0x20] sm:$0xff] %v1717
      %1728 = vst [vmem:[%s255 + $0x28] sm:$0xff] %v1718
      %1729 = vst [vmem:[%s255 + $0x30] sm:$0xff] %v1719
      %1730 = vst [vmem:[%s255 + $0x38] sm:$0xff] %v1720
      %1731 = vst [vmem:[%s255 + $0x40] sm:$0xff] %v1721
      %1732 = vst [vmem:[%s255 + $0x48] sm:$0xff] %v1722
      %s1733 = smul.u32 10, %s20
      %p1734 = scmp.lt.s32.totalorder %s19, 1
      %s1735 = scalar_select %p1734, %s19, 1
      %p1736 = scmp.lt.s32.totalorder %s1733, 9
      %s1737 = scalar_select %p1736, %s1733, 9
      %s1738 = smul.addr %s1735, 10
      %s1739 = sadd.s32 %s1737, %s1738
      %s1740 = smul.addr %s1739, 8
      %s1741 = scalar_lea.vmem %s4, %s1740
      // Predicated region
      $region37: #{_lambda_.5} parent=35 // pred_check
        %p1742 = pneg %p143
      $region38: #{_lambda_.5} parent=35 // pred_check_branch
        %1744 = sbr.rel (%p1742) target = $region40
      $region39: #{_lambda_.5} parent=35 // pred_region
        %s1745 = smul.u32 10, %s20
      $region40: #{_lambda_.5} parent=35 // pred_fallthru
        _
    $region36: #{_lambda_.5} parent=5 // pred_fallthru
      _
    %p1746 = scmp.le.s32.totalorder 2, %s10
    // Predicated region
    $region41: #{_lambda_.5} parent=5 // pred_check
      %p1747 = pneg %p1746
    $region42: #{_lambda_.5} parent=5 // pred_check_branch
      %1749 = sbr.rel (%p1747) target = $region44
    $region43: #{_lambda_.5} parent=5 // pred_region
      %s1750 = ssub.s32 %s10, 2
      // Predicated region
      $region45: #{_lambda_.5} parent=43 // pred_check
        %p1751 = pneg %p149
      $region46: #{_lambda_.5} parent=43 // pred_check_branch
        %1753 = sbr.rel (%p1751) target = $region48
      $region47: #{_lambda_.5} parent=43 // pred_region
        %s1754 = smul.u32 10, %s22
        %p1755 = scmp.lt.s32.totalorder %s21, 1
        %s1756 = scalar_select %p1755, %s21, 1
        %p1757 = scmp.lt.s32.totalorder %s1754, 9
        %s1758 = scalar_select %p1757, %s1754, 9
        %s1759 = smul.addr %s1756, 10
        %s1760 = sadd.s32 %s1758, %s1759
        %s1761 = smul.addr %s1760, 8
        %s1762 = scalar_lea.vmem %s4, %s1761
      $region48: #{_lambda_.5} parent=43 // pred_fallthru
        _
    $region44: #{_lambda_.5} parent=5 // pred_fallthru
      _
  $region6: #{_lambda_.5} parent=0 // loop_footer
    %s14 = sadd.s32 1, %s10
  $region7: #{_lambda_.5} parent=0 // loop_footer_branch
    %9 = sbr.rel target = $region3
  $region8: #{_lambda_.5} parent=0 // loop_exit
    _

</llo_original>
